<compile_context>
chip_gen: v5e
topology: v5e:2x2
jax: 0.10.0
libtpu: 0.0.40
codegen_flags: <defaults>
</compile_context>

<pallas_src>
import functools

import jax
import jax.numpy as jnp
from jax.experimental import pallas as pl
from jax.experimental.pallas import tpu as pltpu

EPS = 1e-5  # nn.BatchNorm2d default


# --------------------------------------------------------------------------- #
# in-kernel helpers
# --------------------------------------------------------------------------- #
def _write_padded(pad_ref, interior):
    """Write `interior` (nb, H, W, C) into pad_ref (nb, H+2, W+2, C) with a zero halo.

    Interior is written exactly once; only the 1-pixel halo is zero-filled (no
    full-tensor zero + copy).  Halo is re-zeroed every step on purpose: the scratch
    is per-core, and with a 'parallel' grid a program_id==0 guard would leave the
    second TensorCore's halo uninitialized.
    """
    nb, Hp, Wp, C = pad_ref.shape
    H, W = Hp - 2, Wp - 2
    pad_ref[:, 1:H + 1, 1:W + 1, :] = interior.astype(pad_ref.dtype)
    zrow = jnp.zeros((nb, 1, Wp, C), pad_ref.dtype)
    zcol = jnp.zeros((nb, H, 1, C), pad_ref.dtype)
    pad_ref[:, 0:1, :, :] = zrow
    pad_ref[:, Hp - 1:Hp, :, :] = zrow
    pad_ref[:, 1:H + 1, 0:1, :] = zcol
    pad_ref[:, 1:H + 1, Wp - 1:Wp, :] = zcol


def _conv3x3_from_padded(pad_ref, w_ref, col_ref, cin, cout, use_im2col):
    """3x3 'same' conv of the padded VMEM tile against (9*cin, cout) weights.

    Returns the raw f32 result of shape (nb*H*W, cout).
      * im2col path (small cin): materialize (nb,H,W,9*cin) and do ONE MXU matmul
        with K = 9*cin (needed to fill the MXU when cin is tiny, e.g. first layer).
      * shifted-window path (cin >= threshold): accumulate 9 matmuls of K = cin
        directly into an f32 accumulator -- no 9x im2col scratch or store traffic.
    """
    nb, Hp, Wp, _ = pad_ref.shape
    H, W = Hp - 2, Wp - 2
    M = nb * H * W
    if use_im2col:
        for t in range(9):
            dh, dw = t // 3, t % 3
            col_ref[:, :, :, t * cin:(t + 1) * cin] = pad_ref[:, dh:dh + H, dw:dw + W, :]
        return jnp.dot(col_ref[...].reshape(M, 9 * cin), w_ref[...],
                       preferred_element_type=jnp.float32)
    acc = jnp.zeros((M, cout), jnp.float32)
    for t in range(9):
        dh, dw = t // 3, t % 3
        win = pad_ref[:, dh:dh + H, dw:dw + W, :].reshape(M, cin)
        acc = acc + jnp.dot(win, w_ref[t * cin:(t + 1) * cin, :],
                            preferred_element_type=jnp.float32)
    return acc


def _store_partial_stats(stats_ref, raw_f32):
    """Per-tile BatchNorm partials: row 0 = sum, row 1 = sum of squares (f32)."""
    cout = raw_f32.shape[-1]
    s = jnp.sum(raw_f32, axis=0, keepdims=True)
    ss = jnp.sum(raw_f32 * raw_f32, axis=0, keepdims=True)
    stats_ref[:, 0:1, :] = s.reshape(1, 1, cout)
    stats_ref[:, 1:2, :] = ss.reshape(1, 1, cout)


# --------------------------------------------------------------------------- #
# kernels
# --------------------------------------------------------------------------- #
def conv1_stats_kernel(x_ref, w_ref, raw_ref, stats_ref, pad_ref, *col, use_im2col):
    """Pass 1: conv1 on one batch tile + per-tile BN1 partial statistics."""
    nb, H, W, cin = x_ref.shape
    cout = raw_ref.shape[-1]
    _write_padded(pad_ref, x_ref[...])
    raw = _conv3x3_from_padded(pad_ref, w_ref, col[0] if use_im2col else None,
                               cin, cout, use_im2col)
    raw_ref[...] = raw.reshape(nb, H, W, cout).astype(raw_ref.dtype)
    _store_partial_stats(stats_ref, raw)


def bn_relu_conv2_stats_kernel(raw1_ref, w_ref, scale_ref, shift_ref,
                               raw2_ref, stats_ref, pad_ref, *col, use_im2col):
    """Pass 2: BN1 affine + ReLU fused with the padded write, conv2, BN2 partials."""
    nb, H, W, c = raw1_ref.shape
    cout = raw2_ref.shape[-1]
    scale = scale_ref[...].reshape(1, 1, 1, c)
    shift = shift_ref[...].reshape(1, 1, 1, c)
    y1 = jnp.maximum(raw1_ref[...].astype(jnp.float32) * scale + shift, 0.0)
    _write_padded(pad_ref, y1)
    raw2 = _conv3x3_from_padded(pad_ref, w_ref, col[0] if use_im2col else None,
                                c, cout, use_im2col)
    raw2_ref[...] = raw2.reshape(nb, H, W, cout).astype(raw2_ref.dtype)
    _store_partial_stats(stats_ref, raw2)


def bn_relu_pool_kernel(raw2_ref, scale_ref, shift_ref, out_ref, *, pool_type):
    """Pass 3: BN2 affine + ReLU fused with the 2x2 pooling (no scratch round-trip)."""
    nb, H, W, c = raw2_ref.shape
    h2, w2 = H // 2, W // 2
    scale = scale_ref[...].reshape(1, 1, 1, c)
    shift = shift_ref[...].reshape(1, 1, 1, c)

    def quad(r, cc):  # BN affine + ReLU on one 2x2-strided slice of the input block
        blk = raw2_ref[:, pl.ds(r, h2, stride=2), pl.ds(cc, w2, stride=2), :]
        return jnp.maximum(blk.astype(jnp.float32) * scale + shift, 0.0)

    q00, q01, q10, q11 = quad(0, 0), quad(0, 1), quad(1, 0), quad(1, 1)
    # TODO(synk): only pool_size=(2, 2) (the module's default) is supported here.
    if pool_type == "avg":
        pooled = (q00 + q01 + q10 + q11) * 0.25
    elif pool_type == "max":
        pooled = jnp.maximum(jnp.maximum(q00, q01), jnp.maximum(q10, q11))
    elif pool_type == "avg+max":
        pooled = (q00 + q01 + q10 + q11) * 0.25 \
            + jnp.maximum(jnp.maximum(q00, q01), jnp.maximum(q10, q11))
    else:
        raise ValueError("pool_type must be 'avg', 'max' or 'avg+max'")
    out_ref[...] = pooled.astype(out_ref.dtype)


# --------------------------------------------------------------------------- #
# wrapper-side helpers
# --------------------------------------------------------------------------- #
def _vmem_limit_bytes(per_step_bytes):
    """Right-size the scoped VMEM limit for this pass: the (double-buffered)
    per-step working set plus headroom, capped at ~80% of the physical VMEM of
    the current generation (~102 MiB on v5e/v6e, ~51 MiB on v7x)."""
    cap = 128 * 1024 * 1024
    try:
        cap = int(getattr(pltpu.get_tpu_info(), "vmem_capacity_bytes", cap))
    except Exception:
        pass
    need = 2 * int(per_step_bytes) + (8 << 20)
    return int(min(max(need, 32 << 20), int(cap * 0.8)))


def _choose_nb(n, h, w, target_rows=1024):
    """Samples per grid step: aim for >=~512-1024 matmul rows per MXU push (keeps
    the MXU rather than DMA/vst the binding unit) while keeping a grid to pipeline."""
    nb = max(1, min(n, target_rows // max(1, h * w)))
    while n % nb:
        nb -= 1
    return nb


def _bn_affine(partial_stats, gamma, beta, count):
    """Reduce per-tile [sum, sum^2] partials into the BN scale/shift (training mode,
    biased variance).  Tiny Cout-sized XLA op between the pallas passes."""
    s = jnp.sum(partial_stats[:, 0, :], axis=0)
    ss = jnp.sum(partial_stats[:, 1, :], axis=0)
    mean = s / count
    var = jnp.maximum(ss / count - mean * mean, 0.0)   # guard f32 cancellation -> no NaN
    scale = gamma.astype(jnp.float32) * jax.lax.rsqrt(var + EPS)
    shift = beta.astype(jnp.float32) - mean * scale
    return scale.reshape(1, -1), shift.reshape(1, -1)


# --------------------------------------------------------------------------- #
# ConvBlock forward
# --------------------------------------------------------------------------- #
@functools.partial(jax.jit,
                   static_argnames=("pool_type", "conv_dtype", "nb", "im2col_max_cin"))
def conv_block_nhwc(x_nhwc, w1_oihw, w2_oihw, g1, b1, g2, b2, *,
                    pool_type="avg", conv_dtype=jnp.bfloat16, nb=None,
                    im2col_max_cin=128):
    """ConvBlock.forward in NHWC (preferred entry point when stacking blocks).

    x_nhwc: (N, H, W, Cin); weights OIHW; returns (N, H//2, W//2, Cout) f32.
    conv_dtype: MXU operand / intermediate-storage dtype (bf16 fast path, f32 exact).
    """
    if pool_type not in ("avg", "max", "avg+max"):
        raise ValueError("pool_type must be 'avg', 'max' or 'avg+max'")
    N, H, W, Cin = x_nhwc.shape
    Cout = w1_oihw.shape[0]
    assert H % 2 == 0 and W % 2 == 0, "2x2 pooling needs even spatial dims"
    if nb is None:
        nb = _choose_nb(N, H, W)
    assert N % nb == 0, "batch must be divisible by the per-step batch tile"
    steps = N // nb
    count = float(N * H * W)
    e = jnp.dtype(conv_dtype).itemsize

    # layout glue: cast once to the conv dtype, flatten weights to (9*Cin, Cout)
    # with tap-major / channel-minor rows (matches both conv paths in the kernel).
    x = x_nhwc.astype(conv_dtype)
    w1c = jnp.transpose(w1_oihw, (2, 3, 1, 0)).reshape(9 * Cin, Cout).astype(conv_dtype)
    w2c = jnp.transpose(w2_oihw, (2, 3, 1, 0)).reshape(9 * Cout, Cout).astype(conv_dtype)

    use_im2col1 = Cin < im2col_max_cin     # first PANN layer: tiny Cin -> need K=9*Cin
    use_im2col2 = Cout < im2col_max_cin    # later layers: Cin>=128 -> shifted matmuls

    # TODO(synk): for late PANN blocks (Cout=1024/2048) the (9*C, Cout) weight itself
    # must be tiled over K / Cout with extra grid axes to fit v7x's 64 MiB VMEM, and
    # samples whose H*W activation exceeds VMEM need H-row tiling with a DMA'd halo;
    # at these shapes the weight is simply held resident across the batch grid axis.

    # ------------------- pass 1: conv1 + per-tile BN1 partials -------------------
    scratch1 = [pltpu.VMEM((nb, H + 2, W + 2, Cin), conv_dtype)]
    if use_im2col1:
        scratch1.append(pltpu.VMEM((nb, H, W, 9 * Cin), conv_dtype))
    p1_step = ((nb * H * W * Cin + 9 * Cin * Cout + nb * H * W * Cout) * e
               + 2 * Cout * 4
               + nb * (H + 2) * (W + 2) * Cin * e
               + (nb * H * W * 9 * Cin * e if use_im2col1 else 0)
               + nb * H * W * Cout * 4)                       # f32 matmul result
    raw1, stats1 = pl.pallas_call(
        functools.partial(conv1_stats_kernel, use_im2col=use_im2col1),
        grid=(steps,),
        in_specs=(pl.BlockSpec((nb, H, W, Cin), lambda i: (i, 0, 0, 0)),
                  pl.BlockSpec((9 * Cin, Cout), lambda i: (0, 0))),     # weight resident
        out_specs=(pl.BlockSpec((nb, H, W, Cout), lambda i: (i, 0, 0, 0)),
                   pl.BlockSpec((1, 2, Cout), lambda i: (i, 0, 0))),
        out_shape=(jax.ShapeDtypeStruct((N, H, W, Cout), conv_dtype),
                   jax.ShapeDtypeStruct((steps, 2, Cout), jnp.float32)),
        scratch_shapes=scratch1,
        compiler_params=pltpu.CompilerParams(
            dimension_semantics=("parallel",),
            vmem_limit_bytes=_vmem_limit_bytes(p1_step)),
        cost_estimate=pl.CostEstimate(
            flops=int(2 * N * H * W * 9 * Cin * Cout),
            transcendentals=0,
            bytes_accessed=int((N * H * W * (Cin + Cout) + 9 * Cin * Cout) * e
                               + steps * 2 * Cout * 4)),
    )(x, w1c)

    scale1, shift1 = _bn_affine(stats1, g1, b1, count)

    # ------------- pass 2: BN1 + ReLU + conv2 + per-tile BN2 partials -------------
    scratch2 = [pltpu.VMEM((nb, H + 2, W + 2, Cout), conv_dtype)]
    if use_im2col2:
        scratch2.append(pltpu.VMEM((nb, H, W, 9 * Cout), conv_dtype))
    p2_step = ((nb * H * W * Cout * 2 + 9 * Cout * Cout) * e
               + 2 * Cout * 4 * 3
               + nb * (H + 2) * (W + 2) * Cout * e
               + (nb * H * W * 9 * Cout * e if use_im2col2 else 0)
               + nb * H * W * Cout * 4 * 2)                   # f32 y1 + matmul result
    raw2, stats2 = pl.pallas_call(
        functools.partial(bn_relu_conv2_stats_kernel, use_im2col=use_im2col2),
        grid=(steps,),
        in_specs=(pl.BlockSpec((nb, H, W, Cout), lambda i: (i, 0, 0, 0)),
                  pl.BlockSpec((9 * Cout, Cout), lambda i: (0, 0)),     # weight resident
                  pl.BlockSpec((1, Cout), lambda i: (0, 0)),
                  pl.BlockSpec((1, Cout), lambda i: (0, 0))),
        out_specs=(pl.BlockSpec((nb, H, W, Cout), lambda i: (i, 0, 0, 0)),
                   pl.BlockSpec((1, 2, Cout), lambda i: (i, 0, 0))),
        out_shape=(jax.ShapeDtypeStruct((N, H, W, Cout), conv_dtype),
                   jax.ShapeDtypeStruct((steps, 2, Cout), jnp.float32)),
        scratch_shapes=scratch2,
        compiler_params=pltpu.CompilerParams(
            dimension_semantics=("parallel",),
            vmem_limit_bytes=_vmem_limit_bytes(p2_step)),
        cost_estimate=pl.CostEstimate(
            flops=int(2 * N * H * W * 9 * Cout * Cout + 3 * N * H * W * Cout),
            transcendentals=0,
            bytes_accessed=int((2 * N * H * W * Cout + 9 * Cout * Cout) * e
                               + steps * 2 * Cout * 4 + 4 * Cout * 4)),
    )(raw1, w2c, scale1, shift1)

    scale2, shift2 = _bn_affine(stats2, g2, b2, count)

    # ---------------------- pass 3: BN2 + ReLU + 2x2 pooling ----------------------
    H2, W2 = H // 2, W // 2
    p3_step = (nb * H * W * Cout * e + 2 * Cout * 4 * 2
               + nb * H2 * W2 * Cout * 4 + nb * H * W * Cout * 4)
    out = pl.pallas_call(
        functools.partial(bn_relu_pool_kernel, pool_type=pool_type),
        grid=(steps,),
        in_specs=(pl.BlockSpec((nb, H, W, Cout), lambda i: (i, 0, 0, 0)),
                  pl.BlockSpec((1, Cout), lambda i: (0, 0)),
                  pl.BlockSpec((1, Cout), lambda i: (0, 0))),
        out_specs=pl.BlockSpec((nb, H2, W2, Cout), lambda i: (i, 0, 0, 0)),
        out_shape=jax.ShapeDtypeStruct((N, H2, W2, Cout), jnp.float32),
        compiler_params=pltpu.CompilerParams(
            dimension_semantics=("parallel",),
            vmem_limit_bytes=_vmem_limit_bytes(p3_step)),
        cost_estimate=pl.CostEstimate(
            flops=int(7 * N * H * W * Cout),
            transcendentals=0,
            bytes_accessed=int(N * H * W * Cout * e + N * H2 * W2 * Cout * 4
                               + 4 * Cout * 4)),
    )(raw2, scale2, shift2)
    return out


def conv_block(x_nchw, w1_oihw, w2_oihw, g1, b1, g2, b2, *, pool_type="avg",
               conv_dtype=jnp.bfloat16, nb=None, im2col_max_cin=128):
    """PyTorch-layout convenience wrapper (NCHW in / NCHW out).

    When stacking ConvBlocks, call conv_block_nhwc directly and keep activations
    NHWC between blocks -- each NCHW<->NHWC transpose here is a full HBM round-trip.
    """
    x_nhwc = jnp.transpose(x_nchw, (0, 2, 3, 1))
    out = conv_block_nhwc(x_nhwc, w1_oihw, w2_oihw, g1, b1, g2, b2,
                          pool_type=pool_type, conv_dtype=conv_dtype, nb=nb,
                          im2col_max_cin=im2col_max_cin)
    return jnp.transpose(out, (0, 3, 1, 2))


# --------------------------------------------------------------------------- #
# pure-JAX reference + self-test
# --------------------------------------------------------------------------- #
def reference(x, w1, w2, g1, b1, g2, b2, pool_type="avg"):
    """Pure-JAX mirror of the PyTorch forward (NCHW, training-mode BN)."""
    def conv(x, w):
        return jax.lax.conv_general_dilated(
            x, w, (1, 1), ((1, 1), (1, 1)),
            dimension_numbers=("NCHW", "OIHW", "NCHW"))

    def bn(x, g, b):
        mean = x.mean(axis=(0, 2, 3), keepdims=True)
        var = ((x - mean) ** 2).mean(axis=(0, 2, 3), keepdims=True)
        return (x - mean) / jnp.sqrt(var + EPS) * g.reshape(1, -1, 1, 1) \
            + b.reshape(1, -1, 1, 1)

    y = jax.nn.relu(bn(conv(x, w1), g1, b1))
    y = jax.nn.relu(bn(conv(y, w2), g2, b2))
    N, C, H, W = y.shape
    yw = y.reshape(N, C, H // 2, 2, W // 2, 2)
    avg, mx = yw.mean(axis=(3, 5)), yw.max(axis=(3, 5))
    return {"avg": avg, "max": mx, "avg+max": avg + mx}[pool_type]


if __name__ == "__main__":
    N, Cin, Cout, H, W = 2, 4, 8, 16, 16

    key = jax.random.PRNGKey(0)
    kx, k1, k2 = jax.random.split(key, 3)

    def xavier_uniform(k, shape):  # OIHW, matches nn.init.xavier_uniform_
        fan_out = shape[0] * shape[2] * shape[3]
        fan_in = shape[1] * shape[2] * shape[3]
        a = (6.0 / (fan_in + fan_out)) ** 0.5
        return jax.random.uniform(k, shape, jnp.float32, -a, a)

    x = jax.random.normal(kx, (N, Cin, H, W), jnp.float32)
    w1 = xavier_uniform(k1, (Cout, Cin, 3, 3))
    w2 = xavier_uniform(k2, (Cout, Cout, 3, 3))
    g1 = jnp.ones((Cout,), jnp.float32)   # init_bn: weight = 1
    b1 = jnp.zeros((Cout,), jnp.float32)  # init_bn: bias = 0
    g2 = jnp.ones((Cout,), jnp.float32)
    b2 = jnp.zeros((Cout,), jnp.float32)

    ref_avg = reference(x, w1, w2, g1, b1, g2, b2, pool_type="avg")

    # exact path (f32 MXU operands), nb=1 -> 2-step grid exercises the pipeline
    out_f32 = jax.block_until_ready(
        conv_block(x, w1, w2, g1, b1, g2, b2, pool_type="avg",
                   conv_dtype=jnp.float32, nb=1))
    assert out_f32.shape == (N, Cout, H // 2, W // 2), out_f32.shape
    err_f32 = float(jnp.max(jnp.abs(out_f32 - ref_avg)))
    assert err_f32 < 1e-3, f"f32 path: max abs error vs reference: {err_f32}"

    # default fast path (bf16 MXU operands + bf16 intermediates, f32 stats), auto nb
    out_bf16 = jax.block_until_ready(
        conv_block(x, w1, w2, g1, b1, g2, b2, pool_type="avg"))
    err_bf16 = float(jnp.max(jnp.abs(out_bf16 - ref_avg)))
    assert err_bf16 < 5e-2, f"bf16 path: max abs error vs reference: {err_bf16}"

    # force the shifted-window (no-im2col) conv path + 'avg+max' pooling branch
    out_am = jax.block_until_ready(
        conv_block(x, w1, w2, g1, b1, g2, b2, pool_type="avg+max",
                   conv_dtype=jnp.float32, nb=1, im2col_max_cin=1))
    ref_am = reference(x, w1, w2, g1, b1, g2, b2, pool_type="avg+max")
    err_am = float(jnp.max(jnp.abs(out_am - ref_am)))
    assert err_am < 1e-3, f"avg+max shifted path: max abs error vs reference: {err_am}"

    print("KERNEL_OK")
</pallas_src>

<mosaic_0001>
module attributes {stable_mosaic.version = 11 : i64} {
  func.func @conv1_stats_kernel(%arg0: i32, %arg1: memref<1x16x16x4xf32, #tpu.memory_space<vmem>>, %arg2: memref<36x8xf32, #tpu.memory_space<vmem>>, %arg3: memref<1x16x16x8xf32, #tpu.memory_space<vmem>>, %arg4: memref<1x2x8xf32, #tpu.memory_space<vmem>>, %arg5: memref<1x18x18x4xf32, #tpu.memory_space<vmem>>, %arg6: memref<1x16x16x36xf32, #tpu.memory_space<vmem>>) attributes {dimension_semantics = [#tpu.dimension_semantics<parallel>], iteration_bounds = array<i64: 2>, scalar_prefetch = 0 : i64, scratch_operands = 2 : i64, tpu.core_type = #tpu.core_type<tc>, window_params = [{transform_indices = @transform_0, window_bounds = array<i64: 1, 16, 16, 4>}, {pipeline_mode = #tpu.pipeline_mode<synchronous>, transform_indices = @transform_1, window_bounds = array<i64: 36, 8>}, {transform_indices = @transform_2, window_bounds = array<i64: 1, 16, 16, 8>}, {transform_indices = @transform_3, window_bounds = array<i64: 1, 2, 8>}]} {
    %c0 = arith.constant 0 : index
    %c0_0 = arith.constant 0 : index
    %c0_1 = arith.constant 0 : index
    %c0_2 = arith.constant 0 : index
    %0 = vector.load %arg1[%c0, %c0_0, %c0_1, %c0_2] : memref<1x16x16x4xf32, #tpu.memory_space<vmem>>, vector<1x16x16x4xf32>
    %c0_3 = arith.constant 0 : index
    %c1 = arith.constant 1 : index
    %c1_4 = arith.constant 1 : index
    %c0_5 = arith.constant 0 : index
    %1 = vector.load %arg5[%c0_3, %c1, %c1_4, %c0_5] : memref<1x18x18x4xf32, #tpu.memory_space<vmem>>, vector<1x16x16x4xf32>
    tpu.vector_store %arg5[%c0_3, %c1, %c1_4, %c0_5], %0 {strides = array<i32>} : memref<1x18x18x4xf32, #tpu.memory_space<vmem>>, vector<1x16x16x4xf32>,
    %cst = arith.constant 0.000000e+00 : f32
    %2 = vector.broadcast %cst : f32 to vector<1x1x18x4xf32>
    %cst_6 = arith.constant 0.000000e+00 : f32
    %3 = vector.broadcast %cst_6 : f32 to vector<1x16x1x4xf32>
    %c0_7 = arith.constant 0 : index
    %c0_8 = arith.constant 0 : index
    %c0_9 = arith.constant 0 : index
    %c0_10 = arith.constant 0 : index
    %4 = vector.load %arg5[%c0_7, %c0_8, %c0_9, %c0_10] : memref<1x18x18x4xf32, #tpu.memory_space<vmem>>, vector<1x1x18x4xf32>
    tpu.vector_store %arg5[%c0_7, %c0_8, %c0_9, %c0_10], %2 {strides = array<i32>} : memref<1x18x18x4xf32, #tpu.memory_space<vmem>>, vector<1x1x18x4xf32>,
    %c0_11 = arith.constant 0 : index
    %c17 = arith.constant 17 : index
    %c0_12 = arith.constant 0 : index
    %c0_13 = arith.constant 0 : index
    %5 = vector.load %arg5[%c0_11, %c17, %c0_12, %c0_13] : memref<1x18x18x4xf32, #tpu.memory_space<vmem>>, vector<1x1x18x4xf32>
    tpu.vector_store %arg5[%c0_11, %c17, %c0_12, %c0_13], %2 {strides = array<i32>} : memref<1x18x18x4xf32, #tpu.memory_space<vmem>>, vector<1x1x18x4xf32>,
    %c0_14 = arith.constant 0 : index
    %c1_15 = arith.constant 1 : index
    %c0_16 = arith.constant 0 : index
    %c0_17 = arith.constant 0 : index
    %6 = vector.load %arg5[%c0_14, %c1_15, %c0_16, %c0_17] : memref<1x18x18x4xf32, #tpu.memory_space<vmem>>, vector<1x16x1x4xf32>
    tpu.vector_store %arg5[%c0_14, %c1_15, %c0_16, %c0_17], %3 {strides = array<i32>} : memref<1x18x18x4xf32, #tpu.memory_space<vmem>>, vector<1x16x1x4xf32>,
    %c0_18 = arith.constant 0 : index
    %c1_19 = arith.constant 1 : index
    %c17_20 = arith.constant 17 : index
    %c0_21 = arith.constant 0 : index
    %7 = vector.load %arg5[%c0_18, %c1_19, %c17_20, %c0_21] : memref<1x18x18x4xf32, #tpu.memory_space<vmem>>, vector<1x16x1x4xf32>
    tpu.vector_store %arg5[%c0_18, %c1_19, %c17_20, %c0_21], %3 {strides = array<i32>} : memref<1x18x18x4xf32, #tpu.memory_space<vmem>>, vector<1x16x1x4xf32>,
    %c0_22 = arith.constant 0 : index
    %c0_23 = arith.constant 0 : index
    %c0_24 = arith.constant 0 : index
    %c0_25 = arith.constant 0 : index
    %8 = vector.load %arg5[%c0_22, %c0_23, %c0_24, %c0_25] : memref<1x18x18x4xf32, #tpu.memory_space<vmem>>, vector<1x16x16x4xf32>
    %c0_26 = arith.constant 0 : index
    %c0_27 = arith.constant 0 : index
    %c0_28 = arith.constant 0 : index
    %c0_29 = arith.constant 0 : index
    %9 = vector.load %arg6[%c0_26, %c0_27, %c0_28, %c0_29] : memref<1x16x16x36xf32, #tpu.memory_space<vmem>>, vector<1x16x16x4xf32>
    tpu.vector_store %arg6[%c0_26, %c0_27, %c0_28, %c0_29], %8 {strides = array<i32>} : memref<1x16x16x36xf32, #tpu.memory_space<vmem>>, vector<1x16x16x4xf32>,
    %c0_30 = arith.constant 0 : index
    %c0_31 = arith.constant 0 : index
    %c1_32 = arith.constant 1 : index
    %c0_33 = arith.constant 0 : index
    %10 = vector.load %arg5[%c0_30, %c0_31, %c1_32, %c0_33] : memref<1x18x18x4xf32, #tpu.memory_space<vmem>>, vector<1x16x16x4xf32>
    %c0_34 = arith.constant 0 : index
    %c0_35 = arith.constant 0 : index
    %c0_36 = arith.constant 0 : index
    %c4 = arith.constant 4 : index
    %11 = vector.load %arg6[%c0_34, %c0_35, %c0_36, %c4] : memref<1x16x16x36xf32, #tpu.memory_space<vmem>>, vector<1x16x16x4xf32>
    tpu.vector_store %arg6[%c0_34, %c0_35, %c0_36, %c4], %10 {strides = array<i32>} : memref<1x16x16x36xf32, #tpu.memory_space<vmem>>, vector<1x16x16x4xf32>,
    %c0_37 = arith.constant 0 : index
    %c0_38 = arith.constant 0 : index
    %c2 = arith.constant 2 : index
    %c0_39 = arith.constant 0 : index
    %12 = vector.load %arg5[%c0_37, %c0_38, %c2, %c0_39] : memref<1x18x18x4xf32, #tpu.memory_space<vmem>>, vector<1x16x16x4xf32>
    %c0_40 = arith.constant 0 : index
    %c0_41 = arith.constant 0 : index
    %c0_42 = arith.constant 0 : index
    %c8 = arith.constant 8 : index
    %13 = vector.load %arg6[%c0_40, %c0_41, %c0_42, %c8] : memref<1x16x16x36xf32, #tpu.memory_space<vmem>>, vector<1x16x16x4xf32>
    tpu.vector_store %arg6[%c0_40, %c0_41, %c0_42, %c8], %12 {strides = array<i32>} : memref<1x16x16x36xf32, #tpu.memory_space<vmem>>, vector<1x16x16x4xf32>,
    %c0_43 = arith.constant 0 : index
    %c1_44 = arith.constant 1 : index
    %c0_45 = arith.constant 0 : index
    %c0_46 = arith.constant 0 : index
    %14 = vector.load %arg5[%c0_43, %c1_44, %c0_45, %c0_46] : memref<1x18x18x4xf32, #tpu.memory_space<vmem>>, vector<1x16x16x4xf32>
    %c0_47 = arith.constant 0 : index
    %c0_48 = arith.constant 0 : index
    %c0_49 = arith.constant 0 : index
    %c12 = arith.constant 12 : index
    %15 = vector.load %arg6[%c0_47, %c0_48, %c0_49, %c12] : memref<1x16x16x36xf32, #tpu.memory_space<vmem>>, vector<1x16x16x4xf32>
    tpu.vector_store %arg6[%c0_47, %c0_48, %c0_49, %c12], %14 {strides = array<i32>} : memref<1x16x16x36xf32, #tpu.memory_space<vmem>>, vector<1x16x16x4xf32>,
    %c0_50 = arith.constant 0 : index
    %c1_51 = arith.constant 1 : index
    %c1_52 = arith.constant 1 : index
    %c0_53 = arith.constant 0 : index
    %16 = vector.load %arg5[%c0_50, %c1_51, %c1_52, %c0_53] : memref<1x18x18x4xf32, #tpu.memory_space<vmem>>, vector<1x16x16x4xf32>
    %c0_54 = arith.constant 0 : index
    %c0_55 = arith.constant 0 : index
    %c0_56 = arith.constant 0 : index
    %c16 = arith.constant 16 : index
    %17 = vector.load %arg6[%c0_54, %c0_55, %c0_56, %c16] : memref<1x16x16x36xf32, #tpu.memory_space<vmem>>, vector<1x16x16x4xf32>
    tpu.vector_store %arg6[%c0_54, %c0_55, %c0_56, %c16], %16 {strides = array<i32>} : memref<1x16x16x36xf32, #tpu.memory_space<vmem>>, vector<1x16x16x4xf32>,
    %c0_57 = arith.constant 0 : index
    %c1_58 = arith.constant 1 : index
    %c2_59 = arith.constant 2 : index
    %c0_60 = arith.constant 0 : index
    %18 = vector.load %arg5[%c0_57, %c1_58, %c2_59, %c0_60] : memref<1x18x18x4xf32, #tpu.memory_space<vmem>>, vector<1x16x16x4xf32>
    %c0_61 = arith.constant 0 : index
    %c0_62 = arith.constant 0 : index
    %c0_63 = arith.constant 0 : index
    %c20 = arith.constant 20 : index
    %19 = vector.load %arg6[%c0_61, %c0_62, %c0_63, %c20] : memref<1x16x16x36xf32, #tpu.memory_space<vmem>>, vector<1x16x16x4xf32>
    tpu.vector_store %arg6[%c0_61, %c0_62, %c0_63, %c20], %18 {strides = array<i32>} : memref<1x16x16x36xf32, #tpu.memory_space<vmem>>, vector<1x16x16x4xf32>,
    %c0_64 = arith.constant 0 : index
    %c2_65 = arith.constant 2 : index
    %c0_66 = arith.constant 0 : index
    %c0_67 = arith.constant 0 : index
    %20 = vector.load %arg5[%c0_64, %c2_65, %c0_66, %c0_67] : memref<1x18x18x4xf32, #tpu.memory_space<vmem>>, vector<1x16x16x4xf32>
    %c0_68 = arith.constant 0 : index
    %c0_69 = arith.constant 0 : index
    %c0_70 = arith.constant 0 : index
    %c24 = arith.constant 24 : index
    %21 = vector.load %arg6[%c0_68, %c0_69, %c0_70, %c24] : memref<1x16x16x36xf32, #tpu.memory_space<vmem>>, vector<1x16x16x4xf32>
    tpu.vector_store %arg6[%c0_68, %c0_69, %c0_70, %c24], %20 {strides = array<i32>} : memref<1x16x16x36xf32, #tpu.memory_space<vmem>>, vector<1x16x16x4xf32>,
    %c0_71 = arith.constant 0 : index
    %c2_72 = arith.constant 2 : index
    %c1_73 = arith.constant 1 : index
    %c0_74 = arith.constant 0 : index
    %22 = vector.load %arg5[%c0_71, %c2_72, %c1_73, %c0_74] : memref<1x18x18x4xf32, #tpu.memory_space<vmem>>, vector<1x16x16x4xf32>
    %c0_75 = arith.constant 0 : index
    %c0_76 = arith.constant 0 : index
    %c0_77 = arith.constant 0 : index
    %c28 = arith.constant 28 : index
    %23 = vector.load %arg6[%c0_75, %c0_76, %c0_77, %c28] : memref<1x16x16x36xf32, #tpu.memory_space<vmem>>, vector<1x16x16x4xf32>
    tpu.vector_store %arg6[%c0_75, %c0_76, %c0_77, %c28], %22 {strides = array<i32>} : memref<1x16x16x36xf32, #tpu.memory_space<vmem>>, vector<1x16x16x4xf32>,
    %c0_78 = arith.constant 0 : index
    %c2_79 = arith.constant 2 : index
    %c2_80 = arith.constant 2 : index
    %c0_81 = arith.constant 0 : index
    %24 = vector.load %arg5[%c0_78, %c2_79, %c2_80, %c0_81] : memref<1x18x18x4xf32, #tpu.memory_space<vmem>>, vector<1x16x16x4xf32>
    %c0_82 = arith.constant 0 : index
    %c0_83 = arith.constant 0 : index
    %c0_84 = arith.constant 0 : index
    %c32 = arith.constant 32 : index
    %25 = vector.load %arg6[%c0_82, %c0_83, %c0_84, %c32] : memref<1x16x16x36xf32, #tpu.memory_space<vmem>>, vector<1x16x16x4xf32>
    tpu.vector_store %arg6[%c0_82, %c0_83, %c0_84, %c32], %24 {strides = array<i32>} : memref<1x16x16x36xf32, #tpu.memory_space<vmem>>, vector<1x16x16x4xf32>,
    %c0_85 = arith.constant 0 : index
    %c0_86 = arith.constant 0 : index
    %c0_87 = arith.constant 0 : index
    %c0_88 = arith.constant 0 : index
    %26 = vector.load %arg6[%c0_85, %c0_86, %c0_87, %c0_88] : memref<1x16x16x36xf32, #tpu.memory_space<vmem>>, vector<1x16x16x36xf32>
    %27 = vector.shape_cast %26 : vector<1x16x16x36xf32> to vector<256x36xf32>
    %c0_89 = arith.constant 0 : index
    %c0_90 = arith.constant 0 : index
    %28 = vector.load %arg2[%c0_89, %c0_90] : memref<36x8xf32, #tpu.memory_space<vmem>>, vector<36x8xf32>
    %cst_91 = arith.constant dense<0.000000e+00> : vector<256x8xf32>
    %29 = tpu.matmul %27, %28, %cst_91 {dimension_numbers = #tpu.dot_dimension_numbers<[1], [0], [0], [1], [0, 0, 1, 1], [], []>} : vector<256x36xf32>, vector<36x8xf32>, vector<256x8xf32> -> vector<256x8xf32>
    %30 = vector.shape_cast %29 : vector<256x8xf32> to vector<1x16x16x8xf32>
    %c0_92 = arith.constant 0 : index
    %c0_93 = arith.constant 0 : index
    %c0_94 = arith.constant 0 : index
    %c0_95 = arith.constant 0 : index
    %31 = vector.load %arg3[%c0_92, %c0_93, %c0_94, %c0_95] : memref<1x16x16x8xf32, #tpu.memory_space<vmem>>, vector<1x16x16x8xf32>
    tpu.vector_store %arg3[%c0_92, %c0_93, %c0_94, %c0_95], %30 {strides = array<i32>} : memref<1x16x16x8xf32, #tpu.memory_space<vmem>>, vector<1x16x16x8xf32>,
    %cst_96 = arith.constant dense<0.000000e+00> : vector<8xf32>
    %32 = vector.multi_reduction <add>, %29, %cst_96 [0] : vector<256x8xf32> to vector<8xf32>
    %33 = vector.shape_cast %32 : vector<8xf32> to vector<1x8xf32>
    %34 = arith.mulf %29, %29 : vector<256x8xf32>
    %cst_97 = arith.constant dense<0.000000e+00> : vector<8xf32>
    %35 = vector.multi_reduction <add>, %34, %cst_97 [0] : vector<256x8xf32> to vector<8xf32>
    %36 = vector.shape_cast %35 : vector<8xf32> to vector<1x8xf32>
    %37 = vector.shape_cast %33 : vector<1x8xf32> to vector<1x1x8xf32>
    %c0_98 = arith.constant 0 : index
    %c0_99 = arith.constant 0 : index
    %c0_100 = arith.constant 0 : index
    %38 = vector.load %arg4[%c0_98, %c0_99, %c0_100] : memref<1x2x8xf32, #tpu.memory_space<vmem>>, vector<1x1x8xf32>
    tpu.vector_store %arg4[%c0_98, %c0_99, %c0_100], %37 {strides = array<i32>} : memref<1x2x8xf32, #tpu.memory_space<vmem>>, vector<1x1x8xf32>,
    %39 = vector.shape_cast %36 : vector<1x8xf32> to vector<1x1x8xf32>
    %c0_101 = arith.constant 0 : index
    %c1_102 = arith.constant 1 : index
    %c0_103 = arith.constant 0 : index
    %40 = vector.load %arg4[%c0_101, %c1_102, %c0_103] : memref<1x2x8xf32, #tpu.memory_space<vmem>>, vector<1x1x8xf32>
    tpu.vector_store %arg4[%c0_101, %c1_102, %c0_103], %39 {strides = array<i32>} : memref<1x2x8xf32, #tpu.memory_space<vmem>>, vector<1x1x8xf32>,
    return
  }
  func.func @transform_0(%arg0: i32) -> (i32, i32, i32, i32) {
    %c0_i32 = arith.constant 0 : i32
    %c0_i32_0 = arith.constant 0 : i32
    %c0_i32_1 = arith.constant 0 : i32
    %c0_i32_2 = arith.constant 0 : i32
    return %arg0, %c0_i32, %c0_i32_0, %c0_i32_1 : i32, i32, i32, i32
  }
  func.func @transform_1(%arg0: i32) -> (i32, i32) {
    %c0_i32 = arith.constant 0 : i32
    %c0_i32_0 = arith.constant 0 : i32
    %c0_i32_1 = arith.constant 0 : i32
    return %c0_i32, %c0_i32_0 : i32, i32
  }
  func.func @transform_2(%arg0: i32) -> (i32, i32, i32, i32) {
    %c0_i32 = arith.constant 0 : i32
    %c0_i32_0 = arith.constant 0 : i32
    %c0_i32_1 = arith.constant 0 : i32
    %c0_i32_2 = arith.constant 0 : i32
    return %arg0, %c0_i32, %c0_i32_0, %c0_i32_1 : i32, i32, i32, i32
  }
  func.func @transform_3(%arg0: i32) -> (i32, i32, i32) {
    %c0_i32 = arith.constant 0 : i32
    %c0_i32_0 = arith.constant 0 : i32
    %c0_i32_1 = arith.constant 0 : i32
    return %arg0, %c0_i32, %c0_i32_0 : i32, i32, i32
  }
}

module attributes {stable_mosaic.version = 11 : i64} {
  func.func @bn_relu_pool_kernel(%arg0: i32, %arg1: memref<1x16x16x8xf32, #tpu.memory_space<vmem>>, %arg2: memref<1x8xf32, #tpu.memory_space<vmem>>, %arg3: memref<1x8xf32, #tpu.memory_space<vmem>>, %arg4: memref<1x8x8x8xf32, #tpu.memory_space<vmem>>) attributes {dimension_semantics = [#tpu.dimension_semantics<parallel>], iteration_bounds = array<i64: 2>, scalar_prefetch = 0 : i64, scratch_operands = 0 : i64, tpu.core_type = #tpu.core_type<tc>, window_params = [{transform_indices = @transform_0, window_bounds = array<i64: 1, 16, 16, 8>}, {pipeline_mode = #tpu.pipeline_mode<synchronous>, transform_indices = @transform_1, window_bounds = array<i64: 1, 8>}, {pipeline_mode = #tpu.pipeline_mode<synchronous>, transform_indices = @transform_2, window_bounds = array<i64: 1, 8>}, {transform_indices = @transform_3, window_bounds = array<i64: 1, 8, 8, 8>}]} {
    %c0 = arith.constant 0 : index
    %c0_0 = arith.constant 0 : index
    %0 = vector.load %arg2[%c0, %c0_0] : memref<1x8xf32, #tpu.memory_space<vmem>>, vector<1x8xf32>
    %1 = vector.shape_cast %0 : vector<1x8xf32> to vector<1x1x1x8xf32>
    %c0_1 = arith.constant 0 : index
    %c0_2 = arith.constant 0 : index
    %2 = vector.load %arg3[%c0_1, %c0_2] : memref<1x8xf32, #tpu.memory_space<vmem>>, vector<1x8xf32>
    %3 = vector.shape_cast %2 : vector<1x8xf32> to vector<1x1x1x8xf32>
    %c0_3 = arith.constant 0 : index
    %c0_4 = arith.constant 0 : index
    %c0_5 = arith.constant 0 : index
    %c0_6 = arith.constant 0 : index
    %4 = tpu.strided_load %arg1[%c0_3, %c0_4, %c0_5, %c0_6] {strides = array<i32: 1, 2, 2, 1>} : memref<1x16x16x8xf32, #tpu.memory_space<vmem>>, vector<1x8x8x8xf32>
    %5 = vector.broadcast %1 : vector<1x1x1x8xf32> to vector<1x8x8x8xf32>
    %6 = arith.mulf %4, %5 : vector<1x8x8x8xf32>
    %7 = vector.broadcast %3 : vector<1x1x1x8xf32> to vector<1x8x8x8xf32>
    %8 = arith.addf %6, %7 : vector<1x8x8x8xf32>
    %cst = arith.constant 0.000000e+00 : f32
    %9 = vector.broadcast %cst : f32 to vector<1x8x8x8xf32>
    %10 = arith.maximumf %8, %9 : vector<1x8x8x8xf32>
    %c0_7 = arith.constant 0 : index
    %c0_8 = arith.constant 0 : index
    %c1 = arith.constant 1 : index
    %c0_9 = arith.constant 0 : index
    %11 = tpu.strided_load %arg1[%c0_7, %c0_8, %c1, %c0_9] {strides = array<i32: 1, 2, 2, 1>} : memref<1x16x16x8xf32, #tpu.memory_space<vmem>>, vector<1x8x8x8xf32>
    %12 = vector.broadcast %1 : vector<1x1x1x8xf32> to vector<1x8x8x8xf32>
    %13 = arith.mulf %11, %12 : vector<1x8x8x8xf32>
    %14 = vector.broadcast %3 : vector<1x1x1x8xf32> to vector<1x8x8x8xf32>
    %15 = arith.addf %13, %14 : vector<1x8x8x8xf32>
    %cst_10 = arith.constant 0.000000e+00 : f32
    %16 = vector.broadcast %cst_10 : f32 to vector<1x8x8x8xf32>
    %17 = arith.maximumf %15, %16 : vector<1x8x8x8xf32>
    %c0_11 = arith.constant 0 : index
    %c1_12 = arith.constant 1 : index
    %c0_13 = arith.constant 0 : index
    %c0_14 = arith.constant 0 : index
    %18 = tpu.strided_load %arg1[%c0_11, %c1_12, %c0_13, %c0_14] {strides = array<i32: 1, 2, 2, 1>} : memref<1x16x16x8xf32, #tpu.memory_space<vmem>>, vector<1x8x8x8xf32>
    %19 = vector.broadcast %1 : vector<1x1x1x8xf32> to vector<1x8x8x8xf32>
    %20 = arith.mulf %18, %19 : vector<1x8x8x8xf32>
    %21 = vector.broadcast %3 : vector<1x1x1x8xf32> to vector<1x8x8x8xf32>
    %22 = arith.addf %20, %21 : vector<1x8x8x8xf32>
    %cst_15 = arith.constant 0.000000e+00 : f32
    %23 = vector.broadcast %cst_15 : f32 to vector<1x8x8x8xf32>
    %24 = arith.maximumf %22, %23 : vector<1x8x8x8xf32>
    %c0_16 = arith.constant 0 : index
    %c1_17 = arith.constant 1 : index
    %c1_18 = arith.constant 1 : index
    %c0_19 = arith.constant 0 : index
    %25 = tpu.strided_load %arg1[%c0_16, %c1_17, %c1_18, %c0_19] {strides = array<i32: 1, 2, 2, 1>} : memref<1x16x16x8xf32, #tpu.memory_space<vmem>>, vector<1x8x8x8xf32>
    %26 = vector.broadcast %1 : vector<1x1x1x8xf32> to vector<1x8x8x8xf32>
    %27 = arith.mulf %25, %26 : vector<1x8x8x8xf32>
    %28 = vector.broadcast %3 : vector<1x1x1x8xf32> to vector<1x8x8x8xf32>
    %29 = arith.addf %27, %28 : vector<1x8x8x8xf32>
    %cst_20 = arith.constant 0.000000e+00 : f32
    %30 = vector.broadcast %cst_20 : f32 to vector<1x8x8x8xf32>
    %31 = arith.maximumf %29, %30 : vector<1x8x8x8xf32>
    %32 = arith.addf %10, %17 : vector<1x8x8x8xf32>
    %33 = arith.addf %32, %24 : vector<1x8x8x8xf32>
    %34 = arith.addf %33, %31 : vector<1x8x8x8xf32>
    %cst_21 = arith.constant 2.500000e-01 : f32
    %35 = vector.broadcast %cst_21 : f32 to vector<1x8x8x8xf32>
    %36 = arith.mulf %34, %35 : vector<1x8x8x8xf32>
    %c0_22 = arith.constant 0 : index
    %c0_23 = arith.constant 0 : index
    %c0_24 = arith.constant 0 : index
    %c0_25 = arith.constant 0 : index
    %37 = vector.load %arg4[%c0_22, %c0_23, %c0_24, %c0_25] : memref<1x8x8x8xf32, #tpu.memory_space<vmem>>, vector<1x8x8x8xf32>
    tpu.vector_store %arg4[%c0_22, %c0_23, %c0_24, %c0_25], %36 {strides = array<i32>} : memref<1x8x8x8xf32, #tpu.memory_space<vmem>>, vector<1x8x8x8xf32>,
    return
  }
  func.func @transform_0(%arg0: i32) -> (i32, i32, i32, i32) {
    %c0_i32 = arith.constant 0 : i32
    %c0_i32_0 = arith.constant 0 : i32
    %c0_i32_1 = arith.constant 0 : i32
    %c0_i32_2 = arith.constant 0 : i32
    return %arg0, %c0_i32, %c0_i32_0, %c0_i32_1 : i32, i32, i32, i32
  }
  func.func @transform_1(%arg0: i32) -> (i32, i32) {
    %c0_i32 = arith.constant 0 : i32
    %c0_i32_0 = arith.constant 0 : i32
    %c0_i32_1 = arith.constant 0 : i32
    return %c0_i32, %c0_i32_0 : i32, i32
  }
  func.func @transform_2(%arg0: i32) -> (i32, i32) {
    %c0_i32 = arith.constant 0 : i32
    %c0_i32_0 = arith.constant 0 : i32
    %c0_i32_1 = arith.constant 0 : i32
    return %c0_i32, %c0_i32_0 : i32, i32
  }
  func.func @transform_3(%arg0: i32) -> (i32, i32, i32, i32) {
    %c0_i32 = arith.constant 0 : i32
    %c0_i32_0 = arith.constant 0 : i32
    %c0_i32_1 = arith.constant 0 : i32
    %c0_i32_2 = arith.constant 0 : i32
    return %arg0, %c0_i32, %c0_i32_0, %c0_i32_1 : i32, i32, i32, i32
  }
}

module attributes {stable_mosaic.version = 11 : i64} {
  func.func @bn_relu_conv2_stats_kernel(%arg0: i32, %arg1: memref<1x16x16x8xf32, #tpu.memory_space<vmem>>, %arg2: memref<72x8xf32, #tpu.memory_space<vmem>>, %arg3: memref<1x8xf32, #tpu.memory_space<vmem>>, %arg4: memref<1x8xf32, #tpu.memory_space<vmem>>, %arg5: memref<1x16x16x8xf32, #tpu.memory_space<vmem>>, %arg6: memref<1x2x8xf32, #tpu.memory_space<vmem>>, %arg7: memref<1x18x18x8xf32, #tpu.memory_space<vmem>>, %arg8: memref<1x16x16x72xf32, #tpu.memory_space<vmem>>) attributes {dimension_semantics = [#tpu.dimension_semantics<parallel>], iteration_bounds = array<i64: 2>, scalar_prefetch = 0 : i64, scratch_operands = 2 : i64, tpu.core_type = #tpu.core_type<tc>, window_params = [{transform_indices = @transform_0, window_bounds = array<i64: 1, 16, 16, 8>}, {pipeline_mode = #tpu.pipeline_mode<synchronous>, transform_indices = @transform_1, window_bounds = array<i64: 72, 8>}, {pipeline_mode = #tpu.pipeline_mode<synchronous>, transform_indices = @transform_2, window_bounds = array<i64: 1, 8>}, {pipeline_mode = #tpu.pipeline_mode<synchronous>, transform_indices = @transform_3, window_bounds = array<i64: 1, 8>}, {transform_indices = @transform_4, window_bounds = array<i64: 1, 16, 16, 8>}, {transform_indices = @transform_5, window_bounds = array<i64: 1, 2, 8>}]} {
    %c0 = arith.constant 0 : index
    %c0_0 = arith.constant 0 : index
    %0 = vector.load %arg3[%c0, %c0_0] : memref<1x8xf32, #tpu.memory_space<vmem>>, vector<1x8xf32>
    %1 = vector.shape_cast %0 : vector<1x8xf32> to vector<1x1x1x8xf32>
    %c0_1 = arith.constant 0 : index
    %c0_2 = arith.constant 0 : index
    %2 = vector.load %arg4[%c0_1, %c0_2] : memref<1x8xf32, #tpu.memory_space<vmem>>, vector<1x8xf32>
    %3 = vector.shape_cast %2 : vector<1x8xf32> to vector<1x1x1x8xf32>
    %c0_3 = arith.constant 0 : index
    %c0_4 = arith.constant 0 : index
    %c0_5 = arith.constant 0 : index
    %c0_6 = arith.constant 0 : index
    %4 = vector.load %arg1[%c0_3, %c0_4, %c0_5, %c0_6] : memref<1x16x16x8xf32, #tpu.memory_space<vmem>>, vector<1x16x16x8xf32>
    %5 = vector.broadcast %1 : vector<1x1x1x8xf32> to vector<1x16x16x8xf32>
    %6 = arith.mulf %4, %5 : vector<1x16x16x8xf32>
    %7 = vector.broadcast %3 : vector<1x1x1x8xf32> to vector<1x16x16x8xf32>
    %8 = arith.addf %6, %7 : vector<1x16x16x8xf32>
    %cst = arith.constant 0.000000e+00 : f32
    %9 = vector.broadcast %cst : f32 to vector<1x16x16x8xf32>
    %10 = arith.maximumf %8, %9 : vector<1x16x16x8xf32>
    %c0_7 = arith.constant 0 : index
    %c1 = arith.constant 1 : index
    %c1_8 = arith.constant 1 : index
    %c0_9 = arith.constant 0 : index
    %11 = vector.load %arg7[%c0_7, %c1, %c1_8, %c0_9] : memref<1x18x18x8xf32, #tpu.memory_space<vmem>>, vector<1x16x16x8xf32>
    tpu.vector_store %arg7[%c0_7, %c1, %c1_8, %c0_9], %10 {strides = array<i32>} : memref<1x18x18x8xf32, #tpu.memory_space<vmem>>, vector<1x16x16x8xf32>,
    %cst_10 = arith.constant 0.000000e+00 : f32
    %12 = vector.broadcast %cst_10 : f32 to vector<1x1x18x8xf32>
    %cst_11 = arith.constant 0.000000e+00 : f32
    %13 = vector.broadcast %cst_11 : f32 to vector<1x16x1x8xf32>
    %c0_12 = arith.constant 0 : index
    %c0_13 = arith.constant 0 : index
    %c0_14 = arith.constant 0 : index
    %c0_15 = arith.constant 0 : index
    %14 = vector.load %arg7[%c0_12, %c0_13, %c0_14, %c0_15] : memref<1x18x18x8xf32, #tpu.memory_space<vmem>>, vector<1x1x18x8xf32>
    tpu.vector_store %arg7[%c0_12, %c0_13, %c0_14, %c0_15], %12 {strides = array<i32>} : memref<1x18x18x8xf32, #tpu.memory_space<vmem>>, vector<1x1x18x8xf32>,
    %c0_16 = arith.constant 0 : index
    %c17 = arith.constant 17 : index
    %c0_17 = arith.constant 0 : index
    %c0_18 = arith.constant 0 : index
    %15 = vector.load %arg7[%c0_16, %c17, %c0_17, %c0_18] : memref<1x18x18x8xf32, #tpu.memory_space<vmem>>, vector<1x1x18x8xf32>
    tpu.vector_store %arg7[%c0_16, %c17, %c0_17, %c0_18], %12 {strides = array<i32>} : memref<1x18x18x8xf32, #tpu.memory_space<vmem>>, vector<1x1x18x8xf32>,
    %c0_19 = arith.constant 0 : index
    %c1_20 = arith.constant 1 : index
    %c0_21 = arith.constant 0 : index
    %c0_22 = arith.constant 0 : index
    %16 = vector.load %arg7[%c0_19, %c1_20, %c0_21, %c0_22] : memref<1x18x18x8xf32, #tpu.memory_space<vmem>>, vector<1x16x1x8xf32>
    tpu.vector_store %arg7[%c0_19, %c1_20, %c0_21, %c0_22], %13 {strides = array<i32>} : memref<1x18x18x8xf32, #tpu.memory_space<vmem>>, vector<1x16x1x8xf32>,
    %c0_23 = arith.constant 0 : index
    %c1_24 = arith.constant 1 : index
    %c17_25 = arith.constant 17 : index
    %c0_26 = arith.constant 0 : index
    %17 = vector.load %arg7[%c0_23, %c1_24, %c17_25, %c0_26] : memref<1x18x18x8xf32, #tpu.memory_space<vmem>>, vector<1x16x1x8xf32>
    tpu.vector_store %arg7[%c0_23, %c1_24, %c17_25, %c0_26], %13 {strides = array<i32>} : memref<1x18x18x8xf32, #tpu.memory_space<vmem>>, vector<1x16x1x8xf32>,
    %c0_27 = arith.constant 0 : index
    %c0_28 = arith.constant 0 : index
    %c0_29 = arith.constant 0 : index
    %c0_30 = arith.constant 0 : index
    %18 = vector.load %arg7[%c0_27, %c0_28, %c0_29, %c0_30] : memref<1x18x18x8xf32, #tpu.memory_space<vmem>>, vector<1x16x16x8xf32>
    %c0_31 = arith.constant 0 : index
    %c0_32 = arith.constant 0 : index
    %c0_33 = arith.constant 0 : index
    %c0_34 = arith.constant 0 : index
    %19 = vector.load %arg8[%c0_31, %c0_32, %c0_33, %c0_34] : memref<1x16x16x72xf32, #tpu.memory_space<vmem>>, vector<1x16x16x8xf32>
    tpu.vector_store %arg8[%c0_31, %c0_32, %c0_33, %c0_34], %18 {strides = array<i32>} : memref<1x16x16x72xf32, #tpu.memory_space<vmem>>, vector<1x16x16x8xf32>,
    %c0_35 = arith.constant 0 : index
    %c0_36 = arith.constant 0 : index
    %c1_37 = arith.constant 1 : index
    %c0_38 = arith.constant 0 : index
    %20 = vector.load %arg7[%c0_35, %c0_36, %c1_37, %c0_38] : memref<1x18x18x8xf32, #tpu.memory_space<vmem>>, vector<1x16x16x8xf32>
    %c0_39 = arith.constant 0 : index
    %c0_40 = arith.constant 0 : index
    %c0_41 = arith.constant 0 : index
    %c8 = arith.constant 8 : index
    %21 = vector.load %arg8[%c0_39, %c0_40, %c0_41, %c8] : memref<1x16x16x72xf32, #tpu.memory_space<vmem>>, vector<1x16x16x8xf32>
    tpu.vector_store %arg8[%c0_39, %c0_40, %c0_41, %c8], %20 {strides = array<i32>} : memref<1x16x16x72xf32, #tpu.memory_space<vmem>>, vector<1x16x16x8xf32>,
    %c0_42 = arith.constant 0 : index
    %c0_43 = arith.constant 0 : index
    %c2 = arith.constant 2 : index
    %c0_44 = arith.constant 0 : index
    %22 = vector.load %arg7[%c0_42, %c0_43, %c2, %c0_44] : memref<1x18x18x8xf32, #tpu.memory_space<vmem>>, vector<1x16x16x8xf32>
    %c0_45 = arith.constant 0 : index
    %c0_46 = arith.constant 0 : index
    %c0_47 = arith.constant 0 : index
    %c16 = arith.constant 16 : index
    %23 = vector.load %arg8[%c0_45, %c0_46, %c0_47, %c16] : memref<1x16x16x72xf32, #tpu.memory_space<vmem>>, vector<1x16x16x8xf32>
    tpu.vector_store %arg8[%c0_45, %c0_46, %c0_47, %c16], %22 {strides = array<i32>} : memref<1x16x16x72xf32, #tpu.memory_space<vmem>>, vector<1x16x16x8xf32>,
    %c0_48 = arith.constant 0 : index
    %c1_49 = arith.constant 1 : index
    %c0_50 = arith.constant 0 : index
    %c0_51 = arith.constant 0 : index
    %24 = vector.load %arg7[%c0_48, %c1_49, %c0_50, %c0_51] : memref<1x18x18x8xf32, #tpu.memory_space<vmem>>, vector<1x16x16x8xf32>
    %c0_52 = arith.constant 0 : index
    %c0_53 = arith.constant 0 : index
    %c0_54 = arith.constant 0 : index
    %c24 = arith.constant 24 : index
    %25 = vector.load %arg8[%c0_52, %c0_53, %c0_54, %c24] : memref<1x16x16x72xf32, #tpu.memory_space<vmem>>, vector<1x16x16x8xf32>
    tpu.vector_store %arg8[%c0_52, %c0_53, %c0_54, %c24], %24 {strides = array<i32>} : memref<1x16x16x72xf32, #tpu.memory_space<vmem>>, vector<1x16x16x8xf32>,
    %c0_55 = arith.constant 0 : index
    %c1_56 = arith.constant 1 : index
    %c1_57 = arith.constant 1 : index
    %c0_58 = arith.constant 0 : index
    %26 = vector.load %arg7[%c0_55, %c1_56, %c1_57, %c0_58] : memref<1x18x18x8xf32, #tpu.memory_space<vmem>>, vector<1x16x16x8xf32>
    %c0_59 = arith.constant 0 : index
    %c0_60 = arith.constant 0 : index
    %c0_61 = arith.constant 0 : index
    %c32 = arith.constant 32 : index
    %27 = vector.load %arg8[%c0_59, %c0_60, %c0_61, %c32] : memref<1x16x16x72xf32, #tpu.memory_space<vmem>>, vector<1x16x16x8xf32>
    tpu.vector_store %arg8[%c0_59, %c0_60, %c0_61, %c32], %26 {strides = array<i32>} : memref<1x16x16x72xf32, #tpu.memory_space<vmem>>, vector<1x16x16x8xf32>,
    %c0_62 = arith.constant 0 : index
    %c1_63 = arith.constant 1 : index
    %c2_64 = arith.constant 2 : index
    %c0_65 = arith.constant 0 : index
    %28 = vector.load %arg7[%c0_62, %c1_63, %c2_64, %c0_65] : memref<1x18x18x8xf32, #tpu.memory_space<vmem>>, vector<1x16x16x8xf32>
    %c0_66 = arith.constant 0 : index
    %c0_67 = arith.constant 0 : index
    %c0_68 = arith.constant 0 : index
    %c40 = arith.constant 40 : index
    %29 = vector.load %arg8[%c0_66, %c0_67, %c0_68, %c40] : memref<1x16x16x72xf32, #tpu.memory_space<vmem>>, vector<1x16x16x8xf32>
    tpu.vector_store %arg8[%c0_66, %c0_67, %c0_68, %c40], %28 {strides = array<i32>} : memref<1x16x16x72xf32, #tpu.memory_space<vmem>>, vector<1x16x16x8xf32>,
    %c0_69 = arith.constant 0 : index
    %c2_70 = arith.constant 2 : index
    %c0_71 = arith.constant 0 : index
    %c0_72 = arith.constant 0 : index
    %30 = vector.load %arg7[%c0_69, %c2_70, %c0_71, %c0_72] : memref<1x18x18x8xf32, #tpu.memory_space<vmem>>, vector<1x16x16x8xf32>
    %c0_73 = arith.constant 0 : index
    %c0_74 = arith.constant 0 : index
    %c0_75 = arith.constant 0 : index
    %c48 = arith.constant 48 : index
    %31 = vector.load %arg8[%c0_73, %c0_74, %c0_75, %c48] : memref<1x16x16x72xf32, #tpu.memory_space<vmem>>, vector<1x16x16x8xf32>
    tpu.vector_store %arg8[%c0_73, %c0_74, %c0_75, %c48], %30 {strides = array<i32>} : memref<1x16x16x72xf32, #tpu.memory_space<vmem>>, vector<1x16x16x8xf32>,
    %c0_76 = arith.constant 0 : index
    %c2_77 = arith.constant 2 : index
    %c1_78 = arith.constant 1 : index
    %c0_79 = arith.constant 0 : index
    %32 = vector.load %arg7[%c0_76, %c2_77, %c1_78, %c0_79] : memref<1x18x18x8xf32, #tpu.memory_space<vmem>>, vector<1x16x16x8xf32>
    %c0_80 = arith.constant 0 : index
    %c0_81 = arith.constant 0 : index
    %c0_82 = arith.constant 0 : index
    %c56 = arith.constant 56 : index
    %33 = vector.load %arg8[%c0_80, %c0_81, %c0_82, %c56] : memref<1x16x16x72xf32, #tpu.memory_space<vmem>>, vector<1x16x16x8xf32>
    tpu.vector_store %arg8[%c0_80, %c0_81, %c0_82, %c56], %32 {strides = array<i32>} : memref<1x16x16x72xf32, #tpu.memory_space<vmem>>, vector<1x16x16x8xf32>,
    %c0_83 = arith.constant 0 : index
    %c2_84 = arith.constant 2 : index
    %c2_85 = arith.constant 2 : index
    %c0_86 = arith.constant 0 : index
    %34 = vector.load %arg7[%c0_83, %c2_84, %c2_85, %c0_86] : memref<1x18x18x8xf32, #tpu.memory_space<vmem>>, vector<1x16x16x8xf32>
    %c0_87 = arith.constant 0 : index
    %c0_88 = arith.constant 0 : index
    %c0_89 = arith.constant 0 : index
    %c64 = arith.constant 64 : index
    %35 = vector.load %arg8[%c0_87, %c0_88, %c0_89, %c64] : memref<1x16x16x72xf32, #tpu.memory_space<vmem>>, vector<1x16x16x8xf32>
    tpu.vector_store %arg8[%c0_87, %c0_88, %c0_89, %c64], %34 {strides = array<i32>} : memref<1x16x16x72xf32, #tpu.memory_space<vmem>>, vector<1x16x16x8xf32>,
    %c0_90 = arith.constant 0 : index
    %c0_91 = arith.constant 0 : index
    %c0_92 = arith.constant 0 : index
    %c0_93 = arith.constant 0 : index
    %36 = vector.load %arg8[%c0_90, %c0_91, %c0_92, %c0_93] : memref<1x16x16x72xf32, #tpu.memory_space<vmem>>, vector<1x16x16x72xf32>
    %37 = vector.shape_cast %36 : vector<1x16x16x72xf32> to vector<256x72xf32>
    %c0_94 = arith.constant 0 : index
    %c0_95 = arith.constant 0 : index
    %38 = vector.load %arg2[%c0_94, %c0_95] : memref<72x8xf32, #tpu.memory_space<vmem>>, vector<72x8xf32>
    %cst_96 = arith.constant dense<0.000000e+00> : vector<256x8xf32>
    %39 = tpu.matmul %37, %38, %cst_96 {dimension_numbers = #tpu.dot_dimension_numbers<[1], [0], [0], [1], [0, 0, 1, 1], [], []>} : vector<256x72xf32>, vector<72x8xf32>, vector<256x8xf32> -> vector<256x8xf32>
    %40 = vector.shape_cast %39 : vector<256x8xf32> to vector<1x16x16x8xf32>
    %c0_97 = arith.constant 0 : index
    %c0_98 = arith.constant 0 : index
    %c0_99 = arith.constant 0 : index
    %c0_100 = arith.constant 0 : index
    %41 = vector.load %arg5[%c0_97, %c0_98, %c0_99, %c0_100] : memref<1x16x16x8xf32, #tpu.memory_space<vmem>>, vector<1x16x16x8xf32>
    tpu.vector_store %arg5[%c0_97, %c0_98, %c0_99, %c0_100], %40 {strides = array<i32>} : memref<1x16x16x8xf32, #tpu.memory_space<vmem>>, vector<1x16x16x8xf32>,
    %cst_101 = arith.constant dense<0.000000e+00> : vector<8xf32>
    %42 = vector.multi_reduction <add>, %39, %cst_101 [0] : vector<256x8xf32> to vector<8xf32>
    %43 = vector.shape_cast %42 : vector<8xf32> to vector<1x8xf32>
    %44 = arith.mulf %39, %39 : vector<256x8xf32>
    %cst_102 = arith.constant dense<0.000000e+00> : vector<8xf32>
    %45 = vector.multi_reduction <add>, %44, %cst_102 [0] : vector<256x8xf32> to vector<8xf32>
    %46 = vector.shape_cast %45 : vector<8xf32> to vector<1x8xf32>
    %47 = vector.shape_cast %43 : vector<1x8xf32> to vector<1x1x8xf32>
    %c0_103 = arith.constant 0 : index
    %c0_104 = arith.constant 0 : index
    %c0_105 = arith.constant 0 : index
    %48 = vector.load %arg6[%c0_103, %c0_104, %c0_105] : memref<1x2x8xf32, #tpu.memory_space<vmem>>, vector<1x1x8xf32>
    tpu.vector_store %arg6[%c0_103, %c0_104, %c0_105], %47 {strides = array<i32>} : memref<1x2x8xf32, #tpu.memory_space<vmem>>, vector<1x1x8xf32>,
    %49 = vector.shape_cast %46 : vector<1x8xf32> to vector<1x1x8xf32>
    %c0_106 = arith.constant 0 : index
    %c1_107 = arith.constant 1 : index
    %c0_108 = arith.constant 0 : index
    %50 = vector.load %arg6[%c0_106, %c1_107, %c0_108] : memref<1x2x8xf32, #tpu.memory_space<vmem>>, vector<1x1x8xf32>
    tpu.vector_store %arg6[%c0_106, %c1_107, %c0_108], %49 {strides = array<i32>} : memref<1x2x8xf32, #tpu.memory_space<vmem>>, vector<1x1x8xf32>,
    return
  }
  func.func @transform_0(%arg0: i32) -> (i32, i32, i32, i32) {
    %c0_i32 = arith.constant 0 : i32
    %c0_i32_0 = arith.constant 0 : i32
    %c0_i32_1 = arith.constant 0 : i32
    %c0_i32_2 = arith.constant 0 : i32
    return %arg0, %c0_i32, %c0_i32_0, %c0_i32_1 : i32, i32, i32, i32
  }
  func.func @transform_1(%arg0: i32) -> (i32, i32) {
    %c0_i32 = arith.constant 0 : i32
    %c0_i32_0 = arith.constant 0 : i32
    %c0_i32_1 = arith.constant 0 : i32
    return %c0_i32, %c0_i32_0 : i32, i32
  }
  func.func @transform_2(%arg0: i32) -> (i32, i32) {
    %c0_i32 = arith.constant 0 : i32
    %c0_i32_0 = arith.constant 0 : i32
    %c0_i32_1 = arith.constant 0 : i32
    return %c0_i32, %c0_i32_0 : i32, i32
  }
  func.func @transform_3(%arg0: i32) -> (i32, i32) {
    %c0_i32 = arith.constant 0 : i32
    %c0_i32_0 = arith.constant 0 : i32
    %c0_i32_1 = arith.constant 0 : i32
    return %c0_i32, %c0_i32_0 : i32, i32
  }
  func.func @transform_4(%arg0: i32) -> (i32, i32, i32, i32) {
    %c0_i32 = arith.constant 0 : i32
    %c0_i32_0 = arith.constant 0 : i32
    %c0_i32_1 = arith.constant 0 : i32
    %c0_i32_2 = arith.constant 0 : i32
    return %arg0, %c0_i32, %c0_i32_0, %c0_i32_1 : i32, i32, i32, i32
  }
  func.func @transform_5(%arg0: i32) -> (i32, i32, i32) {
    %c0_i32 = arith.constant 0 : i32
    %c0_i32_0 = arith.constant 0 : i32
    %c0_i32_1 = arith.constant 0 : i32
    return %arg0, %c0_i32, %c0_i32_0 : i32, i32, i32
  }
}

</mosaic_0001>

<llo_original>
// kernel: conv_block_nhwc.5
$region0: #{conv_block_nhwc.5}
  #allocation0 [shape = 'u32[]', space=smem, size = 0x4, offset = 0x4, fixed_abs, tag = 'smem constant byte address 0x4 - core index']
  #allocation1 [shape = 'u32[72,128]{1,0:T(1,128)}', space=vmem, size = 0x9000, scoped, tag = 'internal scratch']
  %s0 = inlined_call_operand.vmem [shape: f32[2,16,16,8], index: 0, kind: input, shape index: {}]
  %s1 = inlined_call_operand.vmem [shape: f32[1,8], index: 1, kind: input, shape index: {}]
  %s2 = inlined_call_operand.vmem [shape: f32[1,8], index: 2, kind: input, shape index: {}]
  %s3 = inlined_call_operand.hbm [shape: f32[2,8,8,8], index: 3, kind: output, shape index: {}]
  %s4 = sld [smem:[#allocation0]]
  $region45: #{conv_block_nhwc.5} parent=0
    _
  %s6 = ssub.s32 1, %s4
  %s7 = scalar_select 0, %s6, %s4
  $region1: #{conv_block_nhwc.5} parent=0
    #allocation2 [shape = 'u8[65536]{0}', space=vmem, size = 0x10000, scoped, tag = 'output window, operand 0']
    #allocation3 [shape = 's32[2]{0}', space=sflag, size = 0x8, scoped, tag = 'scoped memory for conv_block_nhwc.5']
    %8 = vsyncpa [#allocation3], 0
    %s9 = scalar_lea.sflag [#allocation3], 1
    %10 = vsyncpa %s9, 0
    loop: start=0, step=1, limit=4
    $region2: #{conv_block_nhwc.5} parent=1 // loop_pre_header
      _
    $region3: #{conv_block_nhwc.5} parent=1 // loop_header
      %s12 = sphi 0, %s16
      %p13 = scmp.ge.s32.totalorder %s12, 4
      %s22 = sphi 0, %s24
      %s25 = sphi 0, %s22
      %s26 = sphi 0, %s25
      %s42 = sphi 0, %s26
      %s46 = sphi 0, %s46
      %s48 = sphi 0, %s46
      %s49 = sphi 0, %s48
      %s63 = sphi 0, %s49
      %s67 = sphi 0, %s67
      %s69 = sphi 0, %s67
      %s70 = sphi 0, %s69
      %s84 = sphi 0, %s70
      %s90 = sphi 0, %s92
      %s93 = sphi 0, %s90
      %s94 = sphi 0, %s93
      %s110 = sphi 0, %s94
    $region4: #{conv_block_nhwc.5} parent=1 // loop_header_branch
      %15 = sbr.rel (%p13) target = $region8
    $region5: #{conv_block_nhwc.5} parent=1 // loop_body
      %s17 = ssub.s32 %s12, 1
      %s18 = ssub.s32 %s12, 2
      %s19 = sadd.s32 %s12, 1
      %s20 = ssub.s32 %s12, %s19
      %p21 = scmp.eq.s32.totalorder %s20, 0
      %s23 = sadd.s32 %s22, 1
      %s24 = scalar_select %p21, %s22, %s23
      %p27 = pneg %p21
      %p28 = scmp.eq.s32.totalorder %s12, 1
      %p29 = por %p27, %p28
      %p30 = scmp.ne.s32.totalorder %s22, %s25
      %p31 = scmp.eq.s32.totalorder %s12, 0
      %p32 = por %p30, %p31
      %p33 = scmp.ne.s32.totalorder %s22, %s25
      %p34 = scmp.eq.s32.totalorder %s17, 1
      %p35 = por %p33, %p34
      %p36 = scmp.ne.s32.totalorder %s25, %s26
      %p37 = scmp.eq.s32.totalorder %s17, 0
      %p38 = por %p36, %p37
      %p39 = scmp.ne.s32.totalorder %s25, %s26
      %p40 = scmp.eq.s32.totalorder %s18, 1
      %p41 = por %p39, %p40
      %p43 = scmp.ne.s32.totalorder %s26, %s42
      %p44 = scmp.eq.s32.totalorder %s18, 0
      %p45 = por %p43, %p44
      %s47 = sadd.s32 %s46, 1
      %p50 = scmp.eq.s32.totalorder %s12, 1
      %p51 = scmp.ne.s32.totalorder %s46, %s48
      %p52 = scmp.eq.s32.totalorder %s12, 0
      %p53 = por %p51, %p52
      %p54 = scmp.ne.s32.totalorder %s46, %s48
      %p55 = scmp.eq.s32.totalorder %s17, 1
      %p56 = por %p54, %p55
      %p57 = scmp.ne.s32.totalorder %s48, %s49
      %p58 = scmp.eq.s32.totalorder %s17, 0
      %p59 = por %p57, %p58
      %p60 = scmp.ne.s32.totalorder %s48, %s49
      %p61 = scmp.eq.s32.totalorder %s18, 1
      %p62 = por %p60, %p61
      %p64 = scmp.ne.s32.totalorder %s49, %s63
      %p65 = scmp.eq.s32.totalorder %s18, 0
      %p66 = por %p64, %p65
      %s68 = sadd.s32 %s67, 1
      %p71 = scmp.eq.s32.totalorder %s12, 1
      %p72 = scmp.ne.s32.totalorder %s67, %s69
      %p73 = scmp.eq.s32.totalorder %s12, 0
      %p74 = por %p72, %p73
      %p75 = scmp.ne.s32.totalorder %s67, %s69
      %p76 = scmp.eq.s32.totalorder %s17, 1
      %p77 = por %p75, %p76
      %p78 = scmp.ne.s32.totalorder %s69, %s70
      %p79 = scmp.eq.s32.totalorder %s17, 0
      %p80 = por %p78, %p79
      %p81 = scmp.ne.s32.totalorder %s69, %s70
      %p82 = scmp.eq.s32.totalorder %s18, 1
      %p83 = por %p81, %p82
      %p85 = scmp.ne.s32.totalorder %s70, %s84
      %p86 = scmp.eq.s32.totalorder %s18, 0
      %p87 = por %p85, %p86
      %s88 = ssub.s32 %s12, %s19
      %p89 = scmp.eq.s32.totalorder %s88, 0
      %s91 = sadd.s32 %s90, 1
      %s92 = scalar_select %p89, %s90, %s91
      %p95 = pneg %p89
      %p96 = scmp.eq.s32.totalorder %s12, 1
      %p97 = por %p95, %p96
      %p98 = scmp.ne.s32.totalorder %s90, %s93
      %p99 = scmp.eq.s32.totalorder %s12, 0
      %p100 = por %p98, %p99
      %p101 = scmp.ne.s32.totalorder %s90, %s93
      %p102 = scmp.eq.s32.totalorder %s17, 1
      %p103 = por %p101, %p102
      %p104 = scmp.ne.s32.totalorder %s93, %s94
      %p105 = scmp.eq.s32.totalorder %s17, 0
      %p106 = por %p104, %p105
      %p107 = scmp.ne.s32.totalorder %s93, %s94
      %p108 = scmp.eq.s32.totalorder %s18, 1
      %p109 = por %p107, %p108
      %p111 = scmp.ne.s32.totalorder %s94, %s110
      %p112 = scmp.eq.s32.totalorder %s18, 0
      %p113 = por %p111, %p112
      %p114 = scmp.le.s32.totalorder 1, %s12
      %p115 = scmp.lt.s32.totalorder %s12, 3
      %p116 = pnand %p114, %p115
      %p117 = pneg %p116
      // Predicated region
      $region9: #{conv_block_nhwc.5} parent=5 // pred_check
        _
      $region10: #{conv_block_nhwc.5} parent=5 // pred_check_branch
        %119 = sbr.rel (%p116) target = $region12
      $region11: #{conv_block_nhwc.5} parent=5 // pred_region
        %s120 = ssub.s32 %s12, 1
        // Predicated region
        $region13: #{conv_block_nhwc.5} parent=11 // pred_check
          %p121 = pneg %p59
        $region14: #{conv_block_nhwc.5} parent=11 // pred_check_branch
          %123 = sbr.rel (%p121) target = $region16
        $region15: #{conv_block_nhwc.5} parent=11 // pred_region
          _
        $region16: #{conv_block_nhwc.5} parent=11 // pred_fallthru
          _
        // Predicated region
        $region17: #{conv_block_nhwc.5} parent=11 // pred_check
          %p124 = pneg %p80
        $region18: #{conv_block_nhwc.5} parent=11 // pred_check_branch
          %126 = sbr.rel (%p124) target = $region20
        $region19: #{conv_block_nhwc.5} parent=11 // pred_region
          _
        $region20: #{conv_block_nhwc.5} parent=11 // pred_fallthru
          _
      $region12: #{conv_block_nhwc.5} parent=5 // pred_fallthru
        _
      %p127 = scmp.lt.s32.totalorder %s12, 2
      // Predicated region
      $region21: #{conv_block_nhwc.5} parent=5 // pred_check
        %p128 = pneg %p127
      $region22: #{conv_block_nhwc.5} parent=5 // pred_check_branch
        %130 = sbr.rel (%p128) target = $region24
      $region23: #{conv_block_nhwc.5} parent=5 // pred_region
        // Predicated region
        $region25: #{conv_block_nhwc.5} parent=23 // pred_check
          %p131 = pneg %p32
        $region26: #{conv_block_nhwc.5} parent=23 // pred_check_branch
          %133 = sbr.rel (%p131) target = $region28
        $region27: #{conv_block_nhwc.5} parent=23 // pred_region
          %p134 = scmp.lt.s32.totalorder %s12, 1
          %s135 = scalar_select %p134, %s12, 1
          %s136 = smul.addr %s135, 32
          %s137 = smul.addr %s136, 8
          %s138 = scalar_lea.vmem %s0, %s137
        $region28: #{conv_block_nhwc.5} parent=23 // pred_fallthru
          _
      $region24: #{conv_block_nhwc.5} parent=5 // pred_fallthru
        _
      %p139 = scmp.le.s32.totalorder 1, %s12
      %p140 = scmp.lt.s32.totalorder %s12, 3
      %p141 = pnand %p139, %p140
      %p142 = pneg %p141
      // Predicated region
      $region29: #{conv_block_nhwc.5} parent=5 // pred_check
        _
      $region30: #{conv_block_nhwc.5} parent=5 // pred_check_branch
        %144 = sbr.rel (%p141) target = $region32
      $region31: #{conv_block_nhwc.5} parent=5 // pred_region
        %s145 = ssub.s32 %s12, 1
        %p146 = scmp.lt.s32.totalorder %s17, 1
        %s147 = scalar_select %p146, %s17, 1
        %s148 = smul.addr %s147, 32
        %s149 = smul.addr %s148, 8
        %s150 = scalar_lea.vmem %s0, %s149
        %p151 = pneg %p38
        %p152 = pneg %p35
        %p153 = pneg %p59
        %p154 = pneg %p56
        %p155 = pneg %p80
        %p156 = pneg %p77
        %p157 = pneg %p106
        %p158 = pneg %p103
        %s159 = sand.u32 %s93, 1
        %s160 = scalar_lea.sflag [#allocation3], %s159
        %s161 = sand.u32 %s93, 1
        %s162 = smul.addr %s161, 64
        %s163 = scalar_lea.vmem [#allocation2], %s162
        %p164 = scmp.lt.s32.totalorder %s17, 1
        %s165 = scalar_select %p164, %s17, 1
        %s166 = smul.addr %s165, 32
        %s167 = smul.addr %s166, 8
        %s168 = scalar_lea.vmem %s0, %s167
        %v169 = vld [vmem:[%s1] sm:$0x1]
        %v170 = vld [vmem:[%s2] sm:$0x1]
        %v171 = vld [vmem:[%s168] ss:$2 sm:$0xff]
        %s172 = scalar_lea.vmem %s168, 32
        %v173 = vld [vmem:[%s172] ss:$2 sm:$0xff]
        %s174 = scalar_lea.vmem %s168, 64
        %v175 = vld [vmem:[%s174] ss:$2 sm:$0xff]
        %s176 = scalar_lea.vmem %s168, 96
        %v177 = vld [vmem:[%s176] ss:$2 sm:$0xff]
        %s178 = scalar_lea.vmem %s168, 128
        %v179 = vld [vmem:[%s178] ss:$2 sm:$0xff]
        %s180 = scalar_lea.vmem %s168, 160
        %v181 = vld [vmem:[%s180] ss:$2 sm:$0xff]
        %s182 = scalar_lea.vmem %s168, 192
        %v183 = vld [vmem:[%s182] ss:$2 sm:$0xff]
        %s184 = scalar_lea.vmem %s168, 224
        %v185 = vld [vmem:[%s184] ss:$2 sm:$0xff]
        %v187 = vperm.slane %v169, 0
        %v189 = vmul.f32 %v171, %v187
        %v190 = vmul.f32 %v173, %v187
        %v191 = vmul.f32 %v175, %v187
        %v192 = vmul.f32 %v177, %v187
        %v193 = vmul.f32 %v179, %v187
        %v194 = vmul.f32 %v181, %v187
        %v195 = vmul.f32 %v183, %v187
        %v196 = vmul.f32 %v185, %v187
        %v198 = vperm.slane %v170, 0
        %v200 = vadd.f32 %v189, %v198
        %v201 = vadd.f32 %v190, %v198
        %v202 = vadd.f32 %v191, %v198
        %v203 = vadd.f32 %v192, %v198
        %v204 = vadd.f32 %v193, %v198
        %v205 = vadd.f32 %v194, %v198
        %v206 = vadd.f32 %v195, %v198
        %v207 = vadd.f32 %v196, %v198
        %v208 = vmax.f32 %v200, 0.0
        %v209 = vmax.f32 %v201, 0.0
        %v210 = vmax.f32 %v202, 0.0
        %v211 = vmax.f32 %v203, 0.0
        %v212 = vmax.f32 %v204, 0.0
        %v213 = vmax.f32 %v205, 0.0
        %v214 = vmax.f32 %v206, 0.0
        %v215 = vmax.f32 %v207, 0.0
        %s216 = scalar_lea.vmem %s168, 1
        %v217 = vld [vmem:[%s216] ss:$2 sm:$0xff]
        %s218 = scalar_lea.vmem %s168, 33
        %v219 = vld [vmem:[%s218] ss:$2 sm:$0xff]
        %s220 = scalar_lea.vmem %s168, 65
        %v221 = vld [vmem:[%s220] ss:$2 sm:$0xff]
        %s222 = scalar_lea.vmem %s168, 97
        %v223 = vld [vmem:[%s222] ss:$2 sm:$0xff]
        %s224 = scalar_lea.vmem %s168, 129
        %v225 = vld [vmem:[%s224] ss:$2 sm:$0xff]
        %s226 = scalar_lea.vmem %s168, 161
        %v227 = vld [vmem:[%s226] ss:$2 sm:$0xff]
        %s228 = scalar_lea.vmem %s168, 193
        %v229 = vld [vmem:[%s228] ss:$2 sm:$0xff]
        %s230 = scalar_lea.vmem %s168, 225
        %v231 = vld [vmem:[%s230] ss:$2 sm:$0xff]
        %v232 = vmul.f32 %v217, %v187
        %v233 = vmul.f32 %v219, %v187
        %v234 = vmul.f32 %v221, %v187
        %v235 = vmul.f32 %v223, %v187
        %v236 = vmul.f32 %v225, %v187
        %v237 = vmul.f32 %v227, %v187
        %v238 = vmul.f32 %v229, %v187
        %v239 = vmul.f32 %v231, %v187
        %v240 = vadd.f32 %v232, %v198
        %v241 = vadd.f32 %v233, %v198
        %v242 = vadd.f32 %v234, %v198
        %v243 = vadd.f32 %v235, %v198
        %v244 = vadd.f32 %v236, %v198
        %v245 = vadd.f32 %v237, %v198
        %v246 = vadd.f32 %v238, %v198
        %v247 = vadd.f32 %v239, %v198
        %v248 = vmax.f32 %v240, 0.0
        %v249 = vmax.f32 %v241, 0.0
        %v250 = vmax.f32 %v242, 0.0
        %v251 = vmax.f32 %v243, 0.0
        %v252 = vmax.f32 %v244, 0.0
        %v253 = vmax.f32 %v245, 0.0
        %v254 = vmax.f32 %v246, 0.0
        %v255 = vmax.f32 %v247, 0.0
        %s256 = scalar_lea.vmem %s168, 16
        %v257 = vld [vmem:[%s256] ss:$2 sm:$0xff]
        %s258 = scalar_lea.vmem %s256, 32
        %v259 = vld [vmem:[%s258] ss:$2 sm:$0xff]
        %s260 = scalar_lea.vmem %s256, 64
        %v261 = vld [vmem:[%s260] ss:$2 sm:$0xff]
        %s262 = scalar_lea.vmem %s256, 96
        %v263 = vld [vmem:[%s262] ss:$2 sm:$0xff]
        %s264 = scalar_lea.vmem %s256, 128
        %v265 = vld [vmem:[%s264] ss:$2 sm:$0xff]
        %s266 = scalar_lea.vmem %s256, 160
        %v267 = vld [vmem:[%s266] ss:$2 sm:$0xff]
        %s268 = scalar_lea.vmem %s256, 192
        %v269 = vld [vmem:[%s268] ss:$2 sm:$0xff]
        %s270 = scalar_lea.vmem %s256, 224
        %v271 = vld [vmem:[%s270] ss:$2 sm:$0xff]
        %v272 = vmul.f32 %v257, %v187
        %v273 = vmul.f32 %v259, %v187
        %v274 = vmul.f32 %v261, %v187
        %v275 = vmul.f32 %v263, %v187
        %v276 = vmul.f32 %v265, %v187
        %v277 = vmul.f32 %v267, %v187
        %v278 = vmul.f32 %v269, %v187
        %v279 = vmul.f32 %v271, %v187
        %v280 = vadd.f32 %v272, %v198
        %v281 = vadd.f32 %v273, %v198
        %v282 = vadd.f32 %v274, %v198
        %v283 = vadd.f32 %v275, %v198
        %v284 = vadd.f32 %v276, %v198
        %v285 = vadd.f32 %v277, %v198
        %v286 = vadd.f32 %v278, %v198
        %v287 = vadd.f32 %v279, %v198
        %v288 = vmax.f32 %v280, 0.0
        %v289 = vmax.f32 %v281, 0.0
        %v290 = vmax.f32 %v282, 0.0
        %v291 = vmax.f32 %v283, 0.0
        %v292 = vmax.f32 %v284, 0.0
        %v293 = vmax.f32 %v285, 0.0
        %v294 = vmax.f32 %v286, 0.0
        %v295 = vmax.f32 %v287, 0.0
        %s296 = scalar_lea.vmem %s256, 1
        %v297 = vld [vmem:[%s296] ss:$2 sm:$0xff]
        %s298 = scalar_lea.vmem %s256, 33
        %v299 = vld [vmem:[%s298] ss:$2 sm:$0xff]
        %s300 = scalar_lea.vmem %s256, 65
        %v301 = vld [vmem:[%s300] ss:$2 sm:$0xff]
        %s302 = scalar_lea.vmem %s256, 97
        %v303 = vld [vmem:[%s302] ss:$2 sm:$0xff]
        %s304 = scalar_lea.vmem %s256, 129
        %v305 = vld [vmem:[%s304] ss:$2 sm:$0xff]
        %s306 = scalar_lea.vmem %s256, 161
        %v307 = vld [vmem:[%s306] ss:$2 sm:$0xff]
        %s308 = scalar_lea.vmem %s256, 193
        %v309 = vld [vmem:[%s308] ss:$2 sm:$0xff]
        %s310 = scalar_lea.vmem %s256, 225
        %v311 = vld [vmem:[%s310] ss:$2 sm:$0xff]
        %v312 = vmul.f32 %v297, %v187
        %v313 = vmul.f32 %v299, %v187
        %v314 = vmul.f32 %v301, %v187
        %v315 = vmul.f32 %v303, %v187
        %v316 = vmul.f32 %v305, %v187
        %v317 = vmul.f32 %v307, %v187
        %v318 = vmul.f32 %v309, %v187
        %v319 = vmul.f32 %v311, %v187
        %v320 = vadd.f32 %v312, %v198
        %v321 = vadd.f32 %v313, %v198
        %v322 = vadd.f32 %v314, %v198
        %v323 = vadd.f32 %v315, %v198
        %v324 = vadd.f32 %v316, %v198
        %v325 = vadd.f32 %v317, %v198
        %v326 = vadd.f32 %v318, %v198
        %v327 = vadd.f32 %v319, %v198
        %v328 = vmax.f32 %v320, 0.0
        %v329 = vmax.f32 %v321, 0.0
        %v330 = vmax.f32 %v322, 0.0
        %v331 = vmax.f32 %v323, 0.0
        %v332 = vmax.f32 %v324, 0.0
        %v333 = vmax.f32 %v325, 0.0
        %v334 = vmax.f32 %v326, 0.0
        %v335 = vmax.f32 %v327, 0.0
        %v336 = vadd.f32 %v208, %v248
        %v337 = vadd.f32 %v209, %v249
        %v338 = vadd.f32 %v210, %v250
        %v339 = vadd.f32 %v211, %v251
        %v340 = vadd.f32 %v212, %v252
        %v341 = vadd.f32 %v213, %v253
        %v342 = vadd.f32 %v214, %v254
        %v343 = vadd.f32 %v215, %v255
        %v344 = vadd.f32 %v336, %v288
        %v345 = vadd.f32 %v337, %v289
        %v346 = vadd.f32 %v338, %v290
        %v347 = vadd.f32 %v339, %v291
        %v348 = vadd.f32 %v340, %v292
        %v349 = vadd.f32 %v341, %v293
        %v350 = vadd.f32 %v342, %v294
        %v351 = vadd.f32 %v343, %v295
        %v352 = vadd.f32 %v344, %v328
        %v353 = vadd.f32 %v345, %v329
        %v354 = vadd.f32 %v346, %v330
        %v355 = vadd.f32 %v347, %v331
        %v356 = vadd.f32 %v348, %v332
        %v357 = vadd.f32 %v349, %v333
        %v358 = vadd.f32 %v350, %v334
        %v359 = vadd.f32 %v351, %v335
        %v360 = vmul.f32 %v352, 0.25
        %v361 = vmul.f32 %v353, 0.25
        %v362 = vmul.f32 %v354, 0.25
        %v363 = vmul.f32 %v355, 0.25
        %v364 = vmul.f32 %v356, 0.25
        %v365 = vmul.f32 %v357, 0.25
        %v366 = vmul.f32 %v358, 0.25
        %v367 = vmul.f32 %v359, 0.25
        %vm368 = vcmask 64512
        %369 = vst.msk [vmem:[%s163] sm:$0xff] %vm368, %v360
        %370 = vst.msk [vmem:[%s163 + $0x8] sm:$0xff] %vm368, %v361
        %371 = vst.msk [vmem:[%s163 + $0x10] sm:$0xff] %vm368, %v362
        %372 = vst.msk [vmem:[%s163 + $0x18] sm:$0xff] %vm368, %v363
        %373 = vst.msk [vmem:[%s163 + $0x20] sm:$0xff] %vm368, %v364
        %374 = vst.msk [vmem:[%s163 + $0x28] sm:$0xff] %vm368, %v365
        %375 = vst.msk [vmem:[%s163 + $0x30] sm:$0xff] %vm368, %v366
        %376 = vst.msk [vmem:[%s163 + $0x38] sm:$0xff] %vm368, %v367
        %s377 = sand.u32 %s93, 1
        %s378 = scalar_lea.sflag [#allocation3], %s377
        %s379 = sand.u32 %s93, 1
        %s380 = smul.addr %s379, 64
        %s381 = scalar_lea.vmem [#allocation2], %s380
        // Predicated region
        $region33: #{conv_block_nhwc.5} parent=31 // pred_check
          %p382 = pneg %p103
        $region34: #{conv_block_nhwc.5} parent=31 // pred_check_branch
          %384 = sbr.rel (%p382) target = $region36
        $region35: #{conv_block_nhwc.5} parent=31 // pred_region
          %386 = vsyncadd %s378, 0
          %s387 = smul.addr %s17, 8
          %s388 = smul.addr %s387, 8
          %s389 = scalar_lea.hbm %s3, %s388
          %s390 = sshll.u32 %s381, 4
          %s391 = int_to_ptr.vmem [resolvable:$true] %s390
          %s392 = sshll.u32 %s389, 4
          %s393 = int_to_ptr.hbm [resolvable:$true] %s392
          %398 = dma.vmem_to_hbm [thread:$0]  %s391, 1024, %s393, %s378, 128, 128, 8
        $region36: #{conv_block_nhwc.5} parent=31 // pred_fallthru
          _
      $region32: #{conv_block_nhwc.5} parent=5 // pred_fallthru
        _
      %p399 = scmp.le.s32.totalorder 2, %s12
      // Predicated region
      $region37: #{conv_block_nhwc.5} parent=5 // pred_check
        %p400 = pneg %p399
      $region38: #{conv_block_nhwc.5} parent=5 // pred_check_branch
        %402 = sbr.rel (%p400) target = $region40
      $region39: #{conv_block_nhwc.5} parent=5 // pred_region
        %s403 = ssub.s32 %s12, 2
        // Predicated region
        $region41: #{conv_block_nhwc.5} parent=39 // pred_check
          %p404 = pneg %p109
        $region42: #{conv_block_nhwc.5} parent=39 // pred_check_branch
          %406 = sbr.rel (%p404) target = $region44
        $region43: #{conv_block_nhwc.5} parent=39 // pred_region
          %s407 = sand.u32 %s94, 1
          %s408 = scalar_lea.sflag [#allocation3], %s407
          %s409 = sand.u32 %s94, 1
          %s410 = smul.addr %s409, 64
          %s411 = scalar_lea.vmem [#allocation2], %s410
          %413 = dma.done %s408, 1024
        $region44: #{conv_block_nhwc.5} parent=39 // pred_fallthru
          _
      $region40: #{conv_block_nhwc.5} parent=5 // pred_fallthru
        _
    $region6: #{conv_block_nhwc.5} parent=1 // loop_footer
      %s16 = sadd.s32 1, %s12
    $region7: #{conv_block_nhwc.5} parent=1 // loop_footer_branch
      %11 = sbr.rel target = $region3
    $region8: #{conv_block_nhwc.5} parent=1 // loop_exit
      _
    %414 = vsyncpa [#allocation3], 1
    %s415 = scalar_lea.sflag [#allocation3], 1
    %416 = vsyncpa %s415, 1

// kernel: conv_block_nhwc.3
$region0: #{conv_block_nhwc.3}
  #allocation0 [shape = 'u32[]', space=smem, size = 0x4, offset = 0x4, fixed_abs, tag = 'smem constant byte address 0x4 - core index']
  #allocation1 [shape = 'u32[72,128]{1,0:T(1,128)}', space=vmem, size = 0x9000, scoped, tag = 'internal scratch']
  #allocation2 [shape = 'f32[1,18,18,4]{3,2,1,0:T(8,128)}', space=vmem, size = 0x36000, scoped, tag = 'scratch operand']
  #allocation3 [shape = 'f32[1,16,16,36]{3,2,1,0:T(8,128)}', space=vmem, size = 0x20000, scoped, tag = 'scratch operand']
  %s0 = inlined_call_operand.vmem [shape: f32[2,16,16,4], index: 0, kind: input, shape index: {}]
  %s1 = inlined_call_operand.vmem [shape: f32[36,8], index: 1, kind: input, shape index: {}]
  %s2 = inlined_call_operand.vmem [shape: f32[2,16,16,8], index: 2, kind: output, shape index: {0}]
  %s3 = inlined_call_operand.vmem [shape: f32[2,2,8], index: 3, kind: output, shape index: {1}]
  %4 = xla_tuple %s2, %s3
  %s5 = sld [smem:[#allocation0]]
  $region49: #{conv_block_nhwc.3} parent=0
    _
  %s7 = ssub.s32 1, %s5
  %s8 = scalar_select 0, %s7, %s5
  loop: start=0, step=1, limit=4
  $region2: #{conv_block_nhwc.3} parent=0 // loop_pre_header
    _
  $region3: #{conv_block_nhwc.3} parent=0 // loop_header
    %s10 = sphi 0, %s14
    %p11 = scmp.ge.s32.totalorder %s10, 4
    %s20 = sphi 0, %s22
    %s23 = sphi 0, %s20
    %s24 = sphi 0, %s23
    %s40 = sphi 0, %s24
    %s44 = sphi 0, %s44
    %s46 = sphi 0, %s44
    %s47 = sphi 0, %s46
    %s61 = sphi 0, %s47
    %s67 = sphi 0, %s69
    %s70 = sphi 0, %s67
    %s71 = sphi 0, %s70
    %s87 = sphi 0, %s71
    %s93 = sphi 0, %s95
    %s96 = sphi 0, %s93
    %s97 = sphi 0, %s96
    %s113 = sphi 0, %s97
  $region4: #{conv_block_nhwc.3} parent=0 // loop_header_branch
    %13 = sbr.rel (%p11) target = $region8
  $region5: #{conv_block_nhwc.3} parent=0 // loop_body
    %s15 = ssub.s32 %s10, 1
    %s16 = ssub.s32 %s10, 2
    %s17 = sadd.s32 %s10, 1
    %s18 = ssub.s32 %s10, %s17
    %p19 = scmp.eq.s32.totalorder %s18, 0
    %s21 = sadd.s32 %s20, 1
    %s22 = scalar_select %p19, %s20, %s21
    %p25 = pneg %p19
    %p26 = scmp.eq.s32.totalorder %s10, 1
    %p27 = por %p25, %p26
    %p28 = scmp.ne.s32.totalorder %s20, %s23
    %p29 = scmp.eq.s32.totalorder %s10, 0
    %p30 = por %p28, %p29
    %p31 = scmp.ne.s32.totalorder %s20, %s23
    %p32 = scmp.eq.s32.totalorder %s15, 1
    %p33 = por %p31, %p32
    %p34 = scmp.ne.s32.totalorder %s23, %s24
    %p35 = scmp.eq.s32.totalorder %s15, 0
    %p36 = por %p34, %p35
    %p37 = scmp.ne.s32.totalorder %s23, %s24
    %p38 = scmp.eq.s32.totalorder %s16, 1
    %p39 = por %p37, %p38
    %p41 = scmp.ne.s32.totalorder %s24, %s40
    %p42 = scmp.eq.s32.totalorder %s16, 0
    %p43 = por %p41, %p42
    %s45 = sadd.s32 %s44, 1
    %p48 = scmp.eq.s32.totalorder %s10, 1
    %p49 = scmp.ne.s32.totalorder %s44, %s46
    %p50 = scmp.eq.s32.totalorder %s10, 0
    %p51 = por %p49, %p50
    %p52 = scmp.ne.s32.totalorder %s44, %s46
    %p53 = scmp.eq.s32.totalorder %s15, 1
    %p54 = por %p52, %p53
    %p55 = scmp.ne.s32.totalorder %s46, %s47
    %p56 = scmp.eq.s32.totalorder %s15, 0
    %p57 = por %p55, %p56
    %p58 = scmp.ne.s32.totalorder %s46, %s47
    %p59 = scmp.eq.s32.totalorder %s16, 1
    %p60 = por %p58, %p59
    %p62 = scmp.ne.s32.totalorder %s47, %s61
    %p63 = scmp.eq.s32.totalorder %s16, 0
    %p64 = por %p62, %p63
    %s65 = ssub.s32 %s10, %s17
    %p66 = scmp.eq.s32.totalorder %s65, 0
    %s68 = sadd.s32 %s67, 1
    %s69 = scalar_select %p66, %s67, %s68
    %p72 = pneg %p66
    %p73 = scmp.eq.s32.totalorder %s10, 1
    %p74 = por %p72, %p73
    %p75 = scmp.ne.s32.totalorder %s67, %s70
    %p76 = scmp.eq.s32.totalorder %s10, 0
    %p77 = por %p75, %p76
    %p78 = scmp.ne.s32.totalorder %s67, %s70
    %p79 = scmp.eq.s32.totalorder %s15, 1
    %p80 = por %p78, %p79
    %p81 = scmp.ne.s32.totalorder %s70, %s71
    %p82 = scmp.eq.s32.totalorder %s15, 0
    %p83 = por %p81, %p82
    %p84 = scmp.ne.s32.totalorder %s70, %s71
    %p85 = scmp.eq.s32.totalorder %s16, 1
    %p86 = por %p84, %p85
    %p88 = scmp.ne.s32.totalorder %s71, %s87
    %p89 = scmp.eq.s32.totalorder %s16, 0
    %p90 = por %p88, %p89
    %s91 = ssub.s32 %s10, %s17
    %p92 = scmp.eq.s32.totalorder %s91, 0
    %s94 = sadd.s32 %s93, 1
    %s95 = scalar_select %p92, %s93, %s94
    %p98 = pneg %p92
    %p99 = scmp.eq.s32.totalorder %s10, 1
    %p100 = por %p98, %p99
    %p101 = scmp.ne.s32.totalorder %s93, %s96
    %p102 = scmp.eq.s32.totalorder %s10, 0
    %p103 = por %p101, %p102
    %p104 = scmp.ne.s32.totalorder %s93, %s96
    %p105 = scmp.eq.s32.totalorder %s15, 1
    %p106 = por %p104, %p105
    %p107 = scmp.ne.s32.totalorder %s96, %s97
    %p108 = scmp.eq.s32.totalorder %s15, 0
    %p109 = por %p107, %p108
    %p110 = scmp.ne.s32.totalorder %s96, %s97
    %p111 = scmp.eq.s32.totalorder %s16, 1
    %p112 = por %p110, %p111
    %p114 = scmp.ne.s32.totalorder %s97, %s113
    %p115 = scmp.eq.s32.totalorder %s16, 0
    %p116 = por %p114, %p115
    %p117 = scmp.le.s32.totalorder 1, %s10
    %p118 = scmp.lt.s32.totalorder %s10, 3
    %p119 = pnand %p117, %p118
    %p120 = pneg %p119
    // Predicated region
    $region9: #{conv_block_nhwc.3} parent=5 // pred_check
      _
    $region10: #{conv_block_nhwc.3} parent=5 // pred_check_branch
      %122 = sbr.rel (%p119) target = $region12
    $region11: #{conv_block_nhwc.3} parent=5 // pred_region
      %s123 = ssub.s32 %s10, 1
      // Predicated region
      $region13: #{conv_block_nhwc.3} parent=11 // pred_check
        %p124 = pneg %p57
      $region14: #{conv_block_nhwc.3} parent=11 // pred_check_branch
        %126 = sbr.rel (%p124) target = $region16
      $region15: #{conv_block_nhwc.3} parent=11 // pred_region
        _
      $region16: #{conv_block_nhwc.3} parent=11 // pred_fallthru
        _
    $region12: #{conv_block_nhwc.3} parent=5 // pred_fallthru
      _
    %p127 = scmp.lt.s32.totalorder %s10, 2
    // Predicated region
    $region17: #{conv_block_nhwc.3} parent=5 // pred_check
      %p128 = pneg %p127
    $region18: #{conv_block_nhwc.3} parent=5 // pred_check_branch
      %130 = sbr.rel (%p128) target = $region20
    $region19: #{conv_block_nhwc.3} parent=5 // pred_region
      // Predicated region
      $region21: #{conv_block_nhwc.3} parent=19 // pred_check
        %p131 = pneg %p30
      $region22: #{conv_block_nhwc.3} parent=19 // pred_check_branch
        %133 = sbr.rel (%p131) target = $region24
      $region23: #{conv_block_nhwc.3} parent=19 // pred_region
        %p134 = scmp.lt.s32.totalorder %s10, 1
        %s135 = scalar_select %p134, %s10, 1
        %s136 = smul.addr %s135, 32
        %s137 = smul.addr %s136, 8
        %s138 = scalar_lea.vmem %s0, %s137
      $region24: #{conv_block_nhwc.3} parent=19 // pred_fallthru
        _
    $region20: #{conv_block_nhwc.3} parent=5 // pred_fallthru
      _
    %p139 = scmp.le.s32.totalorder 1, %s10
    %p140 = scmp.lt.s32.totalorder %s10, 3
    %p141 = pnand %p139, %p140
    %p142 = pneg %p141
    // Predicated region
    $region25: #{conv_block_nhwc.3} parent=5 // pred_check
      _
    $region26: #{conv_block_nhwc.3} parent=5 // pred_check_branch
      %144 = sbr.rel (%p141) target = $region28
    $region27: #{conv_block_nhwc.3} parent=5 // pred_region
      %s145 = ssub.s32 %s10, 1
      %p146 = scmp.lt.s32.totalorder %s15, 1
      %s147 = scalar_select %p146, %s15, 1
      %s148 = smul.addr %s147, 32
      %s149 = smul.addr %s148, 8
      %s150 = scalar_lea.vmem %s0, %s149
      %p151 = pneg %p36
      %p152 = pneg %p33
      %p153 = pneg %p57
      %p154 = pneg %p54
      %p155 = pneg %p83
      %p156 = pneg %p80
      %p157 = scmp.lt.s32.totalorder %s15, 1
      %s158 = scalar_select %p157, %s15, 1
      %s159 = smul.addr %s158, 32
      %s160 = smul.addr %s159, 8
      %s161 = scalar_lea.vmem %s2, %s160
      %p162 = pneg %p109
      %p163 = pneg %p106
      %p164 = scmp.lt.s32.totalorder %s15, 1
      %s165 = scalar_select %p164, %s15, 1
      %s166 = smul.addr %s165, 2
      %s167 = scalar_lea.vmem %s3, %s166
      %p168 = scmp.lt.s32.totalorder %s15, 1
      %s169 = scalar_select %p168, %s15, 1
      %s170 = smul.addr %s169, 32
      %s171 = smul.addr %s170, 8
      %s172 = scalar_lea.vmem %s0, %s171
      %p173 = scmp.lt.s32.totalorder %s15, 1
      %s174 = scalar_select %p173, %s15, 1
      %s175 = smul.addr %s174, 32
      %s176 = smul.addr %s175, 8
      %s177 = scalar_lea.vmem %s2, %s176
      %p178 = scmp.lt.s32.totalorder %s15, 1
      %s179 = scalar_select %p178, %s15, 1
      %s180 = smul.addr %s179, 2
      %s181 = scalar_lea.vmem %s3, %s180
      %v182 = vld [vmem:[%s172] sm:$0xff]
      %v183 = vld [vmem:[%s172 + $0x8] sm:$0xff]
      %v184 = vld [vmem:[%s172 + $0x10] sm:$0xff]
      %v185 = vld [vmem:[%s172 + $0x18] sm:$0xff]
      %v186 = vld [vmem:[%s172 + $0x20] sm:$0xff]
      %v187 = vld [vmem:[%s172 + $0x28] sm:$0xff]
      %v188 = vld [vmem:[%s172 + $0x30] sm:$0xff]
      %v189 = vld [vmem:[%s172 + $0x38] sm:$0xff]
      %v190 = vld [vmem:[%s172 + $0x40] sm:$0xff]
      %v191 = vld [vmem:[%s172 + $0x48] sm:$0xff]
      %v192 = vld [vmem:[%s172 + $0x50] sm:$0xff]
      %v193 = vld [vmem:[%s172 + $0x58] sm:$0xff]
      %v194 = vld [vmem:[%s172 + $0x60] sm:$0xff]
      %v195 = vld [vmem:[%s172 + $0x68] sm:$0xff]
      %v196 = vld [vmem:[%s172 + $0x70] sm:$0xff]
      %v197 = vld [vmem:[%s172 + $0x78] sm:$0xff]
      %v198 = vld [vmem:[%s172 + $0x80] sm:$0xff]
      %v199 = vld [vmem:[%s172 + $0x88] sm:$0xff]
      %v200 = vld [vmem:[%s172 + $0x90] sm:$0xff]
      %v201 = vld [vmem:[%s172 + $0x98] sm:$0xff]
      %v202 = vld [vmem:[%s172 + $0xa0] sm:$0xff]
      %v203 = vld [vmem:[%s172 + $0xa8] sm:$0xff]
      %v204 = vld [vmem:[%s172 + $0xb0] sm:$0xff]
      %v205 = vld [vmem:[%s172 + $0xb8] sm:$0xff]
      %v206 = vld [vmem:[%s172 + $0xc0] sm:$0xff]
      %v207 = vld [vmem:[%s172 + $0xc8] sm:$0xff]
      %v208 = vld [vmem:[%s172 + $0xd0] sm:$0xff]
      %v209 = vld [vmem:[%s172 + $0xd8] sm:$0xff]
      %v210 = vld [vmem:[%s172 + $0xe0] sm:$0xff]
      %v211 = vld [vmem:[%s172 + $0xe8] sm:$0xff]
      %v212 = vld [vmem:[%s172 + $0xf0] sm:$0xff]
      %v213 = vld [vmem:[%s172 + $0xf8] sm:$0xff]
      %s214 = scalar_lea.vmem [#allocation2], 24
      %vm215 = vcmask 31744
      %216 = vst.msk [vmem:[%s214 + $0x1] sm:$0xff] %vm215, %v182
      %217 = vst.msk [vmem:[%s214 + $0x9] sm:$0xff] %vm215, %v183
      %218 = vst.msk [vmem:[%s214 + $0x19] sm:$0xff] %vm215, %v184
      %219 = vst.msk [vmem:[%s214 + $0x21] sm:$0xff] %vm215, %v185
      %220 = vst.msk [vmem:[%s214 + $0x31] sm:$0xff] %vm215, %v186
      %221 = vst.msk [vmem:[%s214 + $0x39] sm:$0xff] %vm215, %v187
      %222 = vst.msk [vmem:[%s214 + $0x49] sm:$0xff] %vm215, %v188
      %223 = vst.msk [vmem:[%s214 + $0x51] sm:$0xff] %vm215, %v189
      %224 = vst.msk [vmem:[%s214 + $0x61] sm:$0xff] %vm215, %v190
      %225 = vst.msk [vmem:[%s214 + $0x69] sm:$0xff] %vm215, %v191
      %226 = vst.msk [vmem:[%s214 + $0x79] sm:$0xff] %vm215, %v192
      %227 = vst.msk [vmem:[%s214 + $0x81] sm:$0xff] %vm215, %v193
      %228 = vst.msk [vmem:[%s214 + $0x91] sm:$0xff] %vm215, %v194
      %229 = vst.msk [vmem:[%s214 + $0x99] sm:$0xff] %vm215, %v195
      %230 = vst.msk [vmem:[%s214 + $0xa9] sm:$0xff] %vm215, %v196
      %231 = vst.msk [vmem:[%s214 + $0xb1] sm:$0xff] %vm215, %v197
      %232 = vst.msk [vmem:[%s214 + $0xc1] sm:$0xff] %vm215, %v198
      %233 = vst.msk [vmem:[%s214 + $0xc9] sm:$0xff] %vm215, %v199
      %234 = vst.msk [vmem:[%s214 + $0xd9] sm:$0xff] %vm215, %v200
      %235 = vst.msk [vmem:[%s214 + $0xe1] sm:$0xff] %vm215, %v201
      %236 = vst.msk [vmem:[%s214 + $0xf1] sm:$0xff] %vm215, %v202
      %237 = vst.msk [vmem:[%s214 + $0xf9] sm:$0xff] %vm215, %v203
      %238 = vst.msk [vmem:[%s214 + $0x109] sm:$0xff] %vm215, %v204
      %239 = vst.msk [vmem:[%s214 + $0x111] sm:$0xff] %vm215, %v205
      %240 = vst.msk [vmem:[%s214 + $0x121] sm:$0xff] %vm215, %v206
      %241 = vst.msk [vmem:[%s214 + $0x129] sm:$0xff] %vm215, %v207
      %242 = vst.msk [vmem:[%s214 + $0x139] sm:$0xff] %vm215, %v208
      %243 = vst.msk [vmem:[%s214 + $0x141] sm:$0xff] %vm215, %v209
      %244 = vst.msk [vmem:[%s214 + $0x151] sm:$0xff] %vm215, %v210
      %245 = vst.msk [vmem:[%s214 + $0x159] sm:$0xff] %vm215, %v211
      %246 = vst.msk [vmem:[%s214 + $0x169] sm:$0xff] %vm215, %v212
      %247 = vst.msk [vmem:[%s214 + $0x171] sm:$0xff] %vm215, %v213
      %248 = vst.msk [vmem:[#allocation2] sm:$0xff] %vm215, 0.0
      %249 = vst.msk [vmem:[#allocation2 + $0x8] sm:$0xff] %vm215, 0.0
      %vm250 = vcmask 25600
      %251 = vst.msk [vmem:[#allocation2 + $0x10] sm:$0x3] %vm250, 0.0
      %s252 = scalar_lea.vmem [#allocation2], 408
      %253 = vst.msk [vmem:[%s252] sm:$0xff] %vm215, 0.0
      %254 = vst.msk [vmem:[%s252 + $0x8] sm:$0xff] %vm215, 0.0
      %255 = vst.msk [vmem:[%s252 + $0x10] sm:$0x3] %vm250, 0.0
      %vm256 = vcmask 24576
      %257 = vst.msk [vmem:[%s214] sm:$0x1] %vm256, 0.0
      %258 = vst.msk [vmem:[%s214 + $0x18] sm:$0x1] %vm256, 0.0
      %259 = vst.msk [vmem:[%s214 + $0x30] sm:$0x1] %vm256, 0.0
      %260 = vst.msk [vmem:[%s214 + $0x48] sm:$0x1] %vm256, 0.0
      %261 = vst.msk [vmem:[%s214 + $0x60] sm:$0x1] %vm256, 0.0
      %262 = vst.msk [vmem:[%s214 + $0x78] sm:$0x1] %vm256, 0.0
      %263 = vst.msk [vmem:[%s214 + $0x90] sm:$0x1] %vm256, 0.0
      %264 = vst.msk [vmem:[%s214 + $0xa8] sm:$0x1] %vm256, 0.0
      %265 = vst.msk [vmem:[%s214 + $0xc0] sm:$0x1] %vm256, 0.0
      %266 = vst.msk [vmem:[%s214 + $0xd8] sm:$0x1] %vm256, 0.0
      %267 = vst.msk [vmem:[%s214 + $0xf0] sm:$0x1] %vm256, 0.0
      %268 = vst.msk [vmem:[%s214 + $0x108] sm:$0x1] %vm256, 0.0
      %269 = vst.msk [vmem:[%s214 + $0x120] sm:$0x1] %vm256, 0.0
      %270 = vst.msk [vmem:[%s214 + $0x138] sm:$0x1] %vm256, 0.0
      %271 = vst.msk [vmem:[%s214 + $0x150] sm:$0x1] %vm256, 0.0
      %272 = vst.msk [vmem:[%s214 + $0x168] sm:$0x1] %vm256, 0.0
      %273 = vst.msk [vmem:[%s214 + $0x11] sm:$0x1] %vm256, 0.0
      %274 = vst.msk [vmem:[%s214 + $0x29] sm:$0x1] %vm256, 0.0
      %275 = vst.msk [vmem:[%s214 + $0x41] sm:$0x1] %vm256, 0.0
      %276 = vst.msk [vmem:[%s214 + $0x59] sm:$0x1] %vm256, 0.0
      %277 = vst.msk [vmem:[%s214 + $0x71] sm:$0x1] %vm256, 0.0
      %278 = vst.msk [vmem:[%s214 + $0x89] sm:$0x1] %vm256, 0.0
      %279 = vst.msk [vmem:[%s214 + $0xa1] sm:$0x1] %vm256, 0.0
      %280 = vst.msk [vmem:[%s214 + $0xb9] sm:$0x1] %vm256, 0.0
      %281 = vst.msk [vmem:[%s214 + $0xd1] sm:$0x1] %vm256, 0.0
      %282 = vst.msk [vmem:[%s214 + $0xe9] sm:$0x1] %vm256, 0.0
      %283 = vst.msk [vmem:[%s214 + $0x101] sm:$0x1] %vm256, 0.0
      %284 = vst.msk [vmem:[%s214 + $0x119] sm:$0x1] %vm256, 0.0
      %285 = vst.msk [vmem:[%s214 + $0x131] sm:$0x1] %vm256, 0.0
      %286 = vst.msk [vmem:[%s214 + $0x149] sm:$0x1] %vm256, 0.0
      %287 = vst.msk [vmem:[%s214 + $0x161] sm:$0x1] %vm256, 0.0
      %288 = vst.msk [vmem:[%s214 + $0x179] sm:$0x1] %vm256, 0.0
      %v289 = vld [vmem:[#allocation2] sm:$0xff]
      %v290 = vld [vmem:[#allocation2 + $0x8] sm:$0xff]
      %v291 = vld [vmem:[#allocation2 + $0x18] sm:$0xff]
      %v292 = vld [vmem:[#allocation2 + $0x20] sm:$0xff]
      %v293 = vld [vmem:[#allocation2 + $0x30] sm:$0xff]
      %v294 = vld [vmem:[#allocation2 + $0x38] sm:$0xff]
      %v295 = vld [vmem:[#allocation2 + $0x48] sm:$0xff]
      %v296 = vld [vmem:[#allocation2 + $0x50] sm:$0xff]
      %v297 = vld [vmem:[#allocation2 + $0x60] sm:$0xff]
      %v298 = vld [vmem:[#allocation2 + $0x68] sm:$0xff]
      %v299 = vld [vmem:[#allocation2 + $0x78] sm:$0xff]
      %v300 = vld [vmem:[#allocation2 + $0x80] sm:$0xff]
      %v301 = vld [vmem:[#allocation2 + $0x90] sm:$0xff]
      %v302 = vld [vmem:[#allocation2 + $0x98] sm:$0xff]
      %v303 = vld [vmem:[#allocation2 + $0xa8] sm:$0xff]
      %v304 = vld [vmem:[#allocation2 + $0xb0] sm:$0xff]
      %v305 = vld [vmem:[#allocation2 + $0xc0] sm:$0xff]
      %v306 = vld [vmem:[#allocation2 + $0xc8] sm:$0xff]
      %v307 = vld [vmem:[#allocation2 + $0xd8] sm:$0xff]
      %v308 = vld [vmem:[#allocation2 + $0xe0] sm:$0xff]
      %v309 = vld [vmem:[#allocation2 + $0xf0] sm:$0xff]
      %v310 = vld [vmem:[#allocation2 + $0xf8] sm:$0xff]
      %v311 = vld [vmem:[#allocation2 + $0x108] sm:$0xff]
      %v312 = vld [vmem:[#allocation2 + $0x110] sm:$0xff]
      %v313 = vld [vmem:[#allocation2 + $0x120] sm:$0xff]
      %v314 = vld [vmem:[#allocation2 + $0x128] sm:$0xff]
      %v315 = vld [vmem:[#allocation2 + $0x138] sm:$0xff]
      %v316 = vld [vmem:[#allocation2 + $0x140] sm:$0xff]
      %v317 = vld [vmem:[#allocation2 + $0x150] sm:$0xff]
      %v318 = vld [vmem:[#allocation2 + $0x158] sm:$0xff]
      %v319 = vld [vmem:[#allocation2 + $0x168] sm:$0xff]
      %v320 = vld [vmem:[#allocation2 + $0x170] sm:$0xff]
      %321 = vst.msk [vmem:[#allocation3] sm:$0xff] %vm215, %v289
      %322 = vst.msk [vmem:[#allocation3 + $0x8] sm:$0xff] %vm215, %v290
      %323 = vst.msk [vmem:[#allocation3 + $0x10] sm:$0xff] %vm215, %v291
      %324 = vst.msk [vmem:[#allocation3 + $0x18] sm:$0xff] %vm215, %v292
      %325 = vst.msk [vmem:[#allocation3 + $0x20] sm:$0xff] %vm215, %v293
      %326 = vst.msk [vmem:[#allocation3 + $0x28] sm:$0xff] %vm215, %v294
      %327 = vst.msk [vmem:[#allocation3 + $0x30] sm:$0xff] %vm215, %v295
      %328 = vst.msk [vmem:[#allocation3 + $0x38] sm:$0xff] %vm215, %v296
      %329 = vst.msk [vmem:[#allocation3 + $0x40] sm:$0xff] %vm215, %v297
      %330 = vst.msk [vmem:[#allocation3 + $0x48] sm:$0xff] %vm215, %v298
      %331 = vst.msk [vmem:[#allocation3 + $0x50] sm:$0xff] %vm215, %v299
      %332 = vst.msk [vmem:[#allocation3 + $0x58] sm:$0xff] %vm215, %v300
      %333 = vst.msk [vmem:[#allocation3 + $0x60] sm:$0xff] %vm215, %v301
      %334 = vst.msk [vmem:[#allocation3 + $0x68] sm:$0xff] %vm215, %v302
      %335 = vst.msk [vmem:[#allocation3 + $0x70] sm:$0xff] %vm215, %v303
      %336 = vst.msk [vmem:[#allocation3 + $0x78] sm:$0xff] %vm215, %v304
      %337 = vst.msk [vmem:[#allocation3 + $0x80] sm:$0xff] %vm215, %v305
      %338 = vst.msk [vmem:[#allocation3 + $0x88] sm:$0xff] %vm215, %v306
      %339 = vst.msk [vmem:[#allocation3 + $0x90] sm:$0xff] %vm215, %v307
      %340 = vst.msk [vmem:[#allocation3 + $0x98] sm:$0xff] %vm215, %v308
      %341 = vst.msk [vmem:[#allocation3 + $0xa0] sm:$0xff] %vm215, %v309
      %342 = vst.msk [vmem:[#allocation3 + $0xa8] sm:$0xff] %vm215, %v310
      %343 = vst.msk [vmem:[#allocation3 + $0xb0] sm:$0xff] %vm215, %v311
      %344 = vst.msk [vmem:[#allocation3 + $0xb8] sm:$0xff] %vm215, %v312
      %345 = vst.msk [vmem:[#allocation3 + $0xc0] sm:$0xff] %vm215, %v313
      %346 = vst.msk [vmem:[#allocation3 + $0xc8] sm:$0xff] %vm215, %v314
      %347 = vst.msk [vmem:[#allocation3 + $0xd0] sm:$0xff] %vm215, %v315
      %348 = vst.msk [vmem:[#allocation3 + $0xd8] sm:$0xff] %vm215, %v316
      %349 = vst.msk [vmem:[#allocation3 + $0xe0] sm:$0xff] %vm215, %v317
      %350 = vst.msk [vmem:[#allocation3 + $0xe8] sm:$0xff] %vm215, %v318
      %351 = vst.msk [vmem:[#allocation3 + $0xf0] sm:$0xff] %vm215, %v319
      %352 = vst.msk [vmem:[#allocation3 + $0xf8] sm:$0xff] %vm215, %v320
      %v353 = vld [vmem:[#allocation2 + $0x1] sm:$0xff]
      %v354 = vld [vmem:[#allocation2 + $0x9] sm:$0xff]
      %v355 = vld [vmem:[#allocation2 + $0x19] sm:$0xff]
      %v356 = vld [vmem:[#allocation2 + $0x21] sm:$0xff]
      %v357 = vld [vmem:[#allocation2 + $0x31] sm:$0xff]
      %v358 = vld [vmem:[#allocation2 + $0x39] sm:$0xff]
      %v359 = vld [vmem:[#allocation2 + $0x49] sm:$0xff]
      %v360 = vld [vmem:[#allocation2 + $0x51] sm:$0xff]
      %v361 = vld [vmem:[#allocation2 + $0x61] sm:$0xff]
      %v362 = vld [vmem:[#allocation2 + $0x69] sm:$0xff]
      %v363 = vld [vmem:[#allocation2 + $0x79] sm:$0xff]
      %v364 = vld [vmem:[#allocation2 + $0x81] sm:$0xff]
      %v365 = vld [vmem:[#allocation2 + $0x91] sm:$0xff]
      %v366 = vld [vmem:[#allocation2 + $0x99] sm:$0xff]
      %v367 = vld [vmem:[#allocation2 + $0xa9] sm:$0xff]
      %v368 = vld [vmem:[#allocation2 + $0xb1] sm:$0xff]
      %v369 = vld [vmem:[#allocation2 + $0xc1] sm:$0xff]
      %v370 = vld [vmem:[#allocation2 + $0xc9] sm:$0xff]
      %v371 = vld [vmem:[#allocation2 + $0xd9] sm:$0xff]
      %v372 = vld [vmem:[#allocation2 + $0xe1] sm:$0xff]
      %v373 = vld [vmem:[#allocation2 + $0xf1] sm:$0xff]
      %v374 = vld [vmem:[#allocation2 + $0xf9] sm:$0xff]
      %v375 = vld [vmem:[#allocation2 + $0x109] sm:$0xff]
      %v376 = vld [vmem:[#allocation2 + $0x111] sm:$0xff]
      %v377 = vld [vmem:[#allocation2 + $0x121] sm:$0xff]
      %v378 = vld [vmem:[#allocation2 + $0x129] sm:$0xff]
      %v379 = vld [vmem:[#allocation2 + $0x139] sm:$0xff]
      %v380 = vld [vmem:[#allocation2 + $0x141] sm:$0xff]
      %v381 = vld [vmem:[#allocation2 + $0x151] sm:$0xff]
      %v382 = vld [vmem:[#allocation2 + $0x159] sm:$0xff]
      %v383 = vld [vmem:[#allocation2 + $0x169] sm:$0xff]
      %v384 = vld [vmem:[#allocation2 + $0x171] sm:$0xff]
      %417 = vrot.lane.b32.xlu0 %v353, 4
      %v418 = vpop.permute.xlu0 %417
      %419 = vrot.lane.b32.xlu0 %v354, 4
      %v420 = vpop.permute.xlu0 %419
      %421 = vrot.lane.b32.xlu0 %v355, 4
      %v422 = vpop.permute.xlu0 %421
      %423 = vrot.lane.b32.xlu0 %v356, 4
      %v424 = vpop.permute.xlu0 %423
      %425 = vrot.lane.b32.xlu0 %v357, 4
      %v426 = vpop.permute.xlu0 %425
      %427 = vrot.lane.b32.xlu0 %v358, 4
      %v428 = vpop.permute.xlu0 %427
      %429 = vrot.lane.b32.xlu0 %v359, 4
      %v430 = vpop.permute.xlu0 %429
      %431 = vrot.lane.b32.xlu0 %v360, 4
      %v432 = vpop.permute.xlu0 %431
      %433 = vrot.lane.b32.xlu0 %v361, 4
      %v434 = vpop.permute.xlu0 %433
      %435 = vrot.lane.b32.xlu0 %v362, 4
      %v436 = vpop.permute.xlu0 %435
      %437 = vrot.lane.b32.xlu0 %v363, 4
      %v438 = vpop.permute.xlu0 %437
      %439 = vrot.lane.b32.xlu0 %v364, 4
      %v440 = vpop.permute.xlu0 %439
      %441 = vrot.lane.b32.xlu0 %v365, 4
      %v442 = vpop.permute.xlu0 %441
      %443 = vrot.lane.b32.xlu0 %v366, 4
      %v444 = vpop.permute.xlu0 %443
      %445 = vrot.lane.b32.xlu0 %v367, 4
      %v446 = vpop.permute.xlu0 %445
      %447 = vrot.lane.b32.xlu0 %v368, 4
      %v448 = vpop.permute.xlu0 %447
      %449 = vrot.lane.b32.xlu0 %v369, 4
      %v450 = vpop.permute.xlu0 %449
      %451 = vrot.lane.b32.xlu0 %v370, 4
      %v452 = vpop.permute.xlu0 %451
      %453 = vrot.lane.b32.xlu0 %v371, 4
      %v454 = vpop.permute.xlu0 %453
      %455 = vrot.lane.b32.xlu0 %v372, 4
      %v456 = vpop.permute.xlu0 %455
      %457 = vrot.lane.b32.xlu0 %v373, 4
      %v458 = vpop.permute.xlu0 %457
      %459 = vrot.lane.b32.xlu0 %v374, 4
      %v460 = vpop.permute.xlu0 %459
      %461 = vrot.lane.b32.xlu0 %v375, 4
      %v462 = vpop.permute.xlu0 %461
      %463 = vrot.lane.b32.xlu0 %v376, 4
      %v464 = vpop.permute.xlu0 %463
      %465 = vrot.lane.b32.xlu0 %v377, 4
      %v466 = vpop.permute.xlu0 %465
      %467 = vrot.lane.b32.xlu0 %v378, 4
      %v468 = vpop.permute.xlu0 %467
      %469 = vrot.lane.b32.xlu0 %v379, 4
      %v470 = vpop.permute.xlu0 %469
      %471 = vrot.lane.b32.xlu0 %v380, 4
      %v472 = vpop.permute.xlu0 %471
      %473 = vrot.lane.b32.xlu0 %v381, 4
      %v474 = vpop.permute.xlu0 %473
      %475 = vrot.lane.b32.xlu0 %v382, 4
      %v476 = vpop.permute.xlu0 %475
      %477 = vrot.lane.b32.xlu0 %v383, 4
      %v478 = vpop.permute.xlu0 %477
      %479 = vrot.lane.b32.xlu0 %v384, 4
      %v480 = vpop.permute.xlu0 %479
      %vm513 = vcmask 64544
      %514 = vst.msk [vmem:[#allocation3] sm:$0xff] %vm513, %v418
      %515 = vst.msk [vmem:[#allocation3 + $0x8] sm:$0xff] %vm513, %v420
      %516 = vst.msk [vmem:[#allocation3 + $0x10] sm:$0xff] %vm513, %v422
      %517 = vst.msk [vmem:[#allocation3 + $0x18] sm:$0xff] %vm513, %v424
      %518 = vst.msk [vmem:[#allocation3 + $0x20] sm:$0xff] %vm513, %v426
      %519 = vst.msk [vmem:[#allocation3 + $0x28] sm:$0xff] %vm513, %v428
      %520 = vst.msk [vmem:[#allocation3 + $0x30] sm:$0xff] %vm513, %v430
      %521 = vst.msk [vmem:[#allocation3 + $0x38] sm:$0xff] %vm513, %v432
      %522 = vst.msk [vmem:[#allocation3 + $0x40] sm:$0xff] %vm513, %v434
      %523 = vst.msk [vmem:[#allocation3 + $0x48] sm:$0xff] %vm513, %v436
      %524 = vst.msk [vmem:[#allocation3 + $0x50] sm:$0xff] %vm513, %v438
      %525 = vst.msk [vmem:[#allocation3 + $0x58] sm:$0xff] %vm513, %v440
      %526 = vst.msk [vmem:[#allocation3 + $0x60] sm:$0xff] %vm513, %v442
      %527 = vst.msk [vmem:[#allocation3 + $0x68] sm:$0xff] %vm513, %v444
      %528 = vst.msk [vmem:[#allocation3 + $0x70] sm:$0xff] %vm513, %v446
      %529 = vst.msk [vmem:[#allocation3 + $0x78] sm:$0xff] %vm513, %v448
      %530 = vst.msk [vmem:[#allocation3 + $0x80] sm:$0xff] %vm513, %v450
      %531 = vst.msk [vmem:[#allocation3 + $0x88] sm:$0xff] %vm513, %v452
      %532 = vst.msk [vmem:[#allocation3 + $0x90] sm:$0xff] %vm513, %v454
      %533 = vst.msk [vmem:[#allocation3 + $0x98] sm:$0xff] %vm513, %v456
      %534 = vst.msk [vmem:[#allocation3 + $0xa0] sm:$0xff] %vm513, %v458
      %535 = vst.msk [vmem:[#allocation3 + $0xa8] sm:$0xff] %vm513, %v460
      %536 = vst.msk [vmem:[#allocation3 + $0xb0] sm:$0xff] %vm513, %v462
      %537 = vst.msk [vmem:[#allocation3 + $0xb8] sm:$0xff] %vm513, %v464
      %538 = vst.msk [vmem:[#allocation3 + $0xc0] sm:$0xff] %vm513, %v466
      %539 = vst.msk [vmem:[#allocation3 + $0xc8] sm:$0xff] %vm513, %v468
      %540 = vst.msk [vmem:[#allocation3 + $0xd0] sm:$0xff] %vm513, %v470
      %541 = vst.msk [vmem:[#allocation3 + $0xd8] sm:$0xff] %vm513, %v472
      %542 = vst.msk [vmem:[#allocation3 + $0xe0] sm:$0xff] %vm513, %v474
      %543 = vst.msk [vmem:[#allocation3 + $0xe8] sm:$0xff] %vm513, %v476
      %544 = vst.msk [vmem:[#allocation3 + $0xf0] sm:$0xff] %vm513, %v478
      %545 = vst.msk [vmem:[#allocation3 + $0xf8] sm:$0xff] %vm513, %v480
      %v546 = vld [vmem:[#allocation2 + $0x2] sm:$0xff]
      %v547 = vld [vmem:[#allocation2 + $0xa] sm:$0xff]
      %v548 = vld [vmem:[#allocation2 + $0x1a] sm:$0xff]
      %v549 = vld [vmem:[#allocation2 + $0x22] sm:$0xff]
      %v550 = vld [vmem:[#allocation2 + $0x32] sm:$0xff]
      %v551 = vld [vmem:[#allocation2 + $0x3a] sm:$0xff]
      %v552 = vld [vmem:[#allocation2 + $0x4a] sm:$0xff]
      %v553 = vld [vmem:[#allocation2 + $0x52] sm:$0xff]
      %v554 = vld [vmem:[#allocation2 + $0x62] sm:$0xff]
      %v555 = vld [vmem:[#allocation2 + $0x6a] sm:$0xff]
      %v556 = vld [vmem:[#allocation2 + $0x7a] sm:$0xff]
      %v557 = vld [vmem:[#allocation2 + $0x82] sm:$0xff]
      %v558 = vld [vmem:[#allocation2 + $0x92] sm:$0xff]
      %v559 = vld [vmem:[#allocation2 + $0x9a] sm:$0xff]
      %v560 = vld [vmem:[#allocation2 + $0xaa] sm:$0xff]
      %v561 = vld [vmem:[#allocation2 + $0xb2] sm:$0xff]
      %v562 = vld [vmem:[#allocation2 + $0xc2] sm:$0xff]
      %v563 = vld [vmem:[#allocation2 + $0xca] sm:$0xff]
      %v564 = vld [vmem:[#allocation2 + $0xda] sm:$0xff]
      %v565 = vld [vmem:[#allocation2 + $0xe2] sm:$0xff]
      %v566 = vld [vmem:[#allocation2 + $0xf2] sm:$0xff]
      %v567 = vld [vmem:[#allocation2 + $0xfa] sm:$0xff]
      %v568 = vld [vmem:[#allocation2 + $0x10a] sm:$0xff]
      %v569 = vld [vmem:[#allocation2 + $0x112] sm:$0xff]
      %v570 = vld [vmem:[#allocation2 + $0x122] sm:$0xff]
      %v571 = vld [vmem:[#allocation2 + $0x12a] sm:$0xff]
      %v572 = vld [vmem:[#allocation2 + $0x13a] sm:$0xff]
      %v573 = vld [vmem:[#allocation2 + $0x142] sm:$0xff]
      %v574 = vld [vmem:[#allocation2 + $0x152] sm:$0xff]
      %v575 = vld [vmem:[#allocation2 + $0x15a] sm:$0xff]
      %v576 = vld [vmem:[#allocation2 + $0x16a] sm:$0xff]
      %v577 = vld [vmem:[#allocation2 + $0x172] sm:$0xff]
      %610 = vrot.lane.b32.xlu0 %v546, 8
      %v611 = vpop.permute.xlu0 %610
      %612 = vrot.lane.b32.xlu0 %v547, 8
      %v613 = vpop.permute.xlu0 %612
      %614 = vrot.lane.b32.xlu0 %v548, 8
      %v615 = vpop.permute.xlu0 %614
      %616 = vrot.lane.b32.xlu0 %v549, 8
      %v617 = vpop.permute.xlu0 %616
      %618 = vrot.lane.b32.xlu0 %v550, 8
      %v619 = vpop.permute.xlu0 %618
      %620 = vrot.lane.b32.xlu0 %v551, 8
      %v621 = vpop.permute.xlu0 %620
      %622 = vrot.lane.b32.xlu0 %v552, 8
      %v623 = vpop.permute.xlu0 %622
      %624 = vrot.lane.b32.xlu0 %v553, 8
      %v625 = vpop.permute.xlu0 %624
      %626 = vrot.lane.b32.xlu0 %v554, 8
      %v627 = vpop.permute.xlu0 %626
      %628 = vrot.lane.b32.xlu0 %v555, 8
      %v629 = vpop.permute.xlu0 %628
      %630 = vrot.lane.b32.xlu0 %v556, 8
      %v631 = vpop.permute.xlu0 %630
      %632 = vrot.lane.b32.xlu0 %v557, 8
      %v633 = vpop.permute.xlu0 %632
      %634 = vrot.lane.b32.xlu0 %v558, 8
      %v635 = vpop.permute.xlu0 %634
      %636 = vrot.lane.b32.xlu0 %v559, 8
      %v637 = vpop.permute.xlu0 %636
      %638 = vrot.lane.b32.xlu0 %v560, 8
      %v639 = vpop.permute.xlu0 %638
      %640 = vrot.lane.b32.xlu0 %v561, 8
      %v641 = vpop.permute.xlu0 %640
      %642 = vrot.lane.b32.xlu0 %v562, 8
      %v643 = vpop.permute.xlu0 %642
      %644 = vrot.lane.b32.xlu0 %v563, 8
      %v645 = vpop.permute.xlu0 %644
      %646 = vrot.lane.b32.xlu0 %v564, 8
      %v647 = vpop.permute.xlu0 %646
      %648 = vrot.lane.b32.xlu0 %v565, 8
      %v649 = vpop.permute.xlu0 %648
      %650 = vrot.lane.b32.xlu0 %v566, 8
      %v651 = vpop.permute.xlu0 %650
      %652 = vrot.lane.b32.xlu0 %v567, 8
      %v653 = vpop.permute.xlu0 %652
      %654 = vrot.lane.b32.xlu0 %v568, 8
      %v655 = vpop.permute.xlu0 %654
      %656 = vrot.lane.b32.xlu0 %v569, 8
      %v657 = vpop.permute.xlu0 %656
      %658 = vrot.lane.b32.xlu0 %v570, 8
      %v659 = vpop.permute.xlu0 %658
      %660 = vrot.lane.b32.xlu0 %v571, 8
      %v661 = vpop.permute.xlu0 %660
      %662 = vrot.lane.b32.xlu0 %v572, 8
      %v663 = vpop.permute.xlu0 %662
      %664 = vrot.lane.b32.xlu0 %v573, 8
      %v665 = vpop.permute.xlu0 %664
      %666 = vrot.lane.b32.xlu0 %v574, 8
      %v667 = vpop.permute.xlu0 %666
      %668 = vrot.lane.b32.xlu0 %v575, 8
      %v669 = vpop.permute.xlu0 %668
      %670 = vrot.lane.b32.xlu0 %v576, 8
      %v671 = vpop.permute.xlu0 %670
      %672 = vrot.lane.b32.xlu0 %v577, 8
      %v673 = vpop.permute.xlu0 %672
      %vm706 = vcmask 97344
      %707 = vst.msk [vmem:[#allocation3] sm:$0xff] %vm706, %v611
      %708 = vst.msk [vmem:[#allocation3 + $0x8] sm:$0xff] %vm706, %v613
      %709 = vst.msk [vmem:[#allocation3 + $0x10] sm:$0xff] %vm706, %v615
      %710 = vst.msk [vmem:[#allocation3 + $0x18] sm:$0xff] %vm706, %v617
      %711 = vst.msk [vmem:[#allocation3 + $0x20] sm:$0xff] %vm706, %v619
      %712 = vst.msk [vmem:[#allocation3 + $0x28] sm:$0xff] %vm706, %v621
      %713 = vst.msk [vmem:[#allocation3 + $0x30] sm:$0xff] %vm706, %v623
      %714 = vst.msk [vmem:[#allocation3 + $0x38] sm:$0xff] %vm706, %v625
      %715 = vst.msk [vmem:[#allocation3 + $0x40] sm:$0xff] %vm706, %v627
      %716 = vst.msk [vmem:[#allocation3 + $0x48] sm:$0xff] %vm706, %v629
      %717 = vst.msk [vmem:[#allocation3 + $0x50] sm:$0xff] %vm706, %v631
      %718 = vst.msk [vmem:[#allocation3 + $0x58] sm:$0xff] %vm706, %v633
      %719 = vst.msk [vmem:[#allocation3 + $0x60] sm:$0xff] %vm706, %v635
      %720 = vst.msk [vmem:[#allocation3 + $0x68] sm:$0xff] %vm706, %v637
      %721 = vst.msk [vmem:[#allocation3 + $0x70] sm:$0xff] %vm706, %v639
      %722 = vst.msk [vmem:[#allocation3 + $0x78] sm:$0xff] %vm706, %v641
      %723 = vst.msk [vmem:[#allocation3 + $0x80] sm:$0xff] %vm706, %v643
      %724 = vst.msk [vmem:[#allocation3 + $0x88] sm:$0xff] %vm706, %v645
      %725 = vst.msk [vmem:[#allocation3 + $0x90] sm:$0xff] %vm706, %v647
      %726 = vst.msk [vmem:[#allocation3 + $0x98] sm:$0xff] %vm706, %v649
      %727 = vst.msk [vmem:[#allocation3 + $0xa0] sm:$0xff] %vm706, %v651
      %728 = vst.msk [vmem:[#allocation3 + $0xa8] sm:$0xff] %vm706, %v653
      %729 = vst.msk [vmem:[#allocation3 + $0xb0] sm:$0xff] %vm706, %v655
      %730 = vst.msk [vmem:[#allocation3 + $0xb8] sm:$0xff] %vm706, %v657
      %731 = vst.msk [vmem:[#allocation3 + $0xc0] sm:$0xff] %vm706, %v659
      %732 = vst.msk [vmem:[#allocation3 + $0xc8] sm:$0xff] %vm706, %v661
      %733 = vst.msk [vmem:[#allocation3 + $0xd0] sm:$0xff] %vm706, %v663
      %734 = vst.msk [vmem:[#allocation3 + $0xd8] sm:$0xff] %vm706, %v665
      %735 = vst.msk [vmem:[#allocation3 + $0xe0] sm:$0xff] %vm706, %v667
      %736 = vst.msk [vmem:[#allocation3 + $0xe8] sm:$0xff] %vm706, %v669
      %737 = vst.msk [vmem:[#allocation3 + $0xf0] sm:$0xff] %vm706, %v671
      %738 = vst.msk [vmem:[#allocation3 + $0xf8] sm:$0xff] %vm706, %v673
      %v739 = vld [vmem:[%s214] sm:$0xff]
      %v740 = vld [vmem:[%s214 + $0x8] sm:$0xff]
      %v741 = vld [vmem:[%s214 + $0x18] sm:$0xff]
      %v742 = vld [vmem:[%s214 + $0x20] sm:$0xff]
      %v743 = vld [vmem:[%s214 + $0x30] sm:$0xff]
      %v744 = vld [vmem:[%s214 + $0x38] sm:$0xff]
      %v745 = vld [vmem:[%s214 + $0x48] sm:$0xff]
      %v746 = vld [vmem:[%s214 + $0x50] sm:$0xff]
      %v747 = vld [vmem:[%s214 + $0x60] sm:$0xff]
      %v748 = vld [vmem:[%s214 + $0x68] sm:$0xff]
      %v749 = vld [vmem:[%s214 + $0x78] sm:$0xff]
      %v750 = vld [vmem:[%s214 + $0x80] sm:$0xff]
      %v751 = vld [vmem:[%s214 + $0x90] sm:$0xff]
      %v752 = vld [vmem:[%s214 + $0x98] sm:$0xff]
      %v753 = vld [vmem:[%s214 + $0xa8] sm:$0xff]
      %v754 = vld [vmem:[%s214 + $0xb0] sm:$0xff]
      %v755 = vld [vmem:[%s214 + $0xc0] sm:$0xff]
      %v756 = vld [vmem:[%s214 + $0xc8] sm:$0xff]
      %v757 = vld [vmem:[%s214 + $0xd8] sm:$0xff]
      %v758 = vld [vmem:[%s214 + $0xe0] sm:$0xff]
      %v759 = vld [vmem:[%s214 + $0xf0] sm:$0xff]
      %v760 = vld [vmem:[%s214 + $0xf8] sm:$0xff]
      %v761 = vld [vmem:[%s214 + $0x108] sm:$0xff]
      %v762 = vld [vmem:[%s214 + $0x110] sm:$0xff]
      %v763 = vld [vmem:[%s214 + $0x120] sm:$0xff]
      %v764 = vld [vmem:[%s214 + $0x128] sm:$0xff]
      %v765 = vld [vmem:[%s214 + $0x138] sm:$0xff]
      %v766 = vld [vmem:[%s214 + $0x140] sm:$0xff]
      %v767 = vld [vmem:[%s214 + $0x150] sm:$0xff]
      %v768 = vld [vmem:[%s214 + $0x158] sm:$0xff]
      %v769 = vld [vmem:[%s214 + $0x168] sm:$0xff]
      %v770 = vld [vmem:[%s214 + $0x170] sm:$0xff]
      %803 = vrot.lane.b32.xlu0 %v739, 12
      %v804 = vpop.permute.xlu0 %803
      %805 = vrot.lane.b32.xlu0 %v740, 12
      %v806 = vpop.permute.xlu0 %805
      %807 = vrot.lane.b32.xlu0 %v741, 12
      %v808 = vpop.permute.xlu0 %807
      %809 = vrot.lane.b32.xlu0 %v742, 12
      %v810 = vpop.permute.xlu0 %809
      %811 = vrot.lane.b32.xlu0 %v743, 12
      %v812 = vpop.permute.xlu0 %811
      %813 = vrot.lane.b32.xlu0 %v744, 12
      %v814 = vpop.permute.xlu0 %813
      %815 = vrot.lane.b32.xlu0 %v745, 12
      %v816 = vpop.permute.xlu0 %815
      %817 = vrot.lane.b32.xlu0 %v746, 12
      %v818 = vpop.permute.xlu0 %817
      %819 = vrot.lane.b32.xlu0 %v747, 12
      %v820 = vpop.permute.xlu0 %819
      %821 = vrot.lane.b32.xlu0 %v748, 12
      %v822 = vpop.permute.xlu0 %821
      %823 = vrot.lane.b32.xlu0 %v749, 12
      %v824 = vpop.permute.xlu0 %823
      %825 = vrot.lane.b32.xlu0 %v750, 12
      %v826 = vpop.permute.xlu0 %825
      %827 = vrot.lane.b32.xlu0 %v751, 12
      %v828 = vpop.permute.xlu0 %827
      %829 = vrot.lane.b32.xlu0 %v752, 12
      %v830 = vpop.permute.xlu0 %829
      %831 = vrot.lane.b32.xlu0 %v753, 12
      %v832 = vpop.permute.xlu0 %831
      %833 = vrot.lane.b32.xlu0 %v754, 12
      %v834 = vpop.permute.xlu0 %833
      %835 = vrot.lane.b32.xlu0 %v755, 12
      %v836 = vpop.permute.xlu0 %835
      %837 = vrot.lane.b32.xlu0 %v756, 12
      %v838 = vpop.permute.xlu0 %837
      %839 = vrot.lane.b32.xlu0 %v757, 12
      %v840 = vpop.permute.xlu0 %839
      %841 = vrot.lane.b32.xlu0 %v758, 12
      %v842 = vpop.permute.xlu0 %841
      %843 = vrot.lane.b32.xlu0 %v759, 12
      %v844 = vpop.permute.xlu0 %843
      %845 = vrot.lane.b32.xlu0 %v760, 12
      %v846 = vpop.permute.xlu0 %845
      %847 = vrot.lane.b32.xlu0 %v761, 12
      %v848 = vpop.permute.xlu0 %847
      %849 = vrot.lane.b32.xlu0 %v762, 12
      %v850 = vpop.permute.xlu0 %849
      %851 = vrot.lane.b32.xlu0 %v763, 12
      %v852 = vpop.permute.xlu0 %851
      %853 = vrot.lane.b32.xlu0 %v764, 12
      %v854 = vpop.permute.xlu0 %853
      %855 = vrot.lane.b32.xlu0 %v765, 12
      %v856 = vpop.permute.xlu0 %855
      %857 = vrot.lane.b32.xlu0 %v766, 12
      %v858 = vpop.permute.xlu0 %857
      %859 = vrot.lane.b32.xlu0 %v767, 12
      %v860 = vpop.permute.xlu0 %859
      %861 = vrot.lane.b32.xlu0 %v768, 12
      %v862 = vpop.permute.xlu0 %861
      %863 = vrot.lane.b32.xlu0 %v769, 12
      %v864 = vpop.permute.xlu0 %863
      %865 = vrot.lane.b32.xlu0 %v770, 12
      %v866 = vpop.permute.xlu0 %865
      %vm899 = vcmask 130144
      %900 = vst.msk [vmem:[#allocation3] sm:$0xff] %vm899, %v804
      %901 = vst.msk [vmem:[#allocation3 + $0x8] sm:$0xff] %vm899, %v806
      %902 = vst.msk [vmem:[#allocation3 + $0x10] sm:$0xff] %vm899, %v808
      %903 = vst.msk [vmem:[#allocation3 + $0x18] sm:$0xff] %vm899, %v810
      %904 = vst.msk [vmem:[#allocation3 + $0x20] sm:$0xff] %vm899, %v812
      %905 = vst.msk [vmem:[#allocation3 + $0x28] sm:$0xff] %vm899, %v814
      %906 = vst.msk [vmem:[#allocation3 + $0x30] sm:$0xff] %vm899, %v816
      %907 = vst.msk [vmem:[#allocation3 + $0x38] sm:$0xff] %vm899, %v818
      %908 = vst.msk [vmem:[#allocation3 + $0x40] sm:$0xff] %vm899, %v820
      %909 = vst.msk [vmem:[#allocation3 + $0x48] sm:$0xff] %vm899, %v822
      %910 = vst.msk [vmem:[#allocation3 + $0x50] sm:$0xff] %vm899, %v824
      %911 = vst.msk [vmem:[#allocation3 + $0x58] sm:$0xff] %vm899, %v826
      %912 = vst.msk [vmem:[#allocation3 + $0x60] sm:$0xff] %vm899, %v828
      %913 = vst.msk [vmem:[#allocation3 + $0x68] sm:$0xff] %vm899, %v830
      %914 = vst.msk [vmem:[#allocation3 + $0x70] sm:$0xff] %vm899, %v832
      %915 = vst.msk [vmem:[#allocation3 + $0x78] sm:$0xff] %vm899, %v834
      %916 = vst.msk [vmem:[#allocation3 + $0x80] sm:$0xff] %vm899, %v836
      %917 = vst.msk [vmem:[#allocation3 + $0x88] sm:$0xff] %vm899, %v838
      %918 = vst.msk [vmem:[#allocation3 + $0x90] sm:$0xff] %vm899, %v840
      %919 = vst.msk [vmem:[#allocation3 + $0x98] sm:$0xff] %vm899, %v842
      %920 = vst.msk [vmem:[#allocation3 + $0xa0] sm:$0xff] %vm899, %v844
      %921 = vst.msk [vmem:[#allocation3 + $0xa8] sm:$0xff] %vm899, %v846
      %922 = vst.msk [vmem:[#allocation3 + $0xb0] sm:$0xff] %vm899, %v848
      %923 = vst.msk [vmem:[#allocation3 + $0xb8] sm:$0xff] %vm899, %v850
      %924 = vst.msk [vmem:[#allocation3 + $0xc0] sm:$0xff] %vm899, %v852
      %925 = vst.msk [vmem:[#allocation3 + $0xc8] sm:$0xff] %vm899, %v854
      %926 = vst.msk [vmem:[#allocation3 + $0xd0] sm:$0xff] %vm899, %v856
      %927 = vst.msk [vmem:[#allocation3 + $0xd8] sm:$0xff] %vm899, %v858
      %928 = vst.msk [vmem:[#allocation3 + $0xe0] sm:$0xff] %vm899, %v860
      %929 = vst.msk [vmem:[#allocation3 + $0xe8] sm:$0xff] %vm899, %v862
      %930 = vst.msk [vmem:[#allocation3 + $0xf0] sm:$0xff] %vm899, %v864
      %931 = vst.msk [vmem:[#allocation3 + $0xf8] sm:$0xff] %vm899, %v866
      %v932 = vld [vmem:[%s214 + $0x1] sm:$0xff]
      %v933 = vld [vmem:[%s214 + $0x9] sm:$0xff]
      %v934 = vld [vmem:[%s214 + $0x19] sm:$0xff]
      %v935 = vld [vmem:[%s214 + $0x21] sm:$0xff]
      %v936 = vld [vmem:[%s214 + $0x31] sm:$0xff]
      %v937 = vld [vmem:[%s214 + $0x39] sm:$0xff]
      %v938 = vld [vmem:[%s214 + $0x49] sm:$0xff]
      %v939 = vld [vmem:[%s214 + $0x51] sm:$0xff]
      %v940 = vld [vmem:[%s214 + $0x61] sm:$0xff]
      %v941 = vld [vmem:[%s214 + $0x69] sm:$0xff]
      %v942 = vld [vmem:[%s214 + $0x79] sm:$0xff]
      %v943 = vld [vmem:[%s214 + $0x81] sm:$0xff]
      %v944 = vld [vmem:[%s214 + $0x91] sm:$0xff]
      %v945 = vld [vmem:[%s214 + $0x99] sm:$0xff]
      %v946 = vld [vmem:[%s214 + $0xa9] sm:$0xff]
      %v947 = vld [vmem:[%s214 + $0xb1] sm:$0xff]
      %v948 = vld [vmem:[%s214 + $0xc1] sm:$0xff]
      %v949 = vld [vmem:[%s214 + $0xc9] sm:$0xff]
      %v950 = vld [vmem:[%s214 + $0xd9] sm:$0xff]
      %v951 = vld [vmem:[%s214 + $0xe1] sm:$0xff]
      %v952 = vld [vmem:[%s214 + $0xf1] sm:$0xff]
      %v953 = vld [vmem:[%s214 + $0xf9] sm:$0xff]
      %v954 = vld [vmem:[%s214 + $0x109] sm:$0xff]
      %v955 = vld [vmem:[%s214 + $0x111] sm:$0xff]
      %v956 = vld [vmem:[%s214 + $0x121] sm:$0xff]
      %v957 = vld [vmem:[%s214 + $0x129] sm:$0xff]
      %v958 = vld [vmem:[%s214 + $0x139] sm:$0xff]
      %v959 = vld [vmem:[%s214 + $0x141] sm:$0xff]
      %v960 = vld [vmem:[%s214 + $0x151] sm:$0xff]
      %v961 = vld [vmem:[%s214 + $0x159] sm:$0xff]
      %v962 = vld [vmem:[%s214 + $0x169] sm:$0xff]
      %v963 = vld [vmem:[%s214 + $0x171] sm:$0xff]
      %996 = vrot.lane.b32.xlu0 %v932, 16
      %v997 = vpop.permute.xlu0 %996
      %998 = vrot.lane.b32.xlu0 %v933, 16
      %v999 = vpop.permute.xlu0 %998
      %1000 = vrot.lane.b32.xlu0 %v934, 16
      %v1001 = vpop.permute.xlu0 %1000
      %1002 = vrot.lane.b32.xlu0 %v935, 16
      %v1003 = vpop.permute.xlu0 %1002
      %1004 = vrot.lane.b32.xlu0 %v936, 16
      %v1005 = vpop.permute.xlu0 %1004
      %1006 = vrot.lane.b32.xlu0 %v937, 16
      %v1007 = vpop.permute.xlu0 %1006
      %1008 = vrot.lane.b32.xlu0 %v938, 16
      %v1009 = vpop.permute.xlu0 %1008
      %1010 = vrot.lane.b32.xlu0 %v939, 16
      %v1011 = vpop.permute.xlu0 %1010
      %1012 = vrot.lane.b32.xlu0 %v940, 16
      %v1013 = vpop.permute.xlu0 %1012
      %1014 = vrot.lane.b32.xlu0 %v941, 16
      %v1015 = vpop.permute.xlu0 %1014
      %1016 = vrot.lane.b32.xlu0 %v942, 16
      %v1017 = vpop.permute.xlu0 %1016
      %1018 = vrot.lane.b32.xlu0 %v943, 16
      %v1019 = vpop.permute.xlu0 %1018
      %1020 = vrot.lane.b32.xlu0 %v944, 16
      %v1021 = vpop.permute.xlu0 %1020
      %1022 = vrot.lane.b32.xlu0 %v945, 16
      %v1023 = vpop.permute.xlu0 %1022
      %1024 = vrot.lane.b32.xlu0 %v946, 16
      %v1025 = vpop.permute.xlu0 %1024
      %1026 = vrot.lane.b32.xlu0 %v947, 16
      %v1027 = vpop.permute.xlu0 %1026
      %1028 = vrot.lane.b32.xlu0 %v948, 16
      %v1029 = vpop.permute.xlu0 %1028
      %1030 = vrot.lane.b32.xlu0 %v949, 16
      %v1031 = vpop.permute.xlu0 %1030
      %1032 = vrot.lane.b32.xlu0 %v950, 16
      %v1033 = vpop.permute.xlu0 %1032
      %1034 = vrot.lane.b32.xlu0 %v951, 16
      %v1035 = vpop.permute.xlu0 %1034
      %1036 = vrot.lane.b32.xlu0 %v952, 16
      %v1037 = vpop.permute.xlu0 %1036
      %1038 = vrot.lane.b32.xlu0 %v953, 16
      %v1039 = vpop.permute.xlu0 %1038
      %1040 = vrot.lane.b32.xlu0 %v954, 16
      %v1041 = vpop.permute.xlu0 %1040
      %1042 = vrot.lane.b32.xlu0 %v955, 16
      %v1043 = vpop.permute.xlu0 %1042
      %1044 = vrot.lane.b32.xlu0 %v956, 16
      %v1045 = vpop.permute.xlu0 %1044
      %1046 = vrot.lane.b32.xlu0 %v957, 16
      %v1047 = vpop.permute.xlu0 %1046
      %1048 = vrot.lane.b32.xlu0 %v958, 16
      %v1049 = vpop.permute.xlu0 %1048
      %1050 = vrot.lane.b32.xlu0 %v959, 16
      %v1051 = vpop.permute.xlu0 %1050
      %1052 = vrot.lane.b32.xlu0 %v960, 16
      %v1053 = vpop.permute.xlu0 %1052
      %1054 = vrot.lane.b32.xlu0 %v961, 16
      %v1055 = vpop.permute.xlu0 %1054
      %1056 = vrot.lane.b32.xlu0 %v962, 16
      %v1057 = vpop.permute.xlu0 %1056
      %1058 = vrot.lane.b32.xlu0 %v963, 16
      %v1059 = vpop.permute.xlu0 %1058
      %vm1092 = vcmask 162944
      %1093 = vst.msk [vmem:[#allocation3] sm:$0xff] %vm1092, %v997
      %1094 = vst.msk [vmem:[#allocation3 + $0x8] sm:$0xff] %vm1092, %v999
      %1095 = vst.msk [vmem:[#allocation3 + $0x10] sm:$0xff] %vm1092, %v1001
      %1096 = vst.msk [vmem:[#allocation3 + $0x18] sm:$0xff] %vm1092, %v1003
      %1097 = vst.msk [vmem:[#allocation3 + $0x20] sm:$0xff] %vm1092, %v1005
      %1098 = vst.msk [vmem:[#allocation3 + $0x28] sm:$0xff] %vm1092, %v1007
      %1099 = vst.msk [vmem:[#allocation3 + $0x30] sm:$0xff] %vm1092, %v1009
      %1100 = vst.msk [vmem:[#allocation3 + $0x38] sm:$0xff] %vm1092, %v1011
      %1101 = vst.msk [vmem:[#allocation3 + $0x40] sm:$0xff] %vm1092, %v1013
      %1102 = vst.msk [vmem:[#allocation3 + $0x48] sm:$0xff] %vm1092, %v1015
      %1103 = vst.msk [vmem:[#allocation3 + $0x50] sm:$0xff] %vm1092, %v1017
      %1104 = vst.msk [vmem:[#allocation3 + $0x58] sm:$0xff] %vm1092, %v1019
      %1105 = vst.msk [vmem:[#allocation3 + $0x60] sm:$0xff] %vm1092, %v1021
      %1106 = vst.msk [vmem:[#allocation3 + $0x68] sm:$0xff] %vm1092, %v1023
      %1107 = vst.msk [vmem:[#allocation3 + $0x70] sm:$0xff] %vm1092, %v1025
      %1108 = vst.msk [vmem:[#allocation3 + $0x78] sm:$0xff] %vm1092, %v1027
      %1109 = vst.msk [vmem:[#allocation3 + $0x80] sm:$0xff] %vm1092, %v1029
      %1110 = vst.msk [vmem:[#allocation3 + $0x88] sm:$0xff] %vm1092, %v1031
      %1111 = vst.msk [vmem:[#allocation3 + $0x90] sm:$0xff] %vm1092, %v1033
      %1112 = vst.msk [vmem:[#allocation3 + $0x98] sm:$0xff] %vm1092, %v1035
      %1113 = vst.msk [vmem:[#allocation3 + $0xa0] sm:$0xff] %vm1092, %v1037
      %1114 = vst.msk [vmem:[#allocation3 + $0xa8] sm:$0xff] %vm1092, %v1039
      %1115 = vst.msk [vmem:[#allocation3 + $0xb0] sm:$0xff] %vm1092, %v1041
      %1116 = vst.msk [vmem:[#allocation3 + $0xb8] sm:$0xff] %vm1092, %v1043
      %1117 = vst.msk [vmem:[#allocation3 + $0xc0] sm:$0xff] %vm1092, %v1045
      %1118 = vst.msk [vmem:[#allocation3 + $0xc8] sm:$0xff] %vm1092, %v1047
      %1119 = vst.msk [vmem:[#allocation3 + $0xd0] sm:$0xff] %vm1092, %v1049
      %1120 = vst.msk [vmem:[#allocation3 + $0xd8] sm:$0xff] %vm1092, %v1051
      %1121 = vst.msk [vmem:[#allocation3 + $0xe0] sm:$0xff] %vm1092, %v1053
      %1122 = vst.msk [vmem:[#allocation3 + $0xe8] sm:$0xff] %vm1092, %v1055
      %1123 = vst.msk [vmem:[#allocation3 + $0xf0] sm:$0xff] %vm1092, %v1057
      %1124 = vst.msk [vmem:[#allocation3 + $0xf8] sm:$0xff] %vm1092, %v1059
      %v1125 = vld [vmem:[%s214 + $0x2] sm:$0xff]
      %v1126 = vld [vmem:[%s214 + $0xa] sm:$0xff]
      %v1127 = vld [vmem:[%s214 + $0x1a] sm:$0xff]
      %v1128 = vld [vmem:[%s214 + $0x22] sm:$0xff]
      %v1129 = vld [vmem:[%s214 + $0x32] sm:$0xff]
      %v1130 = vld [vmem:[%s214 + $0x3a] sm:$0xff]
      %v1131 = vld [vmem:[%s214 + $0x4a] sm:$0xff]
      %v1132 = vld [vmem:[%s214 + $0x52] sm:$0xff]
      %v1133 = vld [vmem:[%s214 + $0x62] sm:$0xff]
      %v1134 = vld [vmem:[%s214 + $0x6a] sm:$0xff]
      %v1135 = vld [vmem:[%s214 + $0x7a] sm:$0xff]
      %v1136 = vld [vmem:[%s214 + $0x82] sm:$0xff]
      %v1137 = vld [vmem:[%s214 + $0x92] sm:$0xff]
      %v1138 = vld [vmem:[%s214 + $0x9a] sm:$0xff]
      %v1139 = vld [vmem:[%s214 + $0xaa] sm:$0xff]
      %v1140 = vld [vmem:[%s214 + $0xb2] sm:$0xff]
      %v1141 = vld [vmem:[%s214 + $0xc2] sm:$0xff]
      %v1142 = vld [vmem:[%s214 + $0xca] sm:$0xff]
      %v1143 = vld [vmem:[%s214 + $0xda] sm:$0xff]
      %v1144 = vld [vmem:[%s214 + $0xe2] sm:$0xff]
      %v1145 = vld [vmem:[%s214 + $0xf2] sm:$0xff]
      %v1146 = vld [vmem:[%s214 + $0xfa] sm:$0xff]
      %v1147 = vld [vmem:[%s214 + $0x10a] sm:$0xff]
      %v1148 = vld [vmem:[%s214 + $0x112] sm:$0xff]
      %v1149 = vld [vmem:[%s214 + $0x122] sm:$0xff]
      %v1150 = vld [vmem:[%s214 + $0x12a] sm:$0xff]
      %v1151 = vld [vmem:[%s214 + $0x13a] sm:$0xff]
      %v1152 = vld [vmem:[%s214 + $0x142] sm:$0xff]
      %v1153 = vld [vmem:[%s214 + $0x152] sm:$0xff]
      %v1154 = vld [vmem:[%s214 + $0x15a] sm:$0xff]
      %v1155 = vld [vmem:[%s214 + $0x16a] sm:$0xff]
      %v1156 = vld [vmem:[%s214 + $0x172] sm:$0xff]
      %1189 = vrot.lane.b32.xlu0 %v1125, 20
      %v1190 = vpop.permute.xlu0 %1189
      %1191 = vrot.lane.b32.xlu0 %v1126, 20
      %v1192 = vpop.permute.xlu0 %1191
      %1193 = vrot.lane.b32.xlu0 %v1127, 20
      %v1194 = vpop.permute.xlu0 %1193
      %1195 = vrot.lane.b32.xlu0 %v1128, 20
      %v1196 = vpop.permute.xlu0 %1195
      %1197 = vrot.lane.b32.xlu0 %v1129, 20
      %v1198 = vpop.permute.xlu0 %1197
      %1199 = vrot.lane.b32.xlu0 %v1130, 20
      %v1200 = vpop.permute.xlu0 %1199
      %1201 = vrot.lane.b32.xlu0 %v1131, 20
      %v1202 = vpop.permute.xlu0 %1201
      %1203 = vrot.lane.b32.xlu0 %v1132, 20
      %v1204 = vpop.permute.xlu0 %1203
      %1205 = vrot.lane.b32.xlu0 %v1133, 20
      %v1206 = vpop.permute.xlu0 %1205
      %1207 = vrot.lane.b32.xlu0 %v1134, 20
      %v1208 = vpop.permute.xlu0 %1207
      %1209 = vrot.lane.b32.xlu0 %v1135, 20
      %v1210 = vpop.permute.xlu0 %1209
      %1211 = vrot.lane.b32.xlu0 %v1136, 20
      %v1212 = vpop.permute.xlu0 %1211
      %1213 = vrot.lane.b32.xlu0 %v1137, 20
      %v1214 = vpop.permute.xlu0 %1213
      %1215 = vrot.lane.b32.xlu0 %v1138, 20
      %v1216 = vpop.permute.xlu0 %1215
      %1217 = vrot.lane.b32.xlu0 %v1139, 20
      %v1218 = vpop.permute.xlu0 %1217
      %1219 = vrot.lane.b32.xlu0 %v1140, 20
      %v1220 = vpop.permute.xlu0 %1219
      %1221 = vrot.lane.b32.xlu0 %v1141, 20
      %v1222 = vpop.permute.xlu0 %1221
      %1223 = vrot.lane.b32.xlu0 %v1142, 20
      %v1224 = vpop.permute.xlu0 %1223
      %1225 = vrot.lane.b32.xlu0 %v1143, 20
      %v1226 = vpop.permute.xlu0 %1225
      %1227 = vrot.lane.b32.xlu0 %v1144, 20
      %v1228 = vpop.permute.xlu0 %1227
      %1229 = vrot.lane.b32.xlu0 %v1145, 20
      %v1230 = vpop.permute.xlu0 %1229
      %1231 = vrot.lane.b32.xlu0 %v1146, 20
      %v1232 = vpop.permute.xlu0 %1231
      %1233 = vrot.lane.b32.xlu0 %v1147, 20
      %v1234 = vpop.permute.xlu0 %1233
      %1235 = vrot.lane.b32.xlu0 %v1148, 20
      %v1236 = vpop.permute.xlu0 %1235
      %1237 = vrot.lane.b32.xlu0 %v1149, 20
      %v1238 = vpop.permute.xlu0 %1237
      %1239 = vrot.lane.b32.xlu0 %v1150, 20
      %v1240 = vpop.permute.xlu0 %1239
      %1241 = vrot.lane.b32.xlu0 %v1151, 20
      %v1242 = vpop.permute.xlu0 %1241
      %1243 = vrot.lane.b32.xlu0 %v1152, 20
      %v1244 = vpop.permute.xlu0 %1243
      %1245 = vrot.lane.b32.xlu0 %v1153, 20
      %v1246 = vpop.permute.xlu0 %1245
      %1247 = vrot.lane.b32.xlu0 %v1154, 20
      %v1248 = vpop.permute.xlu0 %1247
      %1249 = vrot.lane.b32.xlu0 %v1155, 20
      %v1250 = vpop.permute.xlu0 %1249
      %1251 = vrot.lane.b32.xlu0 %v1156, 20
      %v1252 = vpop.permute.xlu0 %1251
      %vm1285 = vcmask 195744
      %1286 = vst.msk [vmem:[#allocation3] sm:$0xff] %vm1285, %v1190
      %1287 = vst.msk [vmem:[#allocation3 + $0x8] sm:$0xff] %vm1285, %v1192
      %1288 = vst.msk [vmem:[#allocation3 + $0x10] sm:$0xff] %vm1285, %v1194
      %1289 = vst.msk [vmem:[#allocation3 + $0x18] sm:$0xff] %vm1285, %v1196
      %1290 = vst.msk [vmem:[#allocation3 + $0x20] sm:$0xff] %vm1285, %v1198
      %1291 = vst.msk [vmem:[#allocation3 + $0x28] sm:$0xff] %vm1285, %v1200
      %1292 = vst.msk [vmem:[#allocation3 + $0x30] sm:$0xff] %vm1285, %v1202
      %1293 = vst.msk [vmem:[#allocation3 + $0x38] sm:$0xff] %vm1285, %v1204
      %1294 = vst.msk [vmem:[#allocation3 + $0x40] sm:$0xff] %vm1285, %v1206
      %1295 = vst.msk [vmem:[#allocation3 + $0x48] sm:$0xff] %vm1285, %v1208
      %1296 = vst.msk [vmem:[#allocation3 + $0x50] sm:$0xff] %vm1285, %v1210
      %1297 = vst.msk [vmem:[#allocation3 + $0x58] sm:$0xff] %vm1285, %v1212
      %1298 = vst.msk [vmem:[#allocation3 + $0x60] sm:$0xff] %vm1285, %v1214
      %1299 = vst.msk [vmem:[#allocation3 + $0x68] sm:$0xff] %vm1285, %v1216
      %1300 = vst.msk [vmem:[#allocation3 + $0x70] sm:$0xff] %vm1285, %v1218
      %1301 = vst.msk [vmem:[#allocation3 + $0x78] sm:$0xff] %vm1285, %v1220
      %1302 = vst.msk [vmem:[#allocation3 + $0x80] sm:$0xff] %vm1285, %v1222
      %1303 = vst.msk [vmem:[#allocation3 + $0x88] sm:$0xff] %vm1285, %v1224
      %1304 = vst.msk [vmem:[#allocation3 + $0x90] sm:$0xff] %vm1285, %v1226
      %1305 = vst.msk [vmem:[#allocation3 + $0x98] sm:$0xff] %vm1285, %v1228
      %1306 = vst.msk [vmem:[#allocation3 + $0xa0] sm:$0xff] %vm1285, %v1230
      %1307 = vst.msk [vmem:[#allocation3 + $0xa8] sm:$0xff] %vm1285, %v1232
      %1308 = vst.msk [vmem:[#allocation3 + $0xb0] sm:$0xff] %vm1285, %v1234
      %1309 = vst.msk [vmem:[#allocation3 + $0xb8] sm:$0xff] %vm1285, %v1236
      %1310 = vst.msk [vmem:[#allocation3 + $0xc0] sm:$0xff] %vm1285, %v1238
      %1311 = vst.msk [vmem:[#allocation3 + $0xc8] sm:$0xff] %vm1285, %v1240
      %1312 = vst.msk [vmem:[#allocation3 + $0xd0] sm:$0xff] %vm1285, %v1242
      %1313 = vst.msk [vmem:[#allocation3 + $0xd8] sm:$0xff] %vm1285, %v1244
      %1314 = vst.msk [vmem:[#allocation3 + $0xe0] sm:$0xff] %vm1285, %v1246
      %1315 = vst.msk [vmem:[#allocation3 + $0xe8] sm:$0xff] %vm1285, %v1248
      %1316 = vst.msk [vmem:[#allocation3 + $0xf0] sm:$0xff] %vm1285, %v1250
      %1317 = vst.msk [vmem:[#allocation3 + $0xf8] sm:$0xff] %vm1285, %v1252
      %s1318 = scalar_lea.vmem [#allocation2], 48
      %v1319 = vld [vmem:[%s1318] sm:$0xff]
      %v1320 = vld [vmem:[%s1318 + $0x8] sm:$0xff]
      %v1321 = vld [vmem:[%s1318 + $0x18] sm:$0xff]
      %v1322 = vld [vmem:[%s1318 + $0x20] sm:$0xff]
      %v1323 = vld [vmem:[%s1318 + $0x30] sm:$0xff]
      %v1324 = vld [vmem:[%s1318 + $0x38] sm:$0xff]
      %v1325 = vld [vmem:[%s1318 + $0x48] sm:$0xff]
      %v1326 = vld [vmem:[%s1318 + $0x50] sm:$0xff]
      %v1327 = vld [vmem:[%s1318 + $0x60] sm:$0xff]
      %v1328 = vld [vmem:[%s1318 + $0x68] sm:$0xff]
      %v1329 = vld [vmem:[%s1318 + $0x78] sm:$0xff]
      %v1330 = vld [vmem:[%s1318 + $0x80] sm:$0xff]
      %v1331 = vld [vmem:[%s1318 + $0x90] sm:$0xff]
      %v1332 = vld [vmem:[%s1318 + $0x98] sm:$0xff]
      %v1333 = vld [vmem:[%s1318 + $0xa8] sm:$0xff]
      %v1334 = vld [vmem:[%s1318 + $0xb0] sm:$0xff]
      %v1335 = vld [vmem:[%s1318 + $0xc0] sm:$0xff]
      %v1336 = vld [vmem:[%s1318 + $0xc8] sm:$0xff]
      %v1337 = vld [vmem:[%s1318 + $0xd8] sm:$0xff]
      %v1338 = vld [vmem:[%s1318 + $0xe0] sm:$0xff]
      %v1339 = vld [vmem:[%s1318 + $0xf0] sm:$0xff]
      %v1340 = vld [vmem:[%s1318 + $0xf8] sm:$0xff]
      %v1341 = vld [vmem:[%s1318 + $0x108] sm:$0xff]
      %v1342 = vld [vmem:[%s1318 + $0x110] sm:$0xff]
      %v1343 = vld [vmem:[%s1318 + $0x120] sm:$0xff]
      %v1344 = vld [vmem:[%s1318 + $0x128] sm:$0xff]
      %v1345 = vld [vmem:[%s1318 + $0x138] sm:$0xff]
      %v1346 = vld [vmem:[%s1318 + $0x140] sm:$0xff]
      %v1347 = vld [vmem:[%s1318 + $0x150] sm:$0xff]
      %v1348 = vld [vmem:[%s1318 + $0x158] sm:$0xff]
      %v1349 = vld [vmem:[%s1318 + $0x168] sm:$0xff]
      %v1350 = vld [vmem:[%s1318 + $0x170] sm:$0xff]
      %1383 = vrot.lane.b32.xlu0 %v1319, 24
      %v1384 = vpop.permute.xlu0 %1383
      %1385 = vrot.lane.b32.xlu0 %v1320, 24
      %v1386 = vpop.permute.xlu0 %1385
      %1387 = vrot.lane.b32.xlu0 %v1321, 24
      %v1388 = vpop.permute.xlu0 %1387
      %1389 = vrot.lane.b32.xlu0 %v1322, 24
      %v1390 = vpop.permute.xlu0 %1389
      %1391 = vrot.lane.b32.xlu0 %v1323, 24
      %v1392 = vpop.permute.xlu0 %1391
      %1393 = vrot.lane.b32.xlu0 %v1324, 24
      %v1394 = vpop.permute.xlu0 %1393
      %1395 = vrot.lane.b32.xlu0 %v1325, 24
      %v1396 = vpop.permute.xlu0 %1395
      %1397 = vrot.lane.b32.xlu0 %v1326, 24
      %v1398 = vpop.permute.xlu0 %1397
      %1399 = vrot.lane.b32.xlu0 %v1327, 24
      %v1400 = vpop.permute.xlu0 %1399
      %1401 = vrot.lane.b32.xlu0 %v1328, 24
      %v1402 = vpop.permute.xlu0 %1401
      %1403 = vrot.lane.b32.xlu0 %v1329, 24
      %v1404 = vpop.permute.xlu0 %1403
      %1405 = vrot.lane.b32.xlu0 %v1330, 24
      %v1406 = vpop.permute.xlu0 %1405
      %1407 = vrot.lane.b32.xlu0 %v1331, 24
      %v1408 = vpop.permute.xlu0 %1407
      %1409 = vrot.lane.b32.xlu0 %v1332, 24
      %v1410 = vpop.permute.xlu0 %1409
      %1411 = vrot.lane.b32.xlu0 %v1333, 24
      %v1412 = vpop.permute.xlu0 %1411
      %1413 = vrot.lane.b32.xlu0 %v1334, 24
      %v1414 = vpop.permute.xlu0 %1413
      %1415 = vrot.lane.b32.xlu0 %v1335, 24
      %v1416 = vpop.permute.xlu0 %1415
      %1417 = vrot.lane.b32.xlu0 %v1336, 24
      %v1418 = vpop.permute.xlu0 %1417
      %1419 = vrot.lane.b32.xlu0 %v1337, 24
      %v1420 = vpop.permute.xlu0 %1419
      %1421 = vrot.lane.b32.xlu0 %v1338, 24
      %v1422 = vpop.permute.xlu0 %1421
      %1423 = vrot.lane.b32.xlu0 %v1339, 24
      %v1424 = vpop.permute.xlu0 %1423
      %1425 = vrot.lane.b32.xlu0 %v1340, 24
      %v1426 = vpop.permute.xlu0 %1425
      %1427 = vrot.lane.b32.xlu0 %v1341, 24
      %v1428 = vpop.permute.xlu0 %1427
      %1429 = vrot.lane.b32.xlu0 %v1342, 24
      %v1430 = vpop.permute.xlu0 %1429
      %1431 = vrot.lane.b32.xlu0 %v1343, 24
      %v1432 = vpop.permute.xlu0 %1431
      %1433 = vrot.lane.b32.xlu0 %v1344, 24
      %v1434 = vpop.permute.xlu0 %1433
      %1435 = vrot.lane.b32.xlu0 %v1345, 24
      %v1436 = vpop.permute.xlu0 %1435
      %1437 = vrot.lane.b32.xlu0 %v1346, 24
      %v1438 = vpop.permute.xlu0 %1437
      %1439 = vrot.lane.b32.xlu0 %v1347, 24
      %v1440 = vpop.permute.xlu0 %1439
      %1441 = vrot.lane.b32.xlu0 %v1348, 24
      %v1442 = vpop.permute.xlu0 %1441
      %1443 = vrot.lane.b32.xlu0 %v1349, 24
      %v1444 = vpop.permute.xlu0 %1443
      %1445 = vrot.lane.b32.xlu0 %v1350, 24
      %v1446 = vpop.permute.xlu0 %1445
      %vm1479 = vcmask 228544
      %1480 = vst.msk [vmem:[#allocation3] sm:$0xff] %vm1479, %v1384
      %1481 = vst.msk [vmem:[#allocation3 + $0x8] sm:$0xff] %vm1479, %v1386
      %1482 = vst.msk [vmem:[#allocation3 + $0x10] sm:$0xff] %vm1479, %v1388
      %1483 = vst.msk [vmem:[#allocation3 + $0x18] sm:$0xff] %vm1479, %v1390
      %1484 = vst.msk [vmem:[#allocation3 + $0x20] sm:$0xff] %vm1479, %v1392
      %1485 = vst.msk [vmem:[#allocation3 + $0x28] sm:$0xff] %vm1479, %v1394
      %1486 = vst.msk [vmem:[#allocation3 + $0x30] sm:$0xff] %vm1479, %v1396
      %1487 = vst.msk [vmem:[#allocation3 + $0x38] sm:$0xff] %vm1479, %v1398
      %1488 = vst.msk [vmem:[#allocation3 + $0x40] sm:$0xff] %vm1479, %v1400
      %1489 = vst.msk [vmem:[#allocation3 + $0x48] sm:$0xff] %vm1479, %v1402
      %1490 = vst.msk [vmem:[#allocation3 + $0x50] sm:$0xff] %vm1479, %v1404
      %1491 = vst.msk [vmem:[#allocation3 + $0x58] sm:$0xff] %vm1479, %v1406
      %1492 = vst.msk [vmem:[#allocation3 + $0x60] sm:$0xff] %vm1479, %v1408
      %1493 = vst.msk [vmem:[#allocation3 + $0x68] sm:$0xff] %vm1479, %v1410
      %1494 = vst.msk [vmem:[#allocation3 + $0x70] sm:$0xff] %vm1479, %v1412
      %1495 = vst.msk [vmem:[#allocation3 + $0x78] sm:$0xff] %vm1479, %v1414
      %1496 = vst.msk [vmem:[#allocation3 + $0x80] sm:$0xff] %vm1479, %v1416
      %1497 = vst.msk [vmem:[#allocation3 + $0x88] sm:$0xff] %vm1479, %v1418
      %1498 = vst.msk [vmem:[#allocation3 + $0x90] sm:$0xff] %vm1479, %v1420
      %1499 = vst.msk [vmem:[#allocation3 + $0x98] sm:$0xff] %vm1479, %v1422
      %1500 = vst.msk [vmem:[#allocation3 + $0xa0] sm:$0xff] %vm1479, %v1424
      %1501 = vst.msk [vmem:[#allocation3 + $0xa8] sm:$0xff] %vm1479, %v1426
      %1502 = vst.msk [vmem:[#allocation3 + $0xb0] sm:$0xff] %vm1479, %v1428
      %1503 = vst.msk [vmem:[#allocation3 + $0xb8] sm:$0xff] %vm1479, %v1430
      %1504 = vst.msk [vmem:[#allocation3 + $0xc0] sm:$0xff] %vm1479, %v1432
      %1505 = vst.msk [vmem:[#allocation3 + $0xc8] sm:$0xff] %vm1479, %v1434
      %1506 = vst.msk [vmem:[#allocation3 + $0xd0] sm:$0xff] %vm1479, %v1436
      %1507 = vst.msk [vmem:[#allocation3 + $0xd8] sm:$0xff] %vm1479, %v1438
      %1508 = vst.msk [vmem:[#allocation3 + $0xe0] sm:$0xff] %vm1479, %v1440
      %1509 = vst.msk [vmem:[#allocation3 + $0xe8] sm:$0xff] %vm1479, %v1442
      %1510 = vst.msk [vmem:[#allocation3 + $0xf0] sm:$0xff] %vm1479, %v1444
      %1511 = vst.msk [vmem:[#allocation3 + $0xf8] sm:$0xff] %vm1479, %v1446
      %v1512 = vld [vmem:[%s1318 + $0x1] sm:$0xff]
      %v1513 = vld [vmem:[%s1318 + $0x9] sm:$0xff]
      %v1514 = vld [vmem:[%s1318 + $0x19] sm:$0xff]
      %v1515 = vld [vmem:[%s1318 + $0x21] sm:$0xff]
      %v1516 = vld [vmem:[%s1318 + $0x31] sm:$0xff]
      %v1517 = vld [vmem:[%s1318 + $0x39] sm:$0xff]
      %v1518 = vld [vmem:[%s1318 + $0x49] sm:$0xff]
      %v1519 = vld [vmem:[%s1318 + $0x51] sm:$0xff]
      %v1520 = vld [vmem:[%s1318 + $0x61] sm:$0xff]
      %v1521 = vld [vmem:[%s1318 + $0x69] sm:$0xff]
      %v1522 = vld [vmem:[%s1318 + $0x79] sm:$0xff]
      %v1523 = vld [vmem:[%s1318 + $0x81] sm:$0xff]
      %v1524 = vld [vmem:[%s1318 + $0x91] sm:$0xff]
      %v1525 = vld [vmem:[%s1318 + $0x99] sm:$0xff]
      %v1526 = vld [vmem:[%s1318 + $0xa9] sm:$0xff]
      %v1527 = vld [vmem:[%s1318 + $0xb1] sm:$0xff]
      %v1528 = vld [vmem:[%s1318 + $0xc1] sm:$0xff]
      %v1529 = vld [vmem:[%s1318 + $0xc9] sm:$0xff]
      %v1530 = vld [vmem:[%s1318 + $0xd9] sm:$0xff]
      %v1531 = vld [vmem:[%s1318 + $0xe1] sm:$0xff]
      %v1532 = vld [vmem:[%s1318 + $0xf1] sm:$0xff]
      %v1533 = vld [vmem:[%s1318 + $0xf9] sm:$0xff]
      %v1534 = vld [vmem:[%s1318 + $0x109] sm:$0xff]
      %v1535 = vld [vmem:[%s1318 + $0x111] sm:$0xff]
      %v1536 = vld [vmem:[%s1318 + $0x121] sm:$0xff]
      %v1537 = vld [vmem:[%s1318 + $0x129] sm:$0xff]
      %v1538 = vld [vmem:[%s1318 + $0x139] sm:$0xff]
      %v1539 = vld [vmem:[%s1318 + $0x141] sm:$0xff]
      %v1540 = vld [vmem:[%s1318 + $0x151] sm:$0xff]
      %v1541 = vld [vmem:[%s1318 + $0x159] sm:$0xff]
      %v1542 = vld [vmem:[%s1318 + $0x169] sm:$0xff]
      %v1543 = vld [vmem:[%s1318 + $0x171] sm:$0xff]
      %1576 = vrot.lane.b32.xlu0 %v1512, 28
      %v1577 = vpop.permute.xlu0 %1576
      %1578 = vrot.lane.b32.xlu0 %v1513, 28
      %v1579 = vpop.permute.xlu0 %1578
      %1580 = vrot.lane.b32.xlu0 %v1514, 28
      %v1581 = vpop.permute.xlu0 %1580
      %1582 = vrot.lane.b32.xlu0 %v1515, 28
      %v1583 = vpop.permute.xlu0 %1582
      %1584 = vrot.lane.b32.xlu0 %v1516, 28
      %v1585 = vpop.permute.xlu0 %1584
      %1586 = vrot.lane.b32.xlu0 %v1517, 28
      %v1587 = vpop.permute.xlu0 %1586
      %1588 = vrot.lane.b32.xlu0 %v1518, 28
      %v1589 = vpop.permute.xlu0 %1588
      %1590 = vrot.lane.b32.xlu0 %v1519, 28
      %v1591 = vpop.permute.xlu0 %1590
      %1592 = vrot.lane.b32.xlu0 %v1520, 28
      %v1593 = vpop.permute.xlu0 %1592
      %1594 = vrot.lane.b32.xlu0 %v1521, 28
      %v1595 = vpop.permute.xlu0 %1594
      %1596 = vrot.lane.b32.xlu0 %v1522, 28
      %v1597 = vpop.permute.xlu0 %1596
      %1598 = vrot.lane.b32.xlu0 %v1523, 28
      %v1599 = vpop.permute.xlu0 %1598
      %1600 = vrot.lane.b32.xlu0 %v1524, 28
      %v1601 = vpop.permute.xlu0 %1600
      %1602 = vrot.lane.b32.xlu0 %v1525, 28
      %v1603 = vpop.permute.xlu0 %1602
      %1604 = vrot.lane.b32.xlu0 %v1526, 28
      %v1605 = vpop.permute.xlu0 %1604
      %1606 = vrot.lane.b32.xlu0 %v1527, 28
      %v1607 = vpop.permute.xlu0 %1606
      %1608 = vrot.lane.b32.xlu0 %v1528, 28
      %v1609 = vpop.permute.xlu0 %1608
      %1610 = vrot.lane.b32.xlu0 %v1529, 28
      %v1611 = vpop.permute.xlu0 %1610
      %1612 = vrot.lane.b32.xlu0 %v1530, 28
      %v1613 = vpop.permute.xlu0 %1612
      %1614 = vrot.lane.b32.xlu0 %v1531, 28
      %v1615 = vpop.permute.xlu0 %1614
      %1616 = vrot.lane.b32.xlu0 %v1532, 28
      %v1617 = vpop.permute.xlu0 %1616
      %1618 = vrot.lane.b32.xlu0 %v1533, 28
      %v1619 = vpop.permute.xlu0 %1618
      %1620 = vrot.lane.b32.xlu0 %v1534, 28
      %v1621 = vpop.permute.xlu0 %1620
      %1622 = vrot.lane.b32.xlu0 %v1535, 28
      %v1623 = vpop.permute.xlu0 %1622
      %1624 = vrot.lane.b32.xlu0 %v1536, 28
      %v1625 = vpop.permute.xlu0 %1624
      %1626 = vrot.lane.b32.xlu0 %v1537, 28
      %v1627 = vpop.permute.xlu0 %1626
      %1628 = vrot.lane.b32.xlu0 %v1538, 28
      %v1629 = vpop.permute.xlu0 %1628
      %1630 = vrot.lane.b32.xlu0 %v1539, 28
      %v1631 = vpop.permute.xlu0 %1630
      %1632 = vrot.lane.b32.xlu0 %v1540, 28
      %v1633 = vpop.permute.xlu0 %1632
      %1634 = vrot.lane.b32.xlu0 %v1541, 28
      %v1635 = vpop.permute.xlu0 %1634
      %1636 = vrot.lane.b32.xlu0 %v1542, 28
      %v1637 = vpop.permute.xlu0 %1636
      %1638 = vrot.lane.b32.xlu0 %v1543, 28
      %v1639 = vpop.permute.xlu0 %1638
      %vm1672 = vcmask 261344
      %1673 = vst.msk [vmem:[#allocation3] sm:$0xff] %vm1672, %v1577
      %1674 = vst.msk [vmem:[#allocation3 + $0x8] sm:$0xff] %vm1672, %v1579
      %1675 = vst.msk [vmem:[#allocation3 + $0x10] sm:$0xff] %vm1672, %v1581
      %1676 = vst.msk [vmem:[#allocation3 + $0x18] sm:$0xff] %vm1672, %v1583
      %1677 = vst.msk [vmem:[#allocation3 + $0x20] sm:$0xff] %vm1672, %v1585
      %1678 = vst.msk [vmem:[#allocation3 + $0x28] sm:$0xff] %vm1672, %v1587
      %1679 = vst.msk [vmem:[#allocation3 + $0x30] sm:$0xff] %vm1672, %v1589
      %1680 = vst.msk [vmem:[#allocation3 + $0x38] sm:$0xff] %vm1672, %v1591
      %1681 = vst.msk [vmem:[#allocation3 + $0x40] sm:$0xff] %vm1672, %v1593
      %1682 = vst.msk [vmem:[#allocation3 + $0x48] sm:$0xff] %vm1672, %v1595
      %1683 = vst.msk [vmem:[#allocation3 + $0x50] sm:$0xff] %vm1672, %v1597
      %1684 = vst.msk [vmem:[#allocation3 + $0x58] sm:$0xff] %vm1672, %v1599
      %1685 = vst.msk [vmem:[#allocation3 + $0x60] sm:$0xff] %vm1672, %v1601
      %1686 = vst.msk [vmem:[#allocation3 + $0x68] sm:$0xff] %vm1672, %v1603
      %1687 = vst.msk [vmem:[#allocation3 + $0x70] sm:$0xff] %vm1672, %v1605
      %1688 = vst.msk [vmem:[#allocation3 + $0x78] sm:$0xff] %vm1672, %v1607
      %1689 = vst.msk [vmem:[#allocation3 + $0x80] sm:$0xff] %vm1672, %v1609
      %1690 = vst.msk [vmem:[#allocation3 + $0x88] sm:$0xff] %vm1672, %v1611
      %1691 = vst.msk [vmem:[#allocation3 + $0x90] sm:$0xff] %vm1672, %v1613
      %1692 = vst.msk [vmem:[#allocation3 + $0x98] sm:$0xff] %vm1672, %v1615
      %1693 = vst.msk [vmem:[#allocation3 + $0xa0] sm:$0xff] %vm1672, %v1617
      %1694 = vst.msk [vmem:[#allocation3 + $0xa8] sm:$0xff] %vm1672, %v1619
      %1695 = vst.msk [vmem:[#allocation3 + $0xb0] sm:$0xff] %vm1672, %v1621
      %1696 = vst.msk [vmem:[#allocation3 + $0xb8] sm:$0xff] %vm1672, %v1623
      %1697 = vst.msk [vmem:[#allocation3 + $0xc0] sm:$0xff] %vm1672, %v1625
      %1698 = vst.msk [vmem:[#allocation3 + $0xc8] sm:$0xff] %vm1672, %v1627
      %1699 = vst.msk [vmem:[#allocation3 + $0xd0] sm:$0xff] %vm1672, %v1629
      %1700 = vst.msk [vmem:[#allocation3 + $0xd8] sm:$0xff] %vm1672, %v1631
      %1701 = vst.msk [vmem:[#allocation3 + $0xe0] sm:$0xff] %vm1672, %v1633
      %1702 = vst.msk [vmem:[#allocation3 + $0xe8] sm:$0xff] %vm1672, %v1635
      %1703 = vst.msk [vmem:[#allocation3 + $0xf0] sm:$0xff] %vm1672, %v1637
      %1704 = vst.msk [vmem:[#allocation3 + $0xf8] sm:$0xff] %vm1672, %v1639
      %v1705 = vld [vmem:[%s1318 + $0x2] sm:$0xff]
      %v1706 = vld [vmem:[%s1318 + $0xa] sm:$0xff]
      %v1707 = vld [vmem:[%s1318 + $0x1a] sm:$0xff]
      %v1708 = vld [vmem:[%s1318 + $0x22] sm:$0xff]
      %v1709 = vld [vmem:[%s1318 + $0x32] sm:$0xff]
      %v1710 = vld [vmem:[%s1318 + $0x3a] sm:$0xff]
      %v1711 = vld [vmem:[%s1318 + $0x4a] sm:$0xff]
      %v1712 = vld [vmem:[%s1318 + $0x52] sm:$0xff]
      %v1713 = vld [vmem:[%s1318 + $0x62] sm:$0xff]
      %v1714 = vld [vmem:[%s1318 + $0x6a] sm:$0xff]
      %v1715 = vld [vmem:[%s1318 + $0x7a] sm:$0xff]
      %v1716 = vld [vmem:[%s1318 + $0x82] sm:$0xff]
      %v1717 = vld [vmem:[%s1318 + $0x92] sm:$0xff]
      %v1718 = vld [vmem:[%s1318 + $0x9a] sm:$0xff]
      %v1719 = vld [vmem:[%s1318 + $0xaa] sm:$0xff]
      %v1720 = vld [vmem:[%s1318 + $0xb2] sm:$0xff]
      %v1721 = vld [vmem:[%s1318 + $0xc2] sm:$0xff]
      %v1722 = vld [vmem:[%s1318 + $0xca] sm:$0xff]
      %v1723 = vld [vmem:[%s1318 + $0xda] sm:$0xff]
      %v1724 = vld [vmem:[%s1318 + $0xe2] sm:$0xff]
      %v1725 = vld [vmem:[%s1318 + $0xf2] sm:$0xff]
      %v1726 = vld [vmem:[%s1318 + $0xfa] sm:$0xff]
      %v1727 = vld [vmem:[%s1318 + $0x10a] sm:$0xff]
      %v1728 = vld [vmem:[%s1318 + $0x112] sm:$0xff]
      %v1729 = vld [vmem:[%s1318 + $0x122] sm:$0xff]
      %v1730 = vld [vmem:[%s1318 + $0x12a] sm:$0xff]
      %v1731 = vld [vmem:[%s1318 + $0x13a] sm:$0xff]
      %v1732 = vld [vmem:[%s1318 + $0x142] sm:$0xff]
      %v1733 = vld [vmem:[%s1318 + $0x152] sm:$0xff]
      %v1734 = vld [vmem:[%s1318 + $0x15a] sm:$0xff]
      %v1735 = vld [vmem:[%s1318 + $0x16a] sm:$0xff]
      %v1736 = vld [vmem:[%s1318 + $0x172] sm:$0xff]
      %1769 = vrot.lane.b32.xlu0 %v1705, 32
      %v1770 = vpop.permute.xlu0 %1769
      %1771 = vrot.lane.b32.xlu0 %v1706, 32
      %v1772 = vpop.permute.xlu0 %1771
      %1773 = vrot.lane.b32.xlu0 %v1707, 32
      %v1774 = vpop.permute.xlu0 %1773
      %1775 = vrot.lane.b32.xlu0 %v1708, 32
      %v1776 = vpop.permute.xlu0 %1775
      %1777 = vrot.lane.b32.xlu0 %v1709, 32
      %v1778 = vpop.permute.xlu0 %1777
      %1779 = vrot.lane.b32.xlu0 %v1710, 32
      %v1780 = vpop.permute.xlu0 %1779
      %1781 = vrot.lane.b32.xlu0 %v1711, 32
      %v1782 = vpop.permute.xlu0 %1781
      %1783 = vrot.lane.b32.xlu0 %v1712, 32
      %v1784 = vpop.permute.xlu0 %1783
      %1785 = vrot.lane.b32.xlu0 %v1713, 32
      %v1786 = vpop.permute.xlu0 %1785
      %1787 = vrot.lane.b32.xlu0 %v1714, 32
      %v1788 = vpop.permute.xlu0 %1787
      %1789 = vrot.lane.b32.xlu0 %v1715, 32
      %v1790 = vpop.permute.xlu0 %1789
      %1791 = vrot.lane.b32.xlu0 %v1716, 32
      %v1792 = vpop.permute.xlu0 %1791
      %1793 = vrot.lane.b32.xlu0 %v1717, 32
      %v1794 = vpop.permute.xlu0 %1793
      %1795 = vrot.lane.b32.xlu0 %v1718, 32
      %v1796 = vpop.permute.xlu0 %1795
      %1797 = vrot.lane.b32.xlu0 %v1719, 32
      %v1798 = vpop.permute.xlu0 %1797
      %1799 = vrot.lane.b32.xlu0 %v1720, 32
      %v1800 = vpop.permute.xlu0 %1799
      %1801 = vrot.lane.b32.xlu0 %v1721, 32
      %v1802 = vpop.permute.xlu0 %1801
      %1803 = vrot.lane.b32.xlu0 %v1722, 32
      %v1804 = vpop.permute.xlu0 %1803
      %1805 = vrot.lane.b32.xlu0 %v1723, 32
      %v1806 = vpop.permute.xlu0 %1805
      %1807 = vrot.lane.b32.xlu0 %v1724, 32
      %v1808 = vpop.permute.xlu0 %1807
      %1809 = vrot.lane.b32.xlu0 %v1725, 32
      %v1810 = vpop.permute.xlu0 %1809
      %1811 = vrot.lane.b32.xlu0 %v1726, 32
      %v1812 = vpop.permute.xlu0 %1811
      %1813 = vrot.lane.b32.xlu0 %v1727, 32
      %v1814 = vpop.permute.xlu0 %1813
      %1815 = vrot.lane.b32.xlu0 %v1728, 32
      %v1816 = vpop.permute.xlu0 %1815
      %1817 = vrot.lane.b32.xlu0 %v1729, 32
      %v1818 = vpop.permute.xlu0 %1817
      %1819 = vrot.lane.b32.xlu0 %v1730, 32
      %v1820 = vpop.permute.xlu0 %1819
      %1821 = vrot.lane.b32.xlu0 %v1731, 32
      %v1822 = vpop.permute.xlu0 %1821
      %1823 = vrot.lane.b32.xlu0 %v1732, 32
      %v1824 = vpop.permute.xlu0 %1823
      %1825 = vrot.lane.b32.xlu0 %v1733, 32
      %v1826 = vpop.permute.xlu0 %1825
      %1827 = vrot.lane.b32.xlu0 %v1734, 32
      %v1828 = vpop.permute.xlu0 %1827
      %1829 = vrot.lane.b32.xlu0 %v1735, 32
      %v1830 = vpop.permute.xlu0 %1829
      %1831 = vrot.lane.b32.xlu0 %v1736, 32
      %v1832 = vpop.permute.xlu0 %1831
      %vm1865 = vcmask 294144
      %1866 = vst.msk [vmem:[#allocation3] sm:$0xff] %vm1865, %v1770
      %1867 = vst.msk [vmem:[#allocation3 + $0x8] sm:$0xff] %vm1865, %v1772
      %1868 = vst.msk [vmem:[#allocation3 + $0x10] sm:$0xff] %vm1865, %v1774
      %1869 = vst.msk [vmem:[#allocation3 + $0x18] sm:$0xff] %vm1865, %v1776
      %1870 = vst.msk [vmem:[#allocation3 + $0x20] sm:$0xff] %vm1865, %v1778
      %1871 = vst.msk [vmem:[#allocation3 + $0x28] sm:$0xff] %vm1865, %v1780
      %1872 = vst.msk [vmem:[#allocation3 + $0x30] sm:$0xff] %vm1865, %v1782
      %1873 = vst.msk [vmem:[#allocation3 + $0x38] sm:$0xff] %vm1865, %v1784
      %1874 = vst.msk [vmem:[#allocation3 + $0x40] sm:$0xff] %vm1865, %v1786
      %1875 = vst.msk [vmem:[#allocation3 + $0x48] sm:$0xff] %vm1865, %v1788
      %1876 = vst.msk [vmem:[#allocation3 + $0x50] sm:$0xff] %vm1865, %v1790
      %1877 = vst.msk [vmem:[#allocation3 + $0x58] sm:$0xff] %vm1865, %v1792
      %1878 = vst.msk [vmem:[#allocation3 + $0x60] sm:$0xff] %vm1865, %v1794
      %1879 = vst.msk [vmem:[#allocation3 + $0x68] sm:$0xff] %vm1865, %v1796
      %1880 = vst.msk [vmem:[#allocation3 + $0x70] sm:$0xff] %vm1865, %v1798
      %1881 = vst.msk [vmem:[#allocation3 + $0x78] sm:$0xff] %vm1865, %v1800
      %1882 = vst.msk [vmem:[#allocation3 + $0x80] sm:$0xff] %vm1865, %v1802
      %1883 = vst.msk [vmem:[#allocation3 + $0x88] sm:$0xff] %vm1865, %v1804
      %1884 = vst.msk [vmem:[#allocation3 + $0x90] sm:$0xff] %vm1865, %v1806
      %1885 = vst.msk [vmem:[#allocation3 + $0x98] sm:$0xff] %vm1865, %v1808
      %1886 = vst.msk [vmem:[#allocation3 + $0xa0] sm:$0xff] %vm1865, %v1810
      %1887 = vst.msk [vmem:[#allocation3 + $0xa8] sm:$0xff] %vm1865, %v1812
      %1888 = vst.msk [vmem:[#allocation3 + $0xb0] sm:$0xff] %vm1865, %v1814
      %1889 = vst.msk [vmem:[#allocation3 + $0xb8] sm:$0xff] %vm1865, %v1816
      %1890 = vst.msk [vmem:[#allocation3 + $0xc0] sm:$0xff] %vm1865, %v1818
      %1891 = vst.msk [vmem:[#allocation3 + $0xc8] sm:$0xff] %vm1865, %v1820
      %1892 = vst.msk [vmem:[#allocation3 + $0xd0] sm:$0xff] %vm1865, %v1822
      %1893 = vst.msk [vmem:[#allocation3 + $0xd8] sm:$0xff] %vm1865, %v1824
      %1894 = vst.msk [vmem:[#allocation3 + $0xe0] sm:$0xff] %vm1865, %v1826
      %1895 = vst.msk [vmem:[#allocation3 + $0xe8] sm:$0xff] %vm1865, %v1828
      %1896 = vst.msk [vmem:[#allocation3 + $0xf0] sm:$0xff] %vm1865, %v1830
      %1897 = vst.msk [vmem:[#allocation3 + $0xf8] sm:$0xff] %vm1865, %v1832
      %v1898 = vld [vmem:[#allocation3] sm:$0xff]
      %v1899 = vld [vmem:[#allocation3 + $0x8] sm:$0xff]
      %v1900 = vld [vmem:[#allocation3 + $0x10] sm:$0xff]
      %v1901 = vld [vmem:[#allocation3 + $0x18] sm:$0xff]
      %v1902 = vld [vmem:[#allocation3 + $0x20] sm:$0xff]
      %v1903 = vld [vmem:[#allocation3 + $0x28] sm:$0xff]
      %v1904 = vld [vmem:[#allocation3 + $0x30] sm:$0xff]
      %v1905 = vld [vmem:[#allocation3 + $0x38] sm:$0xff]
      %v1906 = vld [vmem:[#allocation3 + $0x40] sm:$0xff]
      %v1907 = vld [vmem:[#allocation3 + $0x48] sm:$0xff]
      %v1908 = vld [vmem:[#allocation3 + $0x50] sm:$0xff]
      %v1909 = vld [vmem:[#allocation3 + $0x58] sm:$0xff]
      %v1910 = vld [vmem:[#allocation3 + $0x60] sm:$0xff]
      %v1911 = vld [vmem:[#allocation3 + $0x68] sm:$0xff]
      %v1912 = vld [vmem:[#allocation3 + $0x70] sm:$0xff]
      %v1913 = vld [vmem:[#allocation3 + $0x78] sm:$0xff]
      %v1914 = vld [vmem:[#allocation3 + $0x80] sm:$0xff]
      %v1915 = vld [vmem:[#allocation3 + $0x88] sm:$0xff]
      %v1916 = vld [vmem:[#allocation3 + $0x90] sm:$0xff]
      %v1917 = vld [vmem:[#allocation3 + $0x98] sm:$0xff]
      %v1918 = vld [vmem:[#allocation3 + $0xa0] sm:$0xff]
      %v1919 = vld [vmem:[#allocation3 + $0xa8] sm:$0xff]
      %v1920 = vld [vmem:[#allocation3 + $0xb0] sm:$0xff]
      %v1921 = vld [vmem:[#allocation3 + $0xb8] sm:$0xff]
      %v1922 = vld [vmem:[#allocation3 + $0xc0] sm:$0xff]
      %v1923 = vld [vmem:[#allocation3 + $0xc8] sm:$0xff]
      %v1924 = vld [vmem:[#allocation3 + $0xd0] sm:$0xff]
      %v1925 = vld [vmem:[#allocation3 + $0xd8] sm:$0xff]
      %v1926 = vld [vmem:[#allocation3 + $0xe0] sm:$0xff]
      %v1927 = vld [vmem:[#allocation3 + $0xe8] sm:$0xff]
      %v1928 = vld [vmem:[#allocation3 + $0xf0] sm:$0xff]
      %v1929 = vld [vmem:[#allocation3 + $0xf8] sm:$0xff]
      %v1930 = vld [vmem:[%s1] sm:$0xff]
      %v1931 = vld [vmem:[%s1 + $0x8] sm:$0xff]
      %v1932 = vld [vmem:[%s1 + $0x10] sm:$0xff]
      %v1933 = vld [vmem:[%s1 + $0x18] sm:$0xff]
      %v1934 = vld [vmem:[%s1 + $0x20] sm:$0xf]
      %vm1935 = vcmask 293888
      %v1937 = vsel %vm1935, %v1898, 0
      %v1940 = vsel %vm1935, %v1899, 0
      %v1943 = vsel %vm1935, %v1900, 0
      %v1946 = vsel %vm1935, %v1901, 0
      %v1949 = vsel %vm1935, %v1902, 0
      %v1952 = vsel %vm1935, %v1903, 0
      %v1955 = vsel %vm1935, %v1904, 0
      %v1958 = vsel %vm1935, %v1905, 0
      %v1961 = vsel %vm1935, %v1906, 0
      %v1964 = vsel %vm1935, %v1907, 0
      %v1967 = vsel %vm1935, %v1908, 0
      %v1970 = vsel %vm1935, %v1909, 0
      %v1973 = vsel %vm1935, %v1910, 0
      %v1976 = vsel %vm1935, %v1911, 0
      %v1979 = vsel %vm1935, %v1912, 0
      %v1982 = vsel %vm1935, %v1913, 0
      %v1985 = vsel %vm1935, %v1914, 0
      %v1988 = vsel %vm1935, %v1915, 0
      %v1991 = vsel %vm1935, %v1916, 0
      %v1994 = vsel %vm1935, %v1917, 0
      %v1997 = vsel %vm1935, %v1918, 0
      %v2000 = vsel %vm1935, %v1919, 0
      %v2003 = vsel %vm1935, %v1920, 0
      %v2006 = vsel %vm1935, %v1921, 0
      %v2009 = vsel %vm1935, %v1922, 0
      %v2012 = vsel %vm1935, %v1923, 0
      %v2015 = vsel %vm1935, %v1924, 0
      %v2018 = vsel %vm1935, %v1925, 0
      %v2021 = vsel %vm1935, %v1926, 0
      %v2024 = vsel %vm1935, %v1927, 0
      %v2027 = vsel %vm1935, %v1928, 0
      %v2030 = vsel %vm1935, %v1929, 0
      %vm2032 = vcmask 1043456
      %v2034 = vsel %vm2032, %v1934, 0
      %2036 = vmatpush.msra.mxu0 0.0
      %2037 = vmatpush.msra.mxu0 0.0
      %2038 = vmatpush.msra.mxu0 0.0
      %2039 = vmatpush.msra.mxu0 0.0
      %2040 = vmatpush.msra.mxu0 0.0
      %2041 = vmatpush.msra.mxu0 0.0
      %2042 = vmatpush.msra.mxu0 0.0
      %2043 = vmatpush.msra.mxu0 0.0
      %2044 = vmatpush.msra.mxu0 0.0
      %2045 = vmatpush.msra.mxu0 0.0
      %2046 = vmatpush.msra.mxu0 0.0
      %2047 = vmatpush.msra.mxu0 %v2034
      %2048 = vmatpush.msra.mxu0 %v1933
      %2049 = vmatpush.msra.mxu0 %v1932
      %2050 = vmatpush.msra.mxu0 %v1931
      %2051 = vmatpush.msra.mxu0 %v1930
      %2052 = vmatmul.f32.gmra.mxu0 %v1937
      %v2053 = vpop.f32.mrf.mxu0
      %v2054 = vadd.f32 0.0, %v2053
      %2055 = vmatmul.f32.gmra.mxu0 %v1940
      %v2056 = vpop.f32.mrf.mxu0
      %v2057 = vadd.f32 0.0, %v2056
      %2058 = vmatmul.f32.gmra.mxu0 %v1943
      %v2059 = vpop.f32.mrf.mxu0
      %v2060 = vadd.f32 0.0, %v2059
      %2061 = vmatmul.f32.gmra.mxu0 %v1946
      %v2062 = vpop.f32.mrf.mxu0
      %v2063 = vadd.f32 0.0, %v2062
      %2064 = vmatmul.f32.gmra.mxu0 %v1949
      %v2065 = vpop.f32.mrf.mxu0
      %v2066 = vadd.f32 0.0, %v2065
      %2067 = vmatmul.f32.gmra.mxu0 %v1952
      %v2068 = vpop.f32.mrf.mxu0
      %v2069 = vadd.f32 0.0, %v2068
      %2070 = vmatmul.f32.gmra.mxu0 %v1955
      %v2071 = vpop.f32.mrf.mxu0
      %v2072 = vadd.f32 0.0, %v2071
      %2073 = vmatmul.f32.gmra.mxu0 %v1958
      %v2074 = vpop.f32.mrf.mxu0
      %v2075 = vadd.f32 0.0, %v2074
      %2076 = vmatmul.f32.gmra.mxu0 %v1961
      %v2077 = vpop.f32.mrf.mxu0
      %v2078 = vadd.f32 0.0, %v2077
      %2079 = vmatmul.f32.gmra.mxu0 %v1964
      %v2080 = vpop.f32.mrf.mxu0
      %v2081 = vadd.f32 0.0, %v2080
      %2082 = vmatmul.f32.gmra.mxu0 %v1967
      %v2083 = vpop.f32.mrf.mxu0
      %v2084 = vadd.f32 0.0, %v2083
      %2085 = vmatmul.f32.gmra.mxu0 %v1970
      %v2086 = vpop.f32.mrf.mxu0
      %v2087 = vadd.f32 0.0, %v2086
      %2088 = vmatmul.f32.gmra.mxu0 %v1973
      %v2089 = vpop.f32.mrf.mxu0
      %v2090 = vadd.f32 0.0, %v2089
      %2091 = vmatmul.f32.gmra.mxu0 %v1976
      %v2092 = vpop.f32.mrf.mxu0
      %v2093 = vadd.f32 0.0, %v2092
      %2094 = vmatmul.f32.gmra.mxu0 %v1979
      %v2095 = vpop.f32.mrf.mxu0
      %v2096 = vadd.f32 0.0, %v2095
      %2097 = vmatmul.f32.gmra.mxu0 %v1982
      %v2098 = vpop.f32.mrf.mxu0
      %v2099 = vadd.f32 0.0, %v2098
      %2100 = vmatmul.f32.gmra.mxu0 %v1985
      %v2101 = vpop.f32.mrf.mxu0
      %v2102 = vadd.f32 0.0, %v2101
      %2103 = vmatmul.f32.gmra.mxu0 %v1988
      %v2104 = vpop.f32.mrf.mxu0
      %v2105 = vadd.f32 0.0, %v2104
      %2106 = vmatmul.f32.gmra.mxu0 %v1991
      %v2107 = vpop.f32.mrf.mxu0
      %v2108 = vadd.f32 0.0, %v2107
      %2109 = vmatmul.f32.gmra.mxu0 %v1994
      %v2110 = vpop.f32.mrf.mxu0
      %v2111 = vadd.f32 0.0, %v2110
      %2112 = vmatmul.f32.gmra.mxu0 %v1997
      %v2113 = vpop.f32.mrf.mxu0
      %v2114 = vadd.f32 0.0, %v2113
      %2115 = vmatmul.f32.gmra.mxu0 %v2000
      %v2116 = vpop.f32.mrf.mxu0
      %v2117 = vadd.f32 0.0, %v2116
      %2118 = vmatmul.f32.gmra.mxu0 %v2003
      %v2119 = vpop.f32.mrf.mxu0
      %v2120 = vadd.f32 0.0, %v2119
      %2121 = vmatmul.f32.gmra.mxu0 %v2006
      %v2122 = vpop.f32.mrf.mxu0
      %v2123 = vadd.f32 0.0, %v2122
      %2124 = vmatmul.f32.gmra.mxu0 %v2009
      %v2125 = vpop.f32.mrf.mxu0
      %v2126 = vadd.f32 0.0, %v2125
      %2127 = vmatmul.f32.gmra.mxu0 %v2012
      %v2128 = vpop.f32.mrf.mxu0
      %v2129 = vadd.f32 0.0, %v2128
      %2130 = vmatmul.f32.gmra.mxu0 %v2015
      %v2131 = vpop.f32.mrf.mxu0
      %v2132 = vadd.f32 0.0, %v2131
      %2133 = vmatmul.f32.gmra.mxu0 %v2018
      %v2134 = vpop.f32.mrf.mxu0
      %v2135 = vadd.f32 0.0, %v2134
      %2136 = vmatmul.f32.gmra.mxu0 %v2021
      %v2137 = vpop.f32.mrf.mxu0
      %v2138 = vadd.f32 0.0, %v2137
      %2139 = vmatmul.f32.gmra.mxu0 %v2024
      %v2140 = vpop.f32.mrf.mxu0
      %v2141 = vadd.f32 0.0, %v2140
      %2142 = vmatmul.f32.gmra.mxu0 %v2027
      %v2143 = vpop.f32.mrf.mxu0
      %v2144 = vadd.f32 0.0, %v2143
      %2145 = vmatmul.f32.gmra.mxu0 %v2030
      %v2146 = vpop.f32.mrf.mxu0
      %v2147 = vadd.f32 0.0, %v2146
      %2148 = vdwg.mxu0
      %vm2149 = vcmask 64512
      %2150 = vst.msk [vmem:[%s177] sm:$0xff] %vm2149, %v2054
      %2151 = vst.msk [vmem:[%s177 + $0x8] sm:$0xff] %vm2149, %v2057
      %2152 = vst.msk [vmem:[%s177 + $0x10] sm:$0xff] %vm2149, %v2060
      %2153 = vst.msk [vmem:[%s177 + $0x18] sm:$0xff] %vm2149, %v2063
      %2154 = vst.msk [vmem:[%s177 + $0x20] sm:$0xff] %vm2149, %v2066
      %2155 = vst.msk [vmem:[%s177 + $0x28] sm:$0xff] %vm2149, %v2069
      %2156 = vst.msk [vmem:[%s177 + $0x30] sm:$0xff] %vm2149, %v2072
      %2157 = vst.msk [vmem:[%s177 + $0x38] sm:$0xff] %vm2149, %v2075
      %2158 = vst.msk [vmem:[%s177 + $0x40] sm:$0xff] %vm2149, %v2078
      %2159 = vst.msk [vmem:[%s177 + $0x48] sm:$0xff] %vm2149, %v2081
      %2160 = vst.msk [vmem:[%s177 + $0x50] sm:$0xff] %vm2149, %v2084
      %2161 = vst.msk [vmem:[%s177 + $0x58] sm:$0xff] %vm2149, %v2087
      %2162 = vst.msk [vmem:[%s177 + $0x60] sm:$0xff] %vm2149, %v2090
      %2163 = vst.msk [vmem:[%s177 + $0x68] sm:$0xff] %vm2149, %v2093
      %2164 = vst.msk [vmem:[%s177 + $0x70] sm:$0xff] %vm2149, %v2096
      %2165 = vst.msk [vmem:[%s177 + $0x78] sm:$0xff] %vm2149, %v2099
      %2166 = vst.msk [vmem:[%s177 + $0x80] sm:$0xff] %vm2149, %v2102
      %2167 = vst.msk [vmem:[%s177 + $0x88] sm:$0xff] %vm2149, %v2105
      %2168 = vst.msk [vmem:[%s177 + $0x90] sm:$0xff] %vm2149, %v2108
      %2169 = vst.msk [vmem:[%s177 + $0x98] sm:$0xff] %vm2149, %v2111
      %2170 = vst.msk [vmem:[%s177 + $0xa0] sm:$0xff] %vm2149, %v2114
      %2171 = vst.msk [vmem:[%s177 + $0xa8] sm:$0xff] %vm2149, %v2117
      %2172 = vst.msk [vmem:[%s177 + $0xb0] sm:$0xff] %vm2149, %v2120
      %2173 = vst.msk [vmem:[%s177 + $0xb8] sm:$0xff] %vm2149, %v2123
      %2174 = vst.msk [vmem:[%s177 + $0xc0] sm:$0xff] %vm2149, %v2126
      %2175 = vst.msk [vmem:[%s177 + $0xc8] sm:$0xff] %vm2149, %v2129
      %2176 = vst.msk [vmem:[%s177 + $0xd0] sm:$0xff] %vm2149, %v2132
      %2177 = vst.msk [vmem:[%s177 + $0xd8] sm:$0xff] %vm2149, %v2135
      %2178 = vst.msk [vmem:[%s177 + $0xe0] sm:$0xff] %vm2149, %v2138
      %2179 = vst.msk [vmem:[%s177 + $0xe8] sm:$0xff] %vm2149, %v2141
      %2180 = vst.msk [vmem:[%s177 + $0xf0] sm:$0xff] %vm2149, %v2144
      %2181 = vst.msk [vmem:[%s177 + $0xf8] sm:$0xff] %vm2149, %v2147
      %v2182 = vsel %vm2149, %v2054, 0.0
      %v2183 = vsel %vm2149, %v2057, 0.0
      %v2184 = vadd.f32 %v2182, %v2183
      %v2185 = vsel %vm2149, %v2060, 0.0
      %v2186 = vadd.f32 %v2184, %v2185
      %v2187 = vsel %vm2149, %v2063, 0.0
      %v2188 = vadd.f32 %v2186, %v2187
      %v2189 = vsel %vm2149, %v2066, 0.0
      %v2190 = vadd.f32 %v2188, %v2189
      %v2191 = vsel %vm2149, %v2069, 0.0
      %v2192 = vadd.f32 %v2190, %v2191
      %v2193 = vsel %vm2149, %v2072, 0.0
      %v2194 = vadd.f32 %v2192, %v2193
      %v2195 = vsel %vm2149, %v2075, 0.0
      %v2196 = vadd.f32 %v2194, %v2195
      %v2197 = vsel %vm2149, %v2078, 0.0
      %v2198 = vadd.f32 %v2196, %v2197
      %v2199 = vsel %vm2149, %v2081, 0.0
      %v2200 = vadd.f32 %v2198, %v2199
      %v2201 = vsel %vm2149, %v2084, 0.0
      %v2202 = vadd.f32 %v2200, %v2201
      %v2203 = vsel %vm2149, %v2087, 0.0
      %v2204 = vadd.f32 %v2202, %v2203
      %v2205 = vsel %vm2149, %v2090, 0.0
      %v2206 = vadd.f32 %v2204, %v2205
      %v2207 = vsel %vm2149, %v2093, 0.0
      %v2208 = vadd.f32 %v2206, %v2207
      %v2209 = vsel %vm2149, %v2096, 0.0
      %v2210 = vadd.f32 %v2208, %v2209
      %v2211 = vsel %vm2149, %v2099, 0.0
      %v2212 = vadd.f32 %v2210, %v2211
      %v2213 = vsel %vm2149, %v2102, 0.0
      %v2214 = vadd.f32 %v2212, %v2213
      %v2215 = vsel %vm2149, %v2105, 0.0
      %v2216 = vadd.f32 %v2214, %v2215
      %v2217 = vsel %vm2149, %v2108, 0.0
      %v2218 = vadd.f32 %v2216, %v2217
      %v2219 = vsel %vm2149, %v2111, 0.0
      %v2220 = vadd.f32 %v2218, %v2219
      %v2221 = vsel %vm2149, %v2114, 0.0
      %v2222 = vadd.f32 %v2220, %v2221
      %v2223 = vsel %vm2149, %v2117, 0.0
      %v2224 = vadd.f32 %v2222, %v2223
      %v2225 = vsel %vm2149, %v2120, 0.0
      %v2226 = vadd.f32 %v2224, %v2225
      %v2227 = vsel %vm2149, %v2123, 0.0
      %v2228 = vadd.f32 %v2226, %v2227
      %v2229 = vsel %vm2149, %v2126, 0.0
      %v2230 = vadd.f32 %v2228, %v2229
      %v2231 = vsel %vm2149, %v2129, 0.0
      %v2232 = vadd.f32 %v2230, %v2231
      %v2233 = vsel %vm2149, %v2132, 0.0
      %v2234 = vadd.f32 %v2232, %v2233
      %v2235 = vsel %vm2149, %v2135, 0.0
      %v2236 = vadd.f32 %v2234, %v2235
      %v2237 = vsel %vm2149, %v2138, 0.0
      %v2238 = vadd.f32 %v2236, %v2237
      %v2239 = vsel %vm2149, %v2141, 0.0
      %v2240 = vadd.f32 %v2238, %v2239
      %v2241 = vsel %vm2149, %v2144, 0.0
      %v2242 = vadd.f32 %v2240, %v2241
      %v2243 = vsel %vm2149, %v2147, 0.0
      %v2244 = vadd.f32 %v2242, %v2243
      %v2245 = vrot.slane %v2244, 4
      %v2246 = vadd.f32 %v2244, %v2245
      %v2247 = vrot.slane %v2246, 2
      %v2248 = vadd.f32 %v2246, %v2247
      %v2249 = vrot.slane %v2248, 1
      %v2250 = vadd.f32 %v2248, %v2249
      %v2251 = vmul.f32 %v2054, %v2054
      %v2252 = vmul.f32 %v2057, %v2057
      %v2253 = vmul.f32 %v2060, %v2060
      %v2254 = vmul.f32 %v2063, %v2063
      %v2255 = vmul.f32 %v2066, %v2066
      %v2256 = vmul.f32 %v2069, %v2069
      %v2257 = vmul.f32 %v2072, %v2072
      %v2258 = vmul.f32 %v2075, %v2075
      %v2259 = vmul.f32 %v2078, %v2078
      %v2260 = vmul.f32 %v2081, %v2081
      %v2261 = vmul.f32 %v2084, %v2084
      %v2262 = vmul.f32 %v2087, %v2087
      %v2263 = vmul.f32 %v2090, %v2090
      %v2264 = vmul.f32 %v2093, %v2093
      %v2265 = vmul.f32 %v2096, %v2096
      %v2266 = vmul.f32 %v2099, %v2099
      %v2267 = vmul.f32 %v2102, %v2102
      %v2268 = vmul.f32 %v2105, %v2105
      %v2269 = vmul.f32 %v2108, %v2108
      %v2270 = vmul.f32 %v2111, %v2111
      %v2271 = vmul.f32 %v2114, %v2114
      %v2272 = vmul.f32 %v2117, %v2117
      %v2273 = vmul.f32 %v2120, %v2120
      %v2274 = vmul.f32 %v2123, %v2123
      %v2275 = vmul.f32 %v2126, %v2126
      %v2276 = vmul.f32 %v2129, %v2129
      %v2277 = vmul.f32 %v2132, %v2132
      %v2278 = vmul.f32 %v2135, %v2135
      %v2279 = vmul.f32 %v2138, %v2138
      %v2280 = vmul.f32 %v2141, %v2141
      %v2281 = vmul.f32 %v2144, %v2144
      %v2282 = vmul.f32 %v2147, %v2147
      %v2283 = vsel %vm2149, %v2251, 0.0
      %v2284 = vsel %vm2149, %v2252, 0.0
      %v2285 = vadd.f32 %v2283, %v2284
      %v2286 = vsel %vm2149, %v2253, 0.0
      %v2287 = vadd.f32 %v2285, %v2286
      %v2288 = vsel %vm2149, %v2254, 0.0
      %v2289 = vadd.f32 %v2287, %v2288
      %v2290 = vsel %vm2149, %v2255, 0.0
      %v2291 = vadd.f32 %v2289, %v2290
      %v2292 = vsel %vm2149, %v2256, 0.0
      %v2293 = vadd.f32 %v2291, %v2292
      %v2294 = vsel %vm2149, %v2257, 0.0
      %v2295 = vadd.f32 %v2293, %v2294
      %v2296 = vsel %vm2149, %v2258, 0.0
      %v2297 = vadd.f32 %v2295, %v2296
      %v2298 = vsel %vm2149, %v2259, 0.0
      %v2299 = vadd.f32 %v2297, %v2298
      %v2300 = vsel %vm2149, %v2260, 0.0
      %v2301 = vadd.f32 %v2299, %v2300
      %v2302 = vsel %vm2149, %v2261, 0.0
      %v2303 = vadd.f32 %v2301, %v2302
      %v2304 = vsel %vm2149, %v2262, 0.0
      %v2305 = vadd.f32 %v2303, %v2304
      %v2306 = vsel %vm2149, %v2263, 0.0
      %v2307 = vadd.f32 %v2305, %v2306
      %v2308 = vsel %vm2149, %v2264, 0.0
      %v2309 = vadd.f32 %v2307, %v2308
      %v2310 = vsel %vm2149, %v2265, 0.0
      %v2311 = vadd.f32 %v2309, %v2310
      %v2312 = vsel %vm2149, %v2266, 0.0
      %v2313 = vadd.f32 %v2311, %v2312
      %v2314 = vsel %vm2149, %v2267, 0.0
      %v2315 = vadd.f32 %v2313, %v2314
      %v2316 = vsel %vm2149, %v2268, 0.0
      %v2317 = vadd.f32 %v2315, %v2316
      %v2318 = vsel %vm2149, %v2269, 0.0
      %v2319 = vadd.f32 %v2317, %v2318
      %v2320 = vsel %vm2149, %v2270, 0.0
      %v2321 = vadd.f32 %v2319, %v2320
      %v2322 = vsel %vm2149, %v2271, 0.0
      %v2323 = vadd.f32 %v2321, %v2322
      %v2324 = vsel %vm2149, %v2272, 0.0
      %v2325 = vadd.f32 %v2323, %v2324
      %v2326 = vsel %vm2149, %v2273, 0.0
      %v2327 = vadd.f32 %v2325, %v2326
      %v2328 = vsel %vm2149, %v2274, 0.0
      %v2329 = vadd.f32 %v2327, %v2328
      %v2330 = vsel %vm2149, %v2275, 0.0
      %v2331 = vadd.f32 %v2329, %v2330
      %v2332 = vsel %vm2149, %v2276, 0.0
      %v2333 = vadd.f32 %v2331, %v2332
      %v2334 = vsel %vm2149, %v2277, 0.0
      %v2335 = vadd.f32 %v2333, %v2334
      %v2336 = vsel %vm2149, %v2278, 0.0
      %v2337 = vadd.f32 %v2335, %v2336
      %v2338 = vsel %vm2149, %v2279, 0.0
      %v2339 = vadd.f32 %v2337, %v2338
      %v2340 = vsel %vm2149, %v2280, 0.0
      %v2341 = vadd.f32 %v2339, %v2340
      %v2342 = vsel %vm2149, %v2281, 0.0
      %v2343 = vadd.f32 %v2341, %v2342
      %v2344 = vsel %vm2149, %v2282, 0.0
      %v2345 = vadd.f32 %v2343, %v2344
      %v2346 = vrot.slane %v2345, 4
      %v2347 = vadd.f32 %v2345, %v2346
      %v2348 = vrot.slane %v2347, 2
      %v2349 = vadd.f32 %v2347, %v2348
      %v2350 = vrot.slane %v2349, 1
      %v2351 = vadd.f32 %v2349, %v2350
      %vm2352 = vcmask 57344
      %2353 = vst.msk [vmem:[%s181] sm:$0x1] %vm2352, %v2250
      %2354 = vst.msk [vmem:[%s181 + $0x1] sm:$0x1] %vm2352, %v2351
      %p2355 = scmp.lt.s32.totalorder %s15, 1
      %s2356 = scalar_select %p2355, %s15, 1
      %s2357 = smul.addr %s2356, 32
      %s2358 = smul.addr %s2357, 8
      %s2359 = scalar_lea.vmem %s2, %s2358
      %p2360 = scmp.lt.s32.totalorder %s15, 1
      %s2361 = scalar_select %p2360, %s15, 1
      %s2362 = smul.addr %s2361, 2
      %s2363 = scalar_lea.vmem %s3, %s2362
      // Predicated region
      $region29: #{conv_block_nhwc.3} parent=27 // pred_check
        %p2364 = pneg %p80
      $region30: #{conv_block_nhwc.3} parent=27 // pred_check_branch
        %2366 = sbr.rel (%p2364) target = $region32
      $region31: #{conv_block_nhwc.3} parent=27 // pred_region
        _
      $region32: #{conv_block_nhwc.3} parent=27 // pred_fallthru
        _
      // Predicated region
      $region33: #{conv_block_nhwc.3} parent=27 // pred_check
        %p2367 = pneg %p106
      $region34: #{conv_block_nhwc.3} parent=27 // pred_check_branch
        %2369 = sbr.rel (%p2367) target = $region36
      $region35: #{conv_block_nhwc.3} parent=27 // pred_region
        _
      $region36: #{conv_block_nhwc.3} parent=27 // pred_fallthru
        _
    $region28: #{conv_block_nhwc.3} parent=5 // pred_fallthru
      _
    %p2370 = scmp.le.s32.totalorder 2, %s10
    // Predicated region
    $region37: #{conv_block_nhwc.3} parent=5 // pred_check
      %p2371 = pneg %p2370
    $region38: #{conv_block_nhwc.3} parent=5 // pred_check_branch
      %2373 = sbr.rel (%p2371) target = $region40
    $region39: #{conv_block_nhwc.3} parent=5 // pred_region
      %s2374 = ssub.s32 %s10, 2
      // Predicated region
      $region41: #{conv_block_nhwc.3} parent=39 // pred_check
        %p2375 = pneg %p86
      $region42: #{conv_block_nhwc.3} parent=39 // pred_check_branch
        %2377 = sbr.rel (%p2375) target = $region44
      $region43: #{conv_block_nhwc.3} parent=39 // pred_region
        %p2378 = scmp.lt.s32.totalorder %s16, 1
        %s2379 = scalar_select %p2378, %s16, 1
        %s2380 = smul.addr %s2379, 32
        %s2381 = smul.addr %s2380, 8
        %s2382 = scalar_lea.vmem %s2, %s2381
      $region44: #{conv_block_nhwc.3} parent=39 // pred_fallthru
        _
      // Predicated region
      $region45: #{conv_block_nhwc.3} parent=39 // pred_check
        %p2383 = pneg %p112
      $region46: #{conv_block_nhwc.3} parent=39 // pred_check_branch
        %2385 = sbr.rel (%p2383) target = $region48
      $region47: #{conv_block_nhwc.3} parent=39 // pred_region
        %p2386 = scmp.lt.s32.totalorder %s16, 1
        %s2387 = scalar_select %p2386, %s16, 1
        %s2388 = smul.addr %s2387, 2
        %s2389 = scalar_lea.vmem %s3, %s2388
      $region48: #{conv_block_nhwc.3} parent=39 // pred_fallthru
        _
    $region40: #{conv_block_nhwc.3} parent=5 // pred_fallthru
      _
  $region6: #{conv_block_nhwc.3} parent=0 // loop_footer
    %s14 = sadd.s32 1, %s10
  $region7: #{conv_block_nhwc.3} parent=0 // loop_footer_branch
    %9 = sbr.rel target = $region3
  $region8: #{conv_block_nhwc.3} parent=0 // loop_exit
    _

// kernel: conv_block_nhwc.4
$region0: #{conv_block_nhwc.4}
  #allocation0 [shape = 'u32[]', space=smem, size = 0x4, offset = 0x4, fixed_abs, tag = 'smem constant byte address 0x4 - core index']
  #allocation1 [shape = 'u32[72,128]{1,0:T(1,128)}', space=vmem, size = 0x9000, scoped, tag = 'internal scratch']
  #allocation2 [shape = 'f32[1,18,18,8]{3,2,1,0:T(8,128)}', space=vmem, size = 0x36000, scoped, tag = 'scratch operand']
  #allocation3 [shape = 'f32[1,16,16,72]{3,2,1,0:T(8,128)}', space=vmem, size = 0x20000, scoped, tag = 'scratch operand']
  %s0 = inlined_call_operand.vmem [shape: f32[2,16,16,8], index: 0, kind: input, shape index: {}]
  %s1 = inlined_call_operand.vmem [shape: f32[72,8], index: 1, kind: input, shape index: {}]
  %s2 = inlined_call_operand.vmem [shape: f32[1,8], index: 2, kind: input, shape index: {}]
  %s3 = inlined_call_operand.vmem [shape: f32[1,8], index: 3, kind: input, shape index: {}]
  %s4 = inlined_call_operand.vmem [shape: f32[2,16,16,8], index: 4, kind: output, shape index: {0}]
  %s5 = inlined_call_operand.vmem [shape: f32[2,2,8], index: 5, kind: output, shape index: {1}]
  %6 = xla_tuple %s4, %s5
  %s7 = sld [smem:[#allocation0]]
  $region57: #{conv_block_nhwc.4} parent=0
    _
  %s9 = ssub.s32 1, %s7
  %s10 = scalar_select 0, %s9, %s7
  loop: start=0, step=1, limit=4
  $region2: #{conv_block_nhwc.4} parent=0 // loop_pre_header
    _
  $region3: #{conv_block_nhwc.4} parent=0 // loop_header
    %s12 = sphi 0, %s16
    %p13 = scmp.ge.s32.totalorder %s12, 4
    %s22 = sphi 0, %s24
    %s25 = sphi 0, %s22
    %s26 = sphi 0, %s25
    %s42 = sphi 0, %s26
    %s46 = sphi 0, %s46
    %s48 = sphi 0, %s46
    %s49 = sphi 0, %s48
    %s63 = sphi 0, %s49
    %s67 = sphi 0, %s67
    %s69 = sphi 0, %s67
    %s70 = sphi 0, %s69
    %s84 = sphi 0, %s70
    %s88 = sphi 0, %s88
    %s90 = sphi 0, %s88
    %s91 = sphi 0, %s90
    %s105 = sphi 0, %s91
    %s111 = sphi 0, %s113
    %s114 = sphi 0, %s111
    %s115 = sphi 0, %s114
    %s131 = sphi 0, %s115
    %s137 = sphi 0, %s139
    %s140 = sphi 0, %s137
    %s141 = sphi 0, %s140
    %s157 = sphi 0, %s141
  $region4: #{conv_block_nhwc.4} parent=0 // loop_header_branch
    %15 = sbr.rel (%p13) target = $region8
  $region5: #{conv_block_nhwc.4} parent=0 // loop_body
    %s17 = ssub.s32 %s12, 1
    %s18 = ssub.s32 %s12, 2
    %s19 = sadd.s32 %s12, 1
    %s20 = ssub.s32 %s12, %s19
    %p21 = scmp.eq.s32.totalorder %s20, 0
    %s23 = sadd.s32 %s22, 1
    %s24 = scalar_select %p21, %s22, %s23
    %p27 = pneg %p21
    %p28 = scmp.eq.s32.totalorder %s12, 1
    %p29 = por %p27, %p28
    %p30 = scmp.ne.s32.totalorder %s22, %s25
    %p31 = scmp.eq.s32.totalorder %s12, 0
    %p32 = por %p30, %p31
    %p33 = scmp.ne.s32.totalorder %s22, %s25
    %p34 = scmp.eq.s32.totalorder %s17, 1
    %p35 = por %p33, %p34
    %p36 = scmp.ne.s32.totalorder %s25, %s26
    %p37 = scmp.eq.s32.totalorder %s17, 0
    %p38 = por %p36, %p37
    %p39 = scmp.ne.s32.totalorder %s25, %s26
    %p40 = scmp.eq.s32.totalorder %s18, 1
    %p41 = por %p39, %p40
    %p43 = scmp.ne.s32.totalorder %s26, %s42
    %p44 = scmp.eq.s32.totalorder %s18, 0
    %p45 = por %p43, %p44
    %s47 = sadd.s32 %s46, 1
    %p50 = scmp.eq.s32.totalorder %s12, 1
    %p51 = scmp.ne.s32.totalorder %s46, %s48
    %p52 = scmp.eq.s32.totalorder %s12, 0
    %p53 = por %p51, %p52
    %p54 = scmp.ne.s32.totalorder %s46, %s48
    %p55 = scmp.eq.s32.totalorder %s17, 1
    %p56 = por %p54, %p55
    %p57 = scmp.ne.s32.totalorder %s48, %s49
    %p58 = scmp.eq.s32.totalorder %s17, 0
    %p59 = por %p57, %p58
    %p60 = scmp.ne.s32.totalorder %s48, %s49
    %p61 = scmp.eq.s32.totalorder %s18, 1
    %p62 = por %p60, %p61
    %p64 = scmp.ne.s32.totalorder %s49, %s63
    %p65 = scmp.eq.s32.totalorder %s18, 0
    %p66 = por %p64, %p65
    %s68 = sadd.s32 %s67, 1
    %p71 = scmp.eq.s32.totalorder %s12, 1
    %p72 = scmp.ne.s32.totalorder %s67, %s69
    %p73 = scmp.eq.s32.totalorder %s12, 0
    %p74 = por %p72, %p73
    %p75 = scmp.ne.s32.totalorder %s67, %s69
    %p76 = scmp.eq.s32.totalorder %s17, 1
    %p77 = por %p75, %p76
    %p78 = scmp.ne.s32.totalorder %s69, %s70
    %p79 = scmp.eq.s32.totalorder %s17, 0
    %p80 = por %p78, %p79
    %p81 = scmp.ne.s32.totalorder %s69, %s70
    %p82 = scmp.eq.s32.totalorder %s18, 1
    %p83 = por %p81, %p82
    %p85 = scmp.ne.s32.totalorder %s70, %s84
    %p86 = scmp.eq.s32.totalorder %s18, 0
    %p87 = por %p85, %p86
    %s89 = sadd.s32 %s88, 1
    %p92 = scmp.eq.s32.totalorder %s12, 1
    %p93 = scmp.ne.s32.totalorder %s88, %s90
    %p94 = scmp.eq.s32.totalorder %s12, 0
    %p95 = por %p93, %p94
    %p96 = scmp.ne.s32.totalorder %s88, %s90
    %p97 = scmp.eq.s32.totalorder %s17, 1
    %p98 = por %p96, %p97
    %p99 = scmp.ne.s32.totalorder %s90, %s91
    %p100 = scmp.eq.s32.totalorder %s17, 0
    %p101 = por %p99, %p100
    %p102 = scmp.ne.s32.totalorder %s90, %s91
    %p103 = scmp.eq.s32.totalorder %s18, 1
    %p104 = por %p102, %p103
    %p106 = scmp.ne.s32.totalorder %s91, %s105
    %p107 = scmp.eq.s32.totalorder %s18, 0
    %p108 = por %p106, %p107
    %s109 = ssub.s32 %s12, %s19
    %p110 = scmp.eq.s32.totalorder %s109, 0
    %s112 = sadd.s32 %s111, 1
    %s113 = scalar_select %p110, %s111, %s112
    %p116 = pneg %p110
    %p117 = scmp.eq.s32.totalorder %s12, 1
    %p118 = por %p116, %p117
    %p119 = scmp.ne.s32.totalorder %s111, %s114
    %p120 = scmp.eq.s32.totalorder %s12, 0
    %p121 = por %p119, %p120
    %p122 = scmp.ne.s32.totalorder %s111, %s114
    %p123 = scmp.eq.s32.totalorder %s17, 1
    %p124 = por %p122, %p123
    %p125 = scmp.ne.s32.totalorder %s114, %s115
    %p126 = scmp.eq.s32.totalorder %s17, 0
    %p127 = por %p125, %p126
    %p128 = scmp.ne.s32.totalorder %s114, %s115
    %p129 = scmp.eq.s32.totalorder %s18, 1
    %p130 = por %p128, %p129
    %p132 = scmp.ne.s32.totalorder %s115, %s131
    %p133 = scmp.eq.s32.totalorder %s18, 0
    %p134 = por %p132, %p133
    %s135 = ssub.s32 %s12, %s19
    %p136 = scmp.eq.s32.totalorder %s135, 0
    %s138 = sadd.s32 %s137, 1
    %s139 = scalar_select %p136, %s137, %s138
    %p142 = pneg %p136
    %p143 = scmp.eq.s32.totalorder %s12, 1
    %p144 = por %p142, %p143
    %p145 = scmp.ne.s32.totalorder %s137, %s140
    %p146 = scmp.eq.s32.totalorder %s12, 0
    %p147 = por %p145, %p146
    %p148 = scmp.ne.s32.totalorder %s137, %s140
    %p149 = scmp.eq.s32.totalorder %s17, 1
    %p150 = por %p148, %p149
    %p151 = scmp.ne.s32.totalorder %s140, %s141
    %p152 = scmp.eq.s32.totalorder %s17, 0
    %p153 = por %p151, %p152
    %p154 = scmp.ne.s32.totalorder %s140, %s141
    %p155 = scmp.eq.s32.totalorder %s18, 1
    %p156 = por %p154, %p155
    %p158 = scmp.ne.s32.totalorder %s141, %s157
    %p159 = scmp.eq.s32.totalorder %s18, 0
    %p160 = por %p158, %p159
    %p161 = scmp.le.s32.totalorder 1, %s12
    %p162 = scmp.lt.s32.totalorder %s12, 3
    %p163 = pnand %p161, %p162
    %p164 = pneg %p163
    // Predicated region
    $region9: #{conv_block_nhwc.4} parent=5 // pred_check
      _
    $region10: #{conv_block_nhwc.4} parent=5 // pred_check_branch
      %166 = sbr.rel (%p163) target = $region12
    $region11: #{conv_block_nhwc.4} parent=5 // pred_region
      %s167 = ssub.s32 %s12, 1
      // Predicated region
      $region13: #{conv_block_nhwc.4} parent=11 // pred_check
        %p168 = pneg %p59
      $region14: #{conv_block_nhwc.4} parent=11 // pred_check_branch
        %170 = sbr.rel (%p168) target = $region16
      $region15: #{conv_block_nhwc.4} parent=11 // pred_region
        _
      $region16: #{conv_block_nhwc.4} parent=11 // pred_fallthru
        _
      // Predicated region
      $region17: #{conv_block_nhwc.4} parent=11 // pred_check
        %p171 = pneg %p80
      $region18: #{conv_block_nhwc.4} parent=11 // pred_check_branch
        %173 = sbr.rel (%p171) target = $region20
      $region19: #{conv_block_nhwc.4} parent=11 // pred_region
        _
      $region20: #{conv_block_nhwc.4} parent=11 // pred_fallthru
        _
      // Predicated region
      $region21: #{conv_block_nhwc.4} parent=11 // pred_check
        %p174 = pneg %p101
      $region22: #{conv_block_nhwc.4} parent=11 // pred_check_branch
        %176 = sbr.rel (%p174) target = $region24
      $region23: #{conv_block_nhwc.4} parent=11 // pred_region
        _
      $region24: #{conv_block_nhwc.4} parent=11 // pred_fallthru
        _
    $region12: #{conv_block_nhwc.4} parent=5 // pred_fallthru
      _
    %p177 = scmp.lt.s32.totalorder %s12, 2
    // Predicated region
    $region25: #{conv_block_nhwc.4} parent=5 // pred_check
      %p178 = pneg %p177
    $region26: #{conv_block_nhwc.4} parent=5 // pred_check_branch
      %180 = sbr.rel (%p178) target = $region28
    $region27: #{conv_block_nhwc.4} parent=5 // pred_region
      // Predicated region
      $region29: #{conv_block_nhwc.4} parent=27 // pred_check
        %p181 = pneg %p32
      $region30: #{conv_block_nhwc.4} parent=27 // pred_check_branch
        %183 = sbr.rel (%p181) target = $region32
      $region31: #{conv_block_nhwc.4} parent=27 // pred_region
        %p184 = scmp.lt.s32.totalorder %s12, 1
        %s185 = scalar_select %p184, %s12, 1
        %s186 = smul.addr %s185, 32
        %s187 = smul.addr %s186, 8
        %s188 = scalar_lea.vmem %s0, %s187
      $region32: #{conv_block_nhwc.4} parent=27 // pred_fallthru
        _
    $region28: #{conv_block_nhwc.4} parent=5 // pred_fallthru
      _
    %p189 = scmp.le.s32.totalorder 1, %s12
    %p190 = scmp.lt.s32.totalorder %s12, 3
    %p191 = pnand %p189, %p190
    %p192 = pneg %p191
    // Predicated region
    $region33: #{conv_block_nhwc.4} parent=5 // pred_check
      _
    $region34: #{conv_block_nhwc.4} parent=5 // pred_check_branch
      %194 = sbr.rel (%p191) target = $region36
    $region35: #{conv_block_nhwc.4} parent=5 // pred_region
      %s195 = ssub.s32 %s12, 1
      %p196 = scmp.lt.s32.totalorder %s17, 1
      %s197 = scalar_select %p196, %s17, 1
      %s198 = smul.addr %s197, 32
      %s199 = smul.addr %s198, 8
      %s200 = scalar_lea.vmem %s0, %s199
      %p201 = pneg %p38
      %p202 = pneg %p35
      %p203 = pneg %p59
      %p204 = pneg %p56
      %p205 = pneg %p80
      %p206 = pneg %p77
      %p207 = pneg %p101
      %p208 = pneg %p98
      %p209 = pneg %p127
      %p210 = pneg %p124
      %p211 = scmp.lt.s32.totalorder %s17, 1
      %s212 = scalar_select %p211, %s17, 1
      %s213 = smul.addr %s212, 32
      %s214 = smul.addr %s213, 8
      %s215 = scalar_lea.vmem %s4, %s214
      %p216 = pneg %p153
      %p217 = pneg %p150
      %p218 = scmp.lt.s32.totalorder %s17, 1
      %s219 = scalar_select %p218, %s17, 1
      %s220 = smul.addr %s219, 2
      %s221 = scalar_lea.vmem %s5, %s220
      %p222 = scmp.lt.s32.totalorder %s17, 1
      %s223 = scalar_select %p222, %s17, 1
      %s224 = smul.addr %s223, 32
      %s225 = smul.addr %s224, 8
      %s226 = scalar_lea.vmem %s0, %s225
      %p227 = scmp.lt.s32.totalorder %s17, 1
      %s228 = scalar_select %p227, %s17, 1
      %s229 = smul.addr %s228, 32
      %s230 = smul.addr %s229, 8
      %s231 = scalar_lea.vmem %s4, %s230
      %p232 = scmp.lt.s32.totalorder %s17, 1
      %s233 = scalar_select %p232, %s17, 1
      %s234 = smul.addr %s233, 2
      %s235 = scalar_lea.vmem %s5, %s234
      %v236 = vld [vmem:[%s2] sm:$0x1]
      %v237 = vld [vmem:[%s3] sm:$0x1]
      %v238 = vld [vmem:[%s226] sm:$0xff]
      %v239 = vld [vmem:[%s226 + $0x8] sm:$0xff]
      %v240 = vld [vmem:[%s226 + $0x10] sm:$0xff]
      %v241 = vld [vmem:[%s226 + $0x18] sm:$0xff]
      %v242 = vld [vmem:[%s226 + $0x20] sm:$0xff]
      %v243 = vld [vmem:[%s226 + $0x28] sm:$0xff]
      %v244 = vld [vmem:[%s226 + $0x30] sm:$0xff]
      %v245 = vld [vmem:[%s226 + $0x38] sm:$0xff]
      %v246 = vld [vmem:[%s226 + $0x40] sm:$0xff]
      %v247 = vld [vmem:[%s226 + $0x48] sm:$0xff]
      %v248 = vld [vmem:[%s226 + $0x50] sm:$0xff]
      %v249 = vld [vmem:[%s226 + $0x58] sm:$0xff]
      %v250 = vld [vmem:[%s226 + $0x60] sm:$0xff]
      %v251 = vld [vmem:[%s226 + $0x68] sm:$0xff]
      %v252 = vld [vmem:[%s226 + $0x70] sm:$0xff]
      %v253 = vld [vmem:[%s226 + $0x78] sm:$0xff]
      %v254 = vld [vmem:[%s226 + $0x80] sm:$0xff]
      %v255 = vld [vmem:[%s226 + $0x88] sm:$0xff]
      %v256 = vld [vmem:[%s226 + $0x90] sm:$0xff]
      %v257 = vld [vmem:[%s226 + $0x98] sm:$0xff]
      %v258 = vld [vmem:[%s226 + $0xa0] sm:$0xff]
      %v259 = vld [vmem:[%s226 + $0xa8] sm:$0xff]
      %v260 = vld [vmem:[%s226 + $0xb0] sm:$0xff]
      %v261 = vld [vmem:[%s226 + $0xb8] sm:$0xff]
      %v262 = vld [vmem:[%s226 + $0xc0] sm:$0xff]
      %v263 = vld [vmem:[%s226 + $0xc8] sm:$0xff]
      %v264 = vld [vmem:[%s226 + $0xd0] sm:$0xff]
      %v265 = vld [vmem:[%s226 + $0xd8] sm:$0xff]
      %v266 = vld [vmem:[%s226 + $0xe0] sm:$0xff]
      %v267 = vld [vmem:[%s226 + $0xe8] sm:$0xff]
      %v268 = vld [vmem:[%s226 + $0xf0] sm:$0xff]
      %v269 = vld [vmem:[%s226 + $0xf8] sm:$0xff]
      %v271 = vperm.slane %v236, 0
      %v273 = vmul.f32 %v238, %v271
      %v274 = vmul.f32 %v239, %v271
      %v275 = vmul.f32 %v240, %v271
      %v276 = vmul.f32 %v241, %v271
      %v277 = vmul.f32 %v242, %v271
      %v278 = vmul.f32 %v243, %v271
      %v279 = vmul.f32 %v244, %v271
      %v280 = vmul.f32 %v245, %v271
      %v281 = vmul.f32 %v246, %v271
      %v282 = vmul.f32 %v247, %v271
      %v283 = vmul.f32 %v248, %v271
      %v284 = vmul.f32 %v249, %v271
      %v285 = vmul.f32 %v250, %v271
      %v286 = vmul.f32 %v251, %v271
      %v287 = vmul.f32 %v252, %v271
      %v288 = vmul.f32 %v253, %v271
      %v289 = vmul.f32 %v254, %v271
      %v290 = vmul.f32 %v255, %v271
      %v291 = vmul.f32 %v256, %v271
      %v292 = vmul.f32 %v257, %v271
      %v293 = vmul.f32 %v258, %v271
      %v294 = vmul.f32 %v259, %v271
      %v295 = vmul.f32 %v260, %v271
      %v296 = vmul.f32 %v261, %v271
      %v297 = vmul.f32 %v262, %v271
      %v298 = vmul.f32 %v263, %v271
      %v299 = vmul.f32 %v264, %v271
      %v300 = vmul.f32 %v265, %v271
      %v301 = vmul.f32 %v266, %v271
      %v302 = vmul.f32 %v267, %v271
      %v303 = vmul.f32 %v268, %v271
      %v304 = vmul.f32 %v269, %v271
      %v306 = vperm.slane %v237, 0
      %v308 = vadd.f32 %v273, %v306
      %v309 = vadd.f32 %v274, %v306
      %v310 = vadd.f32 %v275, %v306
      %v311 = vadd.f32 %v276, %v306
      %v312 = vadd.f32 %v277, %v306
      %v313 = vadd.f32 %v278, %v306
      %v314 = vadd.f32 %v279, %v306
      %v315 = vadd.f32 %v280, %v306
      %v316 = vadd.f32 %v281, %v306
      %v317 = vadd.f32 %v282, %v306
      %v318 = vadd.f32 %v283, %v306
      %v319 = vadd.f32 %v284, %v306
      %v320 = vadd.f32 %v285, %v306
      %v321 = vadd.f32 %v286, %v306
      %v322 = vadd.f32 %v287, %v306
      %v323 = vadd.f32 %v288, %v306
      %v324 = vadd.f32 %v289, %v306
      %v325 = vadd.f32 %v290, %v306
      %v326 = vadd.f32 %v291, %v306
      %v327 = vadd.f32 %v292, %v306
      %v328 = vadd.f32 %v293, %v306
      %v329 = vadd.f32 %v294, %v306
      %v330 = vadd.f32 %v295, %v306
      %v331 = vadd.f32 %v296, %v306
      %v332 = vadd.f32 %v297, %v306
      %v333 = vadd.f32 %v298, %v306
      %v334 = vadd.f32 %v299, %v306
      %v335 = vadd.f32 %v300, %v306
      %v336 = vadd.f32 %v301, %v306
      %v337 = vadd.f32 %v302, %v306
      %v338 = vadd.f32 %v303, %v306
      %v339 = vadd.f32 %v304, %v306
      %v340 = vmax.f32 %v308, 0.0
      %v341 = vmax.f32 %v309, 0.0
      %v342 = vmax.f32 %v310, 0.0
      %v343 = vmax.f32 %v311, 0.0
      %v344 = vmax.f32 %v312, 0.0
      %v345 = vmax.f32 %v313, 0.0
      %v346 = vmax.f32 %v314, 0.0
      %v347 = vmax.f32 %v315, 0.0
      %v348 = vmax.f32 %v316, 0.0
      %v349 = vmax.f32 %v317, 0.0
      %v350 = vmax.f32 %v318, 0.0
      %v351 = vmax.f32 %v319, 0.0
      %v352 = vmax.f32 %v320, 0.0
      %v353 = vmax.f32 %v321, 0.0
      %v354 = vmax.f32 %v322, 0.0
      %v355 = vmax.f32 %v323, 0.0
      %v356 = vmax.f32 %v324, 0.0
      %v357 = vmax.f32 %v325, 0.0
      %v358 = vmax.f32 %v326, 0.0
      %v359 = vmax.f32 %v327, 0.0
      %v360 = vmax.f32 %v328, 0.0
      %v361 = vmax.f32 %v329, 0.0
      %v362 = vmax.f32 %v330, 0.0
      %v363 = vmax.f32 %v331, 0.0
      %v364 = vmax.f32 %v332, 0.0
      %v365 = vmax.f32 %v333, 0.0
      %v366 = vmax.f32 %v334, 0.0
      %v367 = vmax.f32 %v335, 0.0
      %v368 = vmax.f32 %v336, 0.0
      %v369 = vmax.f32 %v337, 0.0
      %v370 = vmax.f32 %v338, 0.0
      %v371 = vmax.f32 %v339, 0.0
      %s372 = scalar_lea.vmem [#allocation2], 24
      %vm373 = vcmask 64512
      %374 = vst.msk [vmem:[%s372 + $0x1] sm:$0xff] %vm373, %v340
      %375 = vst.msk [vmem:[%s372 + $0x9] sm:$0xff] %vm373, %v341
      %376 = vst.msk [vmem:[%s372 + $0x19] sm:$0xff] %vm373, %v342
      %377 = vst.msk [vmem:[%s372 + $0x21] sm:$0xff] %vm373, %v343
      %378 = vst.msk [vmem:[%s372 + $0x31] sm:$0xff] %vm373, %v344
      %379 = vst.msk [vmem:[%s372 + $0x39] sm:$0xff] %vm373, %v345
      %380 = vst.msk [vmem:[%s372 + $0x49] sm:$0xff] %vm373, %v346
      %381 = vst.msk [vmem:[%s372 + $0x51] sm:$0xff] %vm373, %v347
      %382 = vst.msk [vmem:[%s372 + $0x61] sm:$0xff] %vm373, %v348
      %383 = vst.msk [vmem:[%s372 + $0x69] sm:$0xff] %vm373, %v349
      %384 = vst.msk [vmem:[%s372 + $0x79] sm:$0xff] %vm373, %v350
      %385 = vst.msk [vmem:[%s372 + $0x81] sm:$0xff] %vm373, %v351
      %386 = vst.msk [vmem:[%s372 + $0x91] sm:$0xff] %vm373, %v352
      %387 = vst.msk [vmem:[%s372 + $0x99] sm:$0xff] %vm373, %v353
      %388 = vst.msk [vmem:[%s372 + $0xa9] sm:$0xff] %vm373, %v354
      %389 = vst.msk [vmem:[%s372 + $0xb1] sm:$0xff] %vm373, %v355
      %390 = vst.msk [vmem:[%s372 + $0xc1] sm:$0xff] %vm373, %v356
      %391 = vst.msk [vmem:[%s372 + $0xc9] sm:$0xff] %vm373, %v357
      %392 = vst.msk [vmem:[%s372 + $0xd9] sm:$0xff] %vm373, %v358
      %393 = vst.msk [vmem:[%s372 + $0xe1] sm:$0xff] %vm373, %v359
      %394 = vst.msk [vmem:[%s372 + $0xf1] sm:$0xff] %vm373, %v360
      %395 = vst.msk [vmem:[%s372 + $0xf9] sm:$0xff] %vm373, %v361
      %396 = vst.msk [vmem:[%s372 + $0x109] sm:$0xff] %vm373, %v362
      %397 = vst.msk [vmem:[%s372 + $0x111] sm:$0xff] %vm373, %v363
      %398 = vst.msk [vmem:[%s372 + $0x121] sm:$0xff] %vm373, %v364
      %399 = vst.msk [vmem:[%s372 + $0x129] sm:$0xff] %vm373, %v365
      %400 = vst.msk [vmem:[%s372 + $0x139] sm:$0xff] %vm373, %v366
      %401 = vst.msk [vmem:[%s372 + $0x141] sm:$0xff] %vm373, %v367
      %402 = vst.msk [vmem:[%s372 + $0x151] sm:$0xff] %vm373, %v368
      %403 = vst.msk [vmem:[%s372 + $0x159] sm:$0xff] %vm373, %v369
      %404 = vst.msk [vmem:[%s372 + $0x169] sm:$0xff] %vm373, %v370
      %405 = vst.msk [vmem:[%s372 + $0x171] sm:$0xff] %vm373, %v371
      %406 = vst.msk [vmem:[#allocation2] sm:$0xff] %vm373, 0.0
      %407 = vst.msk [vmem:[#allocation2 + $0x8] sm:$0xff] %vm373, 0.0
      %vm408 = vcmask 58368
      %409 = vst.msk [vmem:[#allocation2 + $0x10] sm:$0x3] %vm408, 0.0
      %s410 = scalar_lea.vmem [#allocation2], 408
      %411 = vst.msk [vmem:[%s410] sm:$0xff] %vm373, 0.0
      %412 = vst.msk [vmem:[%s410 + $0x8] sm:$0xff] %vm373, 0.0
      %413 = vst.msk [vmem:[%s410 + $0x10] sm:$0x3] %vm408, 0.0
      %vm414 = vcmask 57344
      %415 = vst.msk [vmem:[%s372] sm:$0x1] %vm414, 0.0
      %416 = vst.msk [vmem:[%s372 + $0x18] sm:$0x1] %vm414, 0.0
      %417 = vst.msk [vmem:[%s372 + $0x30] sm:$0x1] %vm414, 0.0
      %418 = vst.msk [vmem:[%s372 + $0x48] sm:$0x1] %vm414, 0.0
      %419 = vst.msk [vmem:[%s372 + $0x60] sm:$0x1] %vm414, 0.0
      %420 = vst.msk [vmem:[%s372 + $0x78] sm:$0x1] %vm414, 0.0
      %421 = vst.msk [vmem:[%s372 + $0x90] sm:$0x1] %vm414, 0.0
      %422 = vst.msk [vmem:[%s372 + $0xa8] sm:$0x1] %vm414, 0.0
      %423 = vst.msk [vmem:[%s372 + $0xc0] sm:$0x1] %vm414, 0.0
      %424 = vst.msk [vmem:[%s372 + $0xd8] sm:$0x1] %vm414, 0.0
      %425 = vst.msk [vmem:[%s372 + $0xf0] sm:$0x1] %vm414, 0.0
      %426 = vst.msk [vmem:[%s372 + $0x108] sm:$0x1] %vm414, 0.0
      %427 = vst.msk [vmem:[%s372 + $0x120] sm:$0x1] %vm414, 0.0
      %428 = vst.msk [vmem:[%s372 + $0x138] sm:$0x1] %vm414, 0.0
      %429 = vst.msk [vmem:[%s372 + $0x150] sm:$0x1] %vm414, 0.0
      %430 = vst.msk [vmem:[%s372 + $0x168] sm:$0x1] %vm414, 0.0
      %431 = vst.msk [vmem:[%s372 + $0x11] sm:$0x1] %vm414, 0.0
      %432 = vst.msk [vmem:[%s372 + $0x29] sm:$0x1] %vm414, 0.0
      %433 = vst.msk [vmem:[%s372 + $0x41] sm:$0x1] %vm414, 0.0
      %434 = vst.msk [vmem:[%s372 + $0x59] sm:$0x1] %vm414, 0.0
      %435 = vst.msk [vmem:[%s372 + $0x71] sm:$0x1] %vm414, 0.0
      %436 = vst.msk [vmem:[%s372 + $0x89] sm:$0x1] %vm414, 0.0
      %437 = vst.msk [vmem:[%s372 + $0xa1] sm:$0x1] %vm414, 0.0
      %438 = vst.msk [vmem:[%s372 + $0xb9] sm:$0x1] %vm414, 0.0
      %439 = vst.msk [vmem:[%s372 + $0xd1] sm:$0x1] %vm414, 0.0
      %440 = vst.msk [vmem:[%s372 + $0xe9] sm:$0x1] %vm414, 0.0
      %441 = vst.msk [vmem:[%s372 + $0x101] sm:$0x1] %vm414, 0.0
      %442 = vst.msk [vmem:[%s372 + $0x119] sm:$0x1] %vm414, 0.0
      %443 = vst.msk [vmem:[%s372 + $0x131] sm:$0x1] %vm414, 0.0
      %444 = vst.msk [vmem:[%s372 + $0x149] sm:$0x1] %vm414, 0.0
      %445 = vst.msk [vmem:[%s372 + $0x161] sm:$0x1] %vm414, 0.0
      %446 = vst.msk [vmem:[%s372 + $0x179] sm:$0x1] %vm414, 0.0
      %v447 = vld [vmem:[#allocation2] sm:$0xff]
      %v448 = vld [vmem:[#allocation2 + $0x8] sm:$0xff]
      %v449 = vld [vmem:[#allocation2 + $0x18] sm:$0xff]
      %v450 = vld [vmem:[#allocation2 + $0x20] sm:$0xff]
      %v451 = vld [vmem:[#allocation2 + $0x30] sm:$0xff]
      %v452 = vld [vmem:[#allocation2 + $0x38] sm:$0xff]
      %v453 = vld [vmem:[#allocation2 + $0x48] sm:$0xff]
      %v454 = vld [vmem:[#allocation2 + $0x50] sm:$0xff]
      %v455 = vld [vmem:[#allocation2 + $0x60] sm:$0xff]
      %v456 = vld [vmem:[#allocation2 + $0x68] sm:$0xff]
      %v457 = vld [vmem:[#allocation2 + $0x78] sm:$0xff]
      %v458 = vld [vmem:[#allocation2 + $0x80] sm:$0xff]
      %v459 = vld [vmem:[#allocation2 + $0x90] sm:$0xff]
      %v460 = vld [vmem:[#allocation2 + $0x98] sm:$0xff]
      %v461 = vld [vmem:[#allocation2 + $0xa8] sm:$0xff]
      %v462 = vld [vmem:[#allocation2 + $0xb0] sm:$0xff]
      %v463 = vld [vmem:[#allocation2 + $0xc0] sm:$0xff]
      %v464 = vld [vmem:[#allocation2 + $0xc8] sm:$0xff]
      %v465 = vld [vmem:[#allocation2 + $0xd8] sm:$0xff]
      %v466 = vld [vmem:[#allocation2 + $0xe0] sm:$0xff]
      %v467 = vld [vmem:[#allocation2 + $0xf0] sm:$0xff]
      %v468 = vld [vmem:[#allocation2 + $0xf8] sm:$0xff]
      %v469 = vld [vmem:[#allocation2 + $0x108] sm:$0xff]
      %v470 = vld [vmem:[#allocation2 + $0x110] sm:$0xff]
      %v471 = vld [vmem:[#allocation2 + $0x120] sm:$0xff]
      %v472 = vld [vmem:[#allocation2 + $0x128] sm:$0xff]
      %v473 = vld [vmem:[#allocation2 + $0x138] sm:$0xff]
      %v474 = vld [vmem:[#allocation2 + $0x140] sm:$0xff]
      %v475 = vld [vmem:[#allocation2 + $0x150] sm:$0xff]
      %v476 = vld [vmem:[#allocation2 + $0x158] sm:$0xff]
      %v477 = vld [vmem:[#allocation2 + $0x168] sm:$0xff]
      %v478 = vld [vmem:[#allocation2 + $0x170] sm:$0xff]
      %479 = vst.msk [vmem:[#allocation3] sm:$0xff] %vm373, %v447
      %480 = vst.msk [vmem:[#allocation3 + $0x8] sm:$0xff] %vm373, %v448
      %481 = vst.msk [vmem:[#allocation3 + $0x10] sm:$0xff] %vm373, %v449
      %482 = vst.msk [vmem:[#allocation3 + $0x18] sm:$0xff] %vm373, %v450
      %483 = vst.msk [vmem:[#allocation3 + $0x20] sm:$0xff] %vm373, %v451
      %484 = vst.msk [vmem:[#allocation3 + $0x28] sm:$0xff] %vm373, %v452
      %485 = vst.msk [vmem:[#allocation3 + $0x30] sm:$0xff] %vm373, %v453
      %486 = vst.msk [vmem:[#allocation3 + $0x38] sm:$0xff] %vm373, %v454
      %487 = vst.msk [vmem:[#allocation3 + $0x40] sm:$0xff] %vm373, %v455
      %488 = vst.msk [vmem:[#allocation3 + $0x48] sm:$0xff] %vm373, %v456
      %489 = vst.msk [vmem:[#allocation3 + $0x50] sm:$0xff] %vm373, %v457
      %490 = vst.msk [vmem:[#allocation3 + $0x58] sm:$0xff] %vm373, %v458
      %491 = vst.msk [vmem:[#allocation3 + $0x60] sm:$0xff] %vm373, %v459
      %492 = vst.msk [vmem:[#allocation3 + $0x68] sm:$0xff] %vm373, %v460
      %493 = vst.msk [vmem:[#allocation3 + $0x70] sm:$0xff] %vm373, %v461
      %494 = vst.msk [vmem:[#allocation3 + $0x78] sm:$0xff] %vm373, %v462
      %495 = vst.msk [vmem:[#allocation3 + $0x80] sm:$0xff] %vm373, %v463
      %496 = vst.msk [vmem:[#allocation3 + $0x88] sm:$0xff] %vm373, %v464
      %497 = vst.msk [vmem:[#allocation3 + $0x90] sm:$0xff] %vm373, %v465
      %498 = vst.msk [vmem:[#allocation3 + $0x98] sm:$0xff] %vm373, %v466
      %499 = vst.msk [vmem:[#allocation3 + $0xa0] sm:$0xff] %vm373, %v467
      %500 = vst.msk [vmem:[#allocation3 + $0xa8] sm:$0xff] %vm373, %v468
      %501 = vst.msk [vmem:[#allocation3 + $0xb0] sm:$0xff] %vm373, %v469
      %502 = vst.msk [vmem:[#allocation3 + $0xb8] sm:$0xff] %vm373, %v470
      %503 = vst.msk [vmem:[#allocation3 + $0xc0] sm:$0xff] %vm373, %v471
      %504 = vst.msk [vmem:[#allocation3 + $0xc8] sm:$0xff] %vm373, %v472
      %505 = vst.msk [vmem:[#allocation3 + $0xd0] sm:$0xff] %vm373, %v473
      %506 = vst.msk [vmem:[#allocation3 + $0xd8] sm:$0xff] %vm373, %v474
      %507 = vst.msk [vmem:[#allocation3 + $0xe0] sm:$0xff] %vm373, %v475
      %508 = vst.msk [vmem:[#allocation3 + $0xe8] sm:$0xff] %vm373, %v476
      %509 = vst.msk [vmem:[#allocation3 + $0xf0] sm:$0xff] %vm373, %v477
      %510 = vst.msk [vmem:[#allocation3 + $0xf8] sm:$0xff] %vm373, %v478
      %v511 = vld [vmem:[#allocation2 + $0x1] sm:$0xff]
      %v512 = vld [vmem:[#allocation2 + $0x9] sm:$0xff]
      %v513 = vld [vmem:[#allocation2 + $0x19] sm:$0xff]
      %v514 = vld [vmem:[#allocation2 + $0x21] sm:$0xff]
      %v515 = vld [vmem:[#allocation2 + $0x31] sm:$0xff]
      %v516 = vld [vmem:[#allocation2 + $0x39] sm:$0xff]
      %v517 = vld [vmem:[#allocation2 + $0x49] sm:$0xff]
      %v518 = vld [vmem:[#allocation2 + $0x51] sm:$0xff]
      %v519 = vld [vmem:[#allocation2 + $0x61] sm:$0xff]
      %v520 = vld [vmem:[#allocation2 + $0x69] sm:$0xff]
      %v521 = vld [vmem:[#allocation2 + $0x79] sm:$0xff]
      %v522 = vld [vmem:[#allocation2 + $0x81] sm:$0xff]
      %v523 = vld [vmem:[#allocation2 + $0x91] sm:$0xff]
      %v524 = vld [vmem:[#allocation2 + $0x99] sm:$0xff]
      %v525 = vld [vmem:[#allocation2 + $0xa9] sm:$0xff]
      %v526 = vld [vmem:[#allocation2 + $0xb1] sm:$0xff]
      %v527 = vld [vmem:[#allocation2 + $0xc1] sm:$0xff]
      %v528 = vld [vmem:[#allocation2 + $0xc9] sm:$0xff]
      %v529 = vld [vmem:[#allocation2 + $0xd9] sm:$0xff]
      %v530 = vld [vmem:[#allocation2 + $0xe1] sm:$0xff]
      %v531 = vld [vmem:[#allocation2 + $0xf1] sm:$0xff]
      %v532 = vld [vmem:[#allocation2 + $0xf9] sm:$0xff]
      %v533 = vld [vmem:[#allocation2 + $0x109] sm:$0xff]
      %v534 = vld [vmem:[#allocation2 + $0x111] sm:$0xff]
      %v535 = vld [vmem:[#allocation2 + $0x121] sm:$0xff]
      %v536 = vld [vmem:[#allocation2 + $0x129] sm:$0xff]
      %v537 = vld [vmem:[#allocation2 + $0x139] sm:$0xff]
      %v538 = vld [vmem:[#allocation2 + $0x141] sm:$0xff]
      %v539 = vld [vmem:[#allocation2 + $0x151] sm:$0xff]
      %v540 = vld [vmem:[#allocation2 + $0x159] sm:$0xff]
      %v541 = vld [vmem:[#allocation2 + $0x169] sm:$0xff]
      %v542 = vld [vmem:[#allocation2 + $0x171] sm:$0xff]
      %575 = vrot.lane.b32.xlu0 %v511, 8
      %v576 = vpop.permute.xlu0 %575
      %577 = vrot.lane.b32.xlu0 %v512, 8
      %v578 = vpop.permute.xlu0 %577
      %579 = vrot.lane.b32.xlu0 %v513, 8
      %v580 = vpop.permute.xlu0 %579
      %581 = vrot.lane.b32.xlu0 %v514, 8
      %v582 = vpop.permute.xlu0 %581
      %583 = vrot.lane.b32.xlu0 %v515, 8
      %v584 = vpop.permute.xlu0 %583
      %585 = vrot.lane.b32.xlu0 %v516, 8
      %v586 = vpop.permute.xlu0 %585
      %587 = vrot.lane.b32.xlu0 %v517, 8
      %v588 = vpop.permute.xlu0 %587
      %589 = vrot.lane.b32.xlu0 %v518, 8
      %v590 = vpop.permute.xlu0 %589
      %591 = vrot.lane.b32.xlu0 %v519, 8
      %v592 = vpop.permute.xlu0 %591
      %593 = vrot.lane.b32.xlu0 %v520, 8
      %v594 = vpop.permute.xlu0 %593
      %595 = vrot.lane.b32.xlu0 %v521, 8
      %v596 = vpop.permute.xlu0 %595
      %597 = vrot.lane.b32.xlu0 %v522, 8
      %v598 = vpop.permute.xlu0 %597
      %599 = vrot.lane.b32.xlu0 %v523, 8
      %v600 = vpop.permute.xlu0 %599
      %601 = vrot.lane.b32.xlu0 %v524, 8
      %v602 = vpop.permute.xlu0 %601
      %603 = vrot.lane.b32.xlu0 %v525, 8
      %v604 = vpop.permute.xlu0 %603
      %605 = vrot.lane.b32.xlu0 %v526, 8
      %v606 = vpop.permute.xlu0 %605
      %607 = vrot.lane.b32.xlu0 %v527, 8
      %v608 = vpop.permute.xlu0 %607
      %609 = vrot.lane.b32.xlu0 %v528, 8
      %v610 = vpop.permute.xlu0 %609
      %611 = vrot.lane.b32.xlu0 %v529, 8
      %v612 = vpop.permute.xlu0 %611
      %613 = vrot.lane.b32.xlu0 %v530, 8
      %v614 = vpop.permute.xlu0 %613
      %615 = vrot.lane.b32.xlu0 %v531, 8
      %v616 = vpop.permute.xlu0 %615
      %617 = vrot.lane.b32.xlu0 %v532, 8
      %v618 = vpop.permute.xlu0 %617
      %619 = vrot.lane.b32.xlu0 %v533, 8
      %v620 = vpop.permute.xlu0 %619
      %621 = vrot.lane.b32.xlu0 %v534, 8
      %v622 = vpop.permute.xlu0 %621
      %623 = vrot.lane.b32.xlu0 %v535, 8
      %v624 = vpop.permute.xlu0 %623
      %625 = vrot.lane.b32.xlu0 %v536, 8
      %v626 = vpop.permute.xlu0 %625
      %627 = vrot.lane.b32.xlu0 %v537, 8
      %v628 = vpop.permute.xlu0 %627
      %629 = vrot.lane.b32.xlu0 %v538, 8
      %v630 = vpop.permute.xlu0 %629
      %631 = vrot.lane.b32.xlu0 %v539, 8
      %v632 = vpop.permute.xlu0 %631
      %633 = vrot.lane.b32.xlu0 %v540, 8
      %v634 = vpop.permute.xlu0 %633
      %635 = vrot.lane.b32.xlu0 %v541, 8
      %v636 = vpop.permute.xlu0 %635
      %637 = vrot.lane.b32.xlu0 %v542, 8
      %v638 = vpop.permute.xlu0 %637
      %vm671 = vcmask 130112
      %672 = vst.msk [vmem:[#allocation3] sm:$0xff] %vm671, %v576
      %673 = vst.msk [vmem:[#allocation3 + $0x8] sm:$0xff] %vm671, %v578
      %674 = vst.msk [vmem:[#allocation3 + $0x10] sm:$0xff] %vm671, %v580
      %675 = vst.msk [vmem:[#allocation3 + $0x18] sm:$0xff] %vm671, %v582
      %676 = vst.msk [vmem:[#allocation3 + $0x20] sm:$0xff] %vm671, %v584
      %677 = vst.msk [vmem:[#allocation3 + $0x28] sm:$0xff] %vm671, %v586
      %678 = vst.msk [vmem:[#allocation3 + $0x30] sm:$0xff] %vm671, %v588
      %679 = vst.msk [vmem:[#allocation3 + $0x38] sm:$0xff] %vm671, %v590
      %680 = vst.msk [vmem:[#allocation3 + $0x40] sm:$0xff] %vm671, %v592
      %681 = vst.msk [vmem:[#allocation3 + $0x48] sm:$0xff] %vm671, %v594
      %682 = vst.msk [vmem:[#allocation3 + $0x50] sm:$0xff] %vm671, %v596
      %683 = vst.msk [vmem:[#allocation3 + $0x58] sm:$0xff] %vm671, %v598
      %684 = vst.msk [vmem:[#allocation3 + $0x60] sm:$0xff] %vm671, %v600
      %685 = vst.msk [vmem:[#allocation3 + $0x68] sm:$0xff] %vm671, %v602
      %686 = vst.msk [vmem:[#allocation3 + $0x70] sm:$0xff] %vm671, %v604
      %687 = vst.msk [vmem:[#allocation3 + $0x78] sm:$0xff] %vm671, %v606
      %688 = vst.msk [vmem:[#allocation3 + $0x80] sm:$0xff] %vm671, %v608
      %689 = vst.msk [vmem:[#allocation3 + $0x88] sm:$0xff] %vm671, %v610
      %690 = vst.msk [vmem:[#allocation3 + $0x90] sm:$0xff] %vm671, %v612
      %691 = vst.msk [vmem:[#allocation3 + $0x98] sm:$0xff] %vm671, %v614
      %692 = vst.msk [vmem:[#allocation3 + $0xa0] sm:$0xff] %vm671, %v616
      %693 = vst.msk [vmem:[#allocation3 + $0xa8] sm:$0xff] %vm671, %v618
      %694 = vst.msk [vmem:[#allocation3 + $0xb0] sm:$0xff] %vm671, %v620
      %695 = vst.msk [vmem:[#allocation3 + $0xb8] sm:$0xff] %vm671, %v622
      %696 = vst.msk [vmem:[#allocation3 + $0xc0] sm:$0xff] %vm671, %v624
      %697 = vst.msk [vmem:[#allocation3 + $0xc8] sm:$0xff] %vm671, %v626
      %698 = vst.msk [vmem:[#allocation3 + $0xd0] sm:$0xff] %vm671, %v628
      %699 = vst.msk [vmem:[#allocation3 + $0xd8] sm:$0xff] %vm671, %v630
      %700 = vst.msk [vmem:[#allocation3 + $0xe0] sm:$0xff] %vm671, %v632
      %701 = vst.msk [vmem:[#allocation3 + $0xe8] sm:$0xff] %vm671, %v634
      %702 = vst.msk [vmem:[#allocation3 + $0xf0] sm:$0xff] %vm671, %v636
      %703 = vst.msk [vmem:[#allocation3 + $0xf8] sm:$0xff] %vm671, %v638
      %v704 = vld [vmem:[#allocation2 + $0x2] sm:$0xff]
      %v705 = vld [vmem:[#allocation2 + $0xa] sm:$0xff]
      %v706 = vld [vmem:[#allocation2 + $0x1a] sm:$0xff]
      %v707 = vld [vmem:[#allocation2 + $0x22] sm:$0xff]
      %v708 = vld [vmem:[#allocation2 + $0x32] sm:$0xff]
      %v709 = vld [vmem:[#allocation2 + $0x3a] sm:$0xff]
      %v710 = vld [vmem:[#allocation2 + $0x4a] sm:$0xff]
      %v711 = vld [vmem:[#allocation2 + $0x52] sm:$0xff]
      %v712 = vld [vmem:[#allocation2 + $0x62] sm:$0xff]
      %v713 = vld [vmem:[#allocation2 + $0x6a] sm:$0xff]
      %v714 = vld [vmem:[#allocation2 + $0x7a] sm:$0xff]
      %v715 = vld [vmem:[#allocation2 + $0x82] sm:$0xff]
      %v716 = vld [vmem:[#allocation2 + $0x92] sm:$0xff]
      %v717 = vld [vmem:[#allocation2 + $0x9a] sm:$0xff]
      %v718 = vld [vmem:[#allocation2 + $0xaa] sm:$0xff]
      %v719 = vld [vmem:[#allocation2 + $0xb2] sm:$0xff]
      %v720 = vld [vmem:[#allocation2 + $0xc2] sm:$0xff]
      %v721 = vld [vmem:[#allocation2 + $0xca] sm:$0xff]
      %v722 = vld [vmem:[#allocation2 + $0xda] sm:$0xff]
      %v723 = vld [vmem:[#allocation2 + $0xe2] sm:$0xff]
      %v724 = vld [vmem:[#allocation2 + $0xf2] sm:$0xff]
      %v725 = vld [vmem:[#allocation2 + $0xfa] sm:$0xff]
      %v726 = vld [vmem:[#allocation2 + $0x10a] sm:$0xff]
      %v727 = vld [vmem:[#allocation2 + $0x112] sm:$0xff]
      %v728 = vld [vmem:[#allocation2 + $0x122] sm:$0xff]
      %v729 = vld [vmem:[#allocation2 + $0x12a] sm:$0xff]
      %v730 = vld [vmem:[#allocation2 + $0x13a] sm:$0xff]
      %v731 = vld [vmem:[#allocation2 + $0x142] sm:$0xff]
      %v732 = vld [vmem:[#allocation2 + $0x152] sm:$0xff]
      %v733 = vld [vmem:[#allocation2 + $0x15a] sm:$0xff]
      %v734 = vld [vmem:[#allocation2 + $0x16a] sm:$0xff]
      %v735 = vld [vmem:[#allocation2 + $0x172] sm:$0xff]
      %768 = vrot.lane.b32.xlu0 %v704, 16
      %v769 = vpop.permute.xlu0 %768
      %770 = vrot.lane.b32.xlu0 %v705, 16
      %v771 = vpop.permute.xlu0 %770
      %772 = vrot.lane.b32.xlu0 %v706, 16
      %v773 = vpop.permute.xlu0 %772
      %774 = vrot.lane.b32.xlu0 %v707, 16
      %v775 = vpop.permute.xlu0 %774
      %776 = vrot.lane.b32.xlu0 %v708, 16
      %v777 = vpop.permute.xlu0 %776
      %778 = vrot.lane.b32.xlu0 %v709, 16
      %v779 = vpop.permute.xlu0 %778
      %780 = vrot.lane.b32.xlu0 %v710, 16
      %v781 = vpop.permute.xlu0 %780
      %782 = vrot.lane.b32.xlu0 %v711, 16
      %v783 = vpop.permute.xlu0 %782
      %784 = vrot.lane.b32.xlu0 %v712, 16
      %v785 = vpop.permute.xlu0 %784
      %786 = vrot.lane.b32.xlu0 %v713, 16
      %v787 = vpop.permute.xlu0 %786
      %788 = vrot.lane.b32.xlu0 %v714, 16
      %v789 = vpop.permute.xlu0 %788
      %790 = vrot.lane.b32.xlu0 %v715, 16
      %v791 = vpop.permute.xlu0 %790
      %792 = vrot.lane.b32.xlu0 %v716, 16
      %v793 = vpop.permute.xlu0 %792
      %794 = vrot.lane.b32.xlu0 %v717, 16
      %v795 = vpop.permute.xlu0 %794
      %796 = vrot.lane.b32.xlu0 %v718, 16
      %v797 = vpop.permute.xlu0 %796
      %798 = vrot.lane.b32.xlu0 %v719, 16
      %v799 = vpop.permute.xlu0 %798
      %800 = vrot.lane.b32.xlu0 %v720, 16
      %v801 = vpop.permute.xlu0 %800
      %802 = vrot.lane.b32.xlu0 %v721, 16
      %v803 = vpop.permute.xlu0 %802
      %804 = vrot.lane.b32.xlu0 %v722, 16
      %v805 = vpop.permute.xlu0 %804
      %806 = vrot.lane.b32.xlu0 %v723, 16
      %v807 = vpop.permute.xlu0 %806
      %808 = vrot.lane.b32.xlu0 %v724, 16
      %v809 = vpop.permute.xlu0 %808
      %810 = vrot.lane.b32.xlu0 %v725, 16
      %v811 = vpop.permute.xlu0 %810
      %812 = vrot.lane.b32.xlu0 %v726, 16
      %v813 = vpop.permute.xlu0 %812
      %814 = vrot.lane.b32.xlu0 %v727, 16
      %v815 = vpop.permute.xlu0 %814
      %816 = vrot.lane.b32.xlu0 %v728, 16
      %v817 = vpop.permute.xlu0 %816
      %818 = vrot.lane.b32.xlu0 %v729, 16
      %v819 = vpop.permute.xlu0 %818
      %820 = vrot.lane.b32.xlu0 %v730, 16
      %v821 = vpop.permute.xlu0 %820
      %822 = vrot.lane.b32.xlu0 %v731, 16
      %v823 = vpop.permute.xlu0 %822
      %824 = vrot.lane.b32.xlu0 %v732, 16
      %v825 = vpop.permute.xlu0 %824
      %826 = vrot.lane.b32.xlu0 %v733, 16
      %v827 = vpop.permute.xlu0 %826
      %828 = vrot.lane.b32.xlu0 %v734, 16
      %v829 = vpop.permute.xlu0 %828
      %830 = vrot.lane.b32.xlu0 %v735, 16
      %v831 = vpop.permute.xlu0 %830
      %vm864 = vcmask 195712
      %865 = vst.msk [vmem:[#allocation3] sm:$0xff] %vm864, %v769
      %866 = vst.msk [vmem:[#allocation3 + $0x8] sm:$0xff] %vm864, %v771
      %867 = vst.msk [vmem:[#allocation3 + $0x10] sm:$0xff] %vm864, %v773
      %868 = vst.msk [vmem:[#allocation3 + $0x18] sm:$0xff] %vm864, %v775
      %869 = vst.msk [vmem:[#allocation3 + $0x20] sm:$0xff] %vm864, %v777
      %870 = vst.msk [vmem:[#allocation3 + $0x28] sm:$0xff] %vm864, %v779
      %871 = vst.msk [vmem:[#allocation3 + $0x30] sm:$0xff] %vm864, %v781
      %872 = vst.msk [vmem:[#allocation3 + $0x38] sm:$0xff] %vm864, %v783
      %873 = vst.msk [vmem:[#allocation3 + $0x40] sm:$0xff] %vm864, %v785
      %874 = vst.msk [vmem:[#allocation3 + $0x48] sm:$0xff] %vm864, %v787
      %875 = vst.msk [vmem:[#allocation3 + $0x50] sm:$0xff] %vm864, %v789
      %876 = vst.msk [vmem:[#allocation3 + $0x58] sm:$0xff] %vm864, %v791
      %877 = vst.msk [vmem:[#allocation3 + $0x60] sm:$0xff] %vm864, %v793
      %878 = vst.msk [vmem:[#allocation3 + $0x68] sm:$0xff] %vm864, %v795
      %879 = vst.msk [vmem:[#allocation3 + $0x70] sm:$0xff] %vm864, %v797
      %880 = vst.msk [vmem:[#allocation3 + $0x78] sm:$0xff] %vm864, %v799
      %881 = vst.msk [vmem:[#allocation3 + $0x80] sm:$0xff] %vm864, %v801
      %882 = vst.msk [vmem:[#allocation3 + $0x88] sm:$0xff] %vm864, %v803
      %883 = vst.msk [vmem:[#allocation3 + $0x90] sm:$0xff] %vm864, %v805
      %884 = vst.msk [vmem:[#allocation3 + $0x98] sm:$0xff] %vm864, %v807
      %885 = vst.msk [vmem:[#allocation3 + $0xa0] sm:$0xff] %vm864, %v809
      %886 = vst.msk [vmem:[#allocation3 + $0xa8] sm:$0xff] %vm864, %v811
      %887 = vst.msk [vmem:[#allocation3 + $0xb0] sm:$0xff] %vm864, %v813
      %888 = vst.msk [vmem:[#allocation3 + $0xb8] sm:$0xff] %vm864, %v815
      %889 = vst.msk [vmem:[#allocation3 + $0xc0] sm:$0xff] %vm864, %v817
      %890 = vst.msk [vmem:[#allocation3 + $0xc8] sm:$0xff] %vm864, %v819
      %891 = vst.msk [vmem:[#allocation3 + $0xd0] sm:$0xff] %vm864, %v821
      %892 = vst.msk [vmem:[#allocation3 + $0xd8] sm:$0xff] %vm864, %v823
      %893 = vst.msk [vmem:[#allocation3 + $0xe0] sm:$0xff] %vm864, %v825
      %894 = vst.msk [vmem:[#allocation3 + $0xe8] sm:$0xff] %vm864, %v827
      %895 = vst.msk [vmem:[#allocation3 + $0xf0] sm:$0xff] %vm864, %v829
      %896 = vst.msk [vmem:[#allocation3 + $0xf8] sm:$0xff] %vm864, %v831
      %v897 = vld [vmem:[%s372] sm:$0xff]
      %v898 = vld [vmem:[%s372 + $0x8] sm:$0xff]
      %v899 = vld [vmem:[%s372 + $0x18] sm:$0xff]
      %v900 = vld [vmem:[%s372 + $0x20] sm:$0xff]
      %v901 = vld [vmem:[%s372 + $0x30] sm:$0xff]
      %v902 = vld [vmem:[%s372 + $0x38] sm:$0xff]
      %v903 = vld [vmem:[%s372 + $0x48] sm:$0xff]
      %v904 = vld [vmem:[%s372 + $0x50] sm:$0xff]
      %v905 = vld [vmem:[%s372 + $0x60] sm:$0xff]
      %v906 = vld [vmem:[%s372 + $0x68] sm:$0xff]
      %v907 = vld [vmem:[%s372 + $0x78] sm:$0xff]
      %v908 = vld [vmem:[%s372 + $0x80] sm:$0xff]
      %v909 = vld [vmem:[%s372 + $0x90] sm:$0xff]
      %v910 = vld [vmem:[%s372 + $0x98] sm:$0xff]
      %v911 = vld [vmem:[%s372 + $0xa8] sm:$0xff]
      %v912 = vld [vmem:[%s372 + $0xb0] sm:$0xff]
      %v913 = vld [vmem:[%s372 + $0xc0] sm:$0xff]
      %v914 = vld [vmem:[%s372 + $0xc8] sm:$0xff]
      %v915 = vld [vmem:[%s372 + $0xd8] sm:$0xff]
      %v916 = vld [vmem:[%s372 + $0xe0] sm:$0xff]
      %v917 = vld [vmem:[%s372 + $0xf0] sm:$0xff]
      %v918 = vld [vmem:[%s372 + $0xf8] sm:$0xff]
      %v919 = vld [vmem:[%s372 + $0x108] sm:$0xff]
      %v920 = vld [vmem:[%s372 + $0x110] sm:$0xff]
      %v921 = vld [vmem:[%s372 + $0x120] sm:$0xff]
      %v922 = vld [vmem:[%s372 + $0x128] sm:$0xff]
      %v923 = vld [vmem:[%s372 + $0x138] sm:$0xff]
      %v924 = vld [vmem:[%s372 + $0x140] sm:$0xff]
      %v925 = vld [vmem:[%s372 + $0x150] sm:$0xff]
      %v926 = vld [vmem:[%s372 + $0x158] sm:$0xff]
      %v927 = vld [vmem:[%s372 + $0x168] sm:$0xff]
      %v928 = vld [vmem:[%s372 + $0x170] sm:$0xff]
      %961 = vrot.lane.b32.xlu0 %v897, 24
      %v962 = vpop.permute.xlu0 %961
      %963 = vrot.lane.b32.xlu0 %v898, 24
      %v964 = vpop.permute.xlu0 %963
      %965 = vrot.lane.b32.xlu0 %v899, 24
      %v966 = vpop.permute.xlu0 %965
      %967 = vrot.lane.b32.xlu0 %v900, 24
      %v968 = vpop.permute.xlu0 %967
      %969 = vrot.lane.b32.xlu0 %v901, 24
      %v970 = vpop.permute.xlu0 %969
      %971 = vrot.lane.b32.xlu0 %v902, 24
      %v972 = vpop.permute.xlu0 %971
      %973 = vrot.lane.b32.xlu0 %v903, 24
      %v974 = vpop.permute.xlu0 %973
      %975 = vrot.lane.b32.xlu0 %v904, 24
      %v976 = vpop.permute.xlu0 %975
      %977 = vrot.lane.b32.xlu0 %v905, 24
      %v978 = vpop.permute.xlu0 %977
      %979 = vrot.lane.b32.xlu0 %v906, 24
      %v980 = vpop.permute.xlu0 %979
      %981 = vrot.lane.b32.xlu0 %v907, 24
      %v982 = vpop.permute.xlu0 %981
      %983 = vrot.lane.b32.xlu0 %v908, 24
      %v984 = vpop.permute.xlu0 %983
      %985 = vrot.lane.b32.xlu0 %v909, 24
      %v986 = vpop.permute.xlu0 %985
      %987 = vrot.lane.b32.xlu0 %v910, 24
      %v988 = vpop.permute.xlu0 %987
      %989 = vrot.lane.b32.xlu0 %v911, 24
      %v990 = vpop.permute.xlu0 %989
      %991 = vrot.lane.b32.xlu0 %v912, 24
      %v992 = vpop.permute.xlu0 %991
      %993 = vrot.lane.b32.xlu0 %v913, 24
      %v994 = vpop.permute.xlu0 %993
      %995 = vrot.lane.b32.xlu0 %v914, 24
      %v996 = vpop.permute.xlu0 %995
      %997 = vrot.lane.b32.xlu0 %v915, 24
      %v998 = vpop.permute.xlu0 %997
      %999 = vrot.lane.b32.xlu0 %v916, 24
      %v1000 = vpop.permute.xlu0 %999
      %1001 = vrot.lane.b32.xlu0 %v917, 24
      %v1002 = vpop.permute.xlu0 %1001
      %1003 = vrot.lane.b32.xlu0 %v918, 24
      %v1004 = vpop.permute.xlu0 %1003
      %1005 = vrot.lane.b32.xlu0 %v919, 24
      %v1006 = vpop.permute.xlu0 %1005
      %1007 = vrot.lane.b32.xlu0 %v920, 24
      %v1008 = vpop.permute.xlu0 %1007
      %1009 = vrot.lane.b32.xlu0 %v921, 24
      %v1010 = vpop.permute.xlu0 %1009
      %1011 = vrot.lane.b32.xlu0 %v922, 24
      %v1012 = vpop.permute.xlu0 %1011
      %1013 = vrot.lane.b32.xlu0 %v923, 24
      %v1014 = vpop.permute.xlu0 %1013
      %1015 = vrot.lane.b32.xlu0 %v924, 24
      %v1016 = vpop.permute.xlu0 %1015
      %1017 = vrot.lane.b32.xlu0 %v925, 24
      %v1018 = vpop.permute.xlu0 %1017
      %1019 = vrot.lane.b32.xlu0 %v926, 24
      %v1020 = vpop.permute.xlu0 %1019
      %1021 = vrot.lane.b32.xlu0 %v927, 24
      %v1022 = vpop.permute.xlu0 %1021
      %1023 = vrot.lane.b32.xlu0 %v928, 24
      %v1024 = vpop.permute.xlu0 %1023
      %vm1057 = vcmask 261312
      %1058 = vst.msk [vmem:[#allocation3] sm:$0xff] %vm1057, %v962
      %1059 = vst.msk [vmem:[#allocation3 + $0x8] sm:$0xff] %vm1057, %v964
      %1060 = vst.msk [vmem:[#allocation3 + $0x10] sm:$0xff] %vm1057, %v966
      %1061 = vst.msk [vmem:[#allocation3 + $0x18] sm:$0xff] %vm1057, %v968
      %1062 = vst.msk [vmem:[#allocation3 + $0x20] sm:$0xff] %vm1057, %v970
      %1063 = vst.msk [vmem:[#allocation3 + $0x28] sm:$0xff] %vm1057, %v972
      %1064 = vst.msk [vmem:[#allocation3 + $0x30] sm:$0xff] %vm1057, %v974
      %1065 = vst.msk [vmem:[#allocation3 + $0x38] sm:$0xff] %vm1057, %v976
      %1066 = vst.msk [vmem:[#allocation3 + $0x40] sm:$0xff] %vm1057, %v978
      %1067 = vst.msk [vmem:[#allocation3 + $0x48] sm:$0xff] %vm1057, %v980
      %1068 = vst.msk [vmem:[#allocation3 + $0x50] sm:$0xff] %vm1057, %v982
      %1069 = vst.msk [vmem:[#allocation3 + $0x58] sm:$0xff] %vm1057, %v984
      %1070 = vst.msk [vmem:[#allocation3 + $0x60] sm:$0xff] %vm1057, %v986
      %1071 = vst.msk [vmem:[#allocation3 + $0x68] sm:$0xff] %vm1057, %v988
      %1072 = vst.msk [vmem:[#allocation3 + $0x70] sm:$0xff] %vm1057, %v990
      %1073 = vst.msk [vmem:[#allocation3 + $0x78] sm:$0xff] %vm1057, %v992
      %1074 = vst.msk [vmem:[#allocation3 + $0x80] sm:$0xff] %vm1057, %v994
      %1075 = vst.msk [vmem:[#allocation3 + $0x88] sm:$0xff] %vm1057, %v996
      %1076 = vst.msk [vmem:[#allocation3 + $0x90] sm:$0xff] %vm1057, %v998
      %1077 = vst.msk [vmem:[#allocation3 + $0x98] sm:$0xff] %vm1057, %v1000
      %1078 = vst.msk [vmem:[#allocation3 + $0xa0] sm:$0xff] %vm1057, %v1002
      %1079 = vst.msk [vmem:[#allocation3 + $0xa8] sm:$0xff] %vm1057, %v1004
      %1080 = vst.msk [vmem:[#allocation3 + $0xb0] sm:$0xff] %vm1057, %v1006
      %1081 = vst.msk [vmem:[#allocation3 + $0xb8] sm:$0xff] %vm1057, %v1008
      %1082 = vst.msk [vmem:[#allocation3 + $0xc0] sm:$0xff] %vm1057, %v1010
      %1083 = vst.msk [vmem:[#allocation3 + $0xc8] sm:$0xff] %vm1057, %v1012
      %1084 = vst.msk [vmem:[#allocation3 + $0xd0] sm:$0xff] %vm1057, %v1014
      %1085 = vst.msk [vmem:[#allocation3 + $0xd8] sm:$0xff] %vm1057, %v1016
      %1086 = vst.msk [vmem:[#allocation3 + $0xe0] sm:$0xff] %vm1057, %v1018
      %1087 = vst.msk [vmem:[#allocation3 + $0xe8] sm:$0xff] %vm1057, %v1020
      %1088 = vst.msk [vmem:[#allocation3 + $0xf0] sm:$0xff] %vm1057, %v1022
      %1089 = vst.msk [vmem:[#allocation3 + $0xf8] sm:$0xff] %vm1057, %v1024
      %v1090 = vld [vmem:[%s372 + $0x1] sm:$0xff]
      %v1091 = vld [vmem:[%s372 + $0x9] sm:$0xff]
      %v1092 = vld [vmem:[%s372 + $0x19] sm:$0xff]
      %v1093 = vld [vmem:[%s372 + $0x21] sm:$0xff]
      %v1094 = vld [vmem:[%s372 + $0x31] sm:$0xff]
      %v1095 = vld [vmem:[%s372 + $0x39] sm:$0xff]
      %v1096 = vld [vmem:[%s372 + $0x49] sm:$0xff]
      %v1097 = vld [vmem:[%s372 + $0x51] sm:$0xff]
      %v1098 = vld [vmem:[%s372 + $0x61] sm:$0xff]
      %v1099 = vld [vmem:[%s372 + $0x69] sm:$0xff]
      %v1100 = vld [vmem:[%s372 + $0x79] sm:$0xff]
      %v1101 = vld [vmem:[%s372 + $0x81] sm:$0xff]
      %v1102 = vld [vmem:[%s372 + $0x91] sm:$0xff]
      %v1103 = vld [vmem:[%s372 + $0x99] sm:$0xff]
      %v1104 = vld [vmem:[%s372 + $0xa9] sm:$0xff]
      %v1105 = vld [vmem:[%s372 + $0xb1] sm:$0xff]
      %v1106 = vld [vmem:[%s372 + $0xc1] sm:$0xff]
      %v1107 = vld [vmem:[%s372 + $0xc9] sm:$0xff]
      %v1108 = vld [vmem:[%s372 + $0xd9] sm:$0xff]
      %v1109 = vld [vmem:[%s372 + $0xe1] sm:$0xff]
      %v1110 = vld [vmem:[%s372 + $0xf1] sm:$0xff]
      %v1111 = vld [vmem:[%s372 + $0xf9] sm:$0xff]
      %v1112 = vld [vmem:[%s372 + $0x109] sm:$0xff]
      %v1113 = vld [vmem:[%s372 + $0x111] sm:$0xff]
      %v1114 = vld [vmem:[%s372 + $0x121] sm:$0xff]
      %v1115 = vld [vmem:[%s372 + $0x129] sm:$0xff]
      %v1116 = vld [vmem:[%s372 + $0x139] sm:$0xff]
      %v1117 = vld [vmem:[%s372 + $0x141] sm:$0xff]
      %v1118 = vld [vmem:[%s372 + $0x151] sm:$0xff]
      %v1119 = vld [vmem:[%s372 + $0x159] sm:$0xff]
      %v1120 = vld [vmem:[%s372 + $0x169] sm:$0xff]
      %v1121 = vld [vmem:[%s372 + $0x171] sm:$0xff]
      %1154 = vrot.lane.b32.xlu0 %v1090, 32
      %v1155 = vpop.permute.xlu0 %1154
      %1156 = vrot.lane.b32.xlu0 %v1091, 32
      %v1157 = vpop.permute.xlu0 %1156
      %1158 = vrot.lane.b32.xlu0 %v1092, 32
      %v1159 = vpop.permute.xlu0 %1158
      %1160 = vrot.lane.b32.xlu0 %v1093, 32
      %v1161 = vpop.permute.xlu0 %1160
      %1162 = vrot.lane.b32.xlu0 %v1094, 32
      %v1163 = vpop.permute.xlu0 %1162
      %1164 = vrot.lane.b32.xlu0 %v1095, 32
      %v1165 = vpop.permute.xlu0 %1164
      %1166 = vrot.lane.b32.xlu0 %v1096, 32
      %v1167 = vpop.permute.xlu0 %1166
      %1168 = vrot.lane.b32.xlu0 %v1097, 32
      %v1169 = vpop.permute.xlu0 %1168
      %1170 = vrot.lane.b32.xlu0 %v1098, 32
      %v1171 = vpop.permute.xlu0 %1170
      %1172 = vrot.lane.b32.xlu0 %v1099, 32
      %v1173 = vpop.permute.xlu0 %1172
      %1174 = vrot.lane.b32.xlu0 %v1100, 32
      %v1175 = vpop.permute.xlu0 %1174
      %1176 = vrot.lane.b32.xlu0 %v1101, 32
      %v1177 = vpop.permute.xlu0 %1176
      %1178 = vrot.lane.b32.xlu0 %v1102, 32
      %v1179 = vpop.permute.xlu0 %1178
      %1180 = vrot.lane.b32.xlu0 %v1103, 32
      %v1181 = vpop.permute.xlu0 %1180
      %1182 = vrot.lane.b32.xlu0 %v1104, 32
      %v1183 = vpop.permute.xlu0 %1182
      %1184 = vrot.lane.b32.xlu0 %v1105, 32
      %v1185 = vpop.permute.xlu0 %1184
      %1186 = vrot.lane.b32.xlu0 %v1106, 32
      %v1187 = vpop.permute.xlu0 %1186
      %1188 = vrot.lane.b32.xlu0 %v1107, 32
      %v1189 = vpop.permute.xlu0 %1188
      %1190 = vrot.lane.b32.xlu0 %v1108, 32
      %v1191 = vpop.permute.xlu0 %1190
      %1192 = vrot.lane.b32.xlu0 %v1109, 32
      %v1193 = vpop.permute.xlu0 %1192
      %1194 = vrot.lane.b32.xlu0 %v1110, 32
      %v1195 = vpop.permute.xlu0 %1194
      %1196 = vrot.lane.b32.xlu0 %v1111, 32
      %v1197 = vpop.permute.xlu0 %1196
      %1198 = vrot.lane.b32.xlu0 %v1112, 32
      %v1199 = vpop.permute.xlu0 %1198
      %1200 = vrot.lane.b32.xlu0 %v1113, 32
      %v1201 = vpop.permute.xlu0 %1200
      %1202 = vrot.lane.b32.xlu0 %v1114, 32
      %v1203 = vpop.permute.xlu0 %1202
      %1204 = vrot.lane.b32.xlu0 %v1115, 32
      %v1205 = vpop.permute.xlu0 %1204
      %1206 = vrot.lane.b32.xlu0 %v1116, 32
      %v1207 = vpop.permute.xlu0 %1206
      %1208 = vrot.lane.b32.xlu0 %v1117, 32
      %v1209 = vpop.permute.xlu0 %1208
      %1210 = vrot.lane.b32.xlu0 %v1118, 32
      %v1211 = vpop.permute.xlu0 %1210
      %1212 = vrot.lane.b32.xlu0 %v1119, 32
      %v1213 = vpop.permute.xlu0 %1212
      %1214 = vrot.lane.b32.xlu0 %v1120, 32
      %v1215 = vpop.permute.xlu0 %1214
      %1216 = vrot.lane.b32.xlu0 %v1121, 32
      %v1217 = vpop.permute.xlu0 %1216
      %vm1250 = vcmask 326912
      %1251 = vst.msk [vmem:[#allocation3] sm:$0xff] %vm1250, %v1155
      %1252 = vst.msk [vmem:[#allocation3 + $0x8] sm:$0xff] %vm1250, %v1157
      %1253 = vst.msk [vmem:[#allocation3 + $0x10] sm:$0xff] %vm1250, %v1159
      %1254 = vst.msk [vmem:[#allocation3 + $0x18] sm:$0xff] %vm1250, %v1161
      %1255 = vst.msk [vmem:[#allocation3 + $0x20] sm:$0xff] %vm1250, %v1163
      %1256 = vst.msk [vmem:[#allocation3 + $0x28] sm:$0xff] %vm1250, %v1165
      %1257 = vst.msk [vmem:[#allocation3 + $0x30] sm:$0xff] %vm1250, %v1167
      %1258 = vst.msk [vmem:[#allocation3 + $0x38] sm:$0xff] %vm1250, %v1169
      %1259 = vst.msk [vmem:[#allocation3 + $0x40] sm:$0xff] %vm1250, %v1171
      %1260 = vst.msk [vmem:[#allocation3 + $0x48] sm:$0xff] %vm1250, %v1173
      %1261 = vst.msk [vmem:[#allocation3 + $0x50] sm:$0xff] %vm1250, %v1175
      %1262 = vst.msk [vmem:[#allocation3 + $0x58] sm:$0xff] %vm1250, %v1177
      %1263 = vst.msk [vmem:[#allocation3 + $0x60] sm:$0xff] %vm1250, %v1179
      %1264 = vst.msk [vmem:[#allocation3 + $0x68] sm:$0xff] %vm1250, %v1181
      %1265 = vst.msk [vmem:[#allocation3 + $0x70] sm:$0xff] %vm1250, %v1183
      %1266 = vst.msk [vmem:[#allocation3 + $0x78] sm:$0xff] %vm1250, %v1185
      %1267 = vst.msk [vmem:[#allocation3 + $0x80] sm:$0xff] %vm1250, %v1187
      %1268 = vst.msk [vmem:[#allocation3 + $0x88] sm:$0xff] %vm1250, %v1189
      %1269 = vst.msk [vmem:[#allocation3 + $0x90] sm:$0xff] %vm1250, %v1191
      %1270 = vst.msk [vmem:[#allocation3 + $0x98] sm:$0xff] %vm1250, %v1193
      %1271 = vst.msk [vmem:[#allocation3 + $0xa0] sm:$0xff] %vm1250, %v1195
      %1272 = vst.msk [vmem:[#allocation3 + $0xa8] sm:$0xff] %vm1250, %v1197
      %1273 = vst.msk [vmem:[#allocation3 + $0xb0] sm:$0xff] %vm1250, %v1199
      %1274 = vst.msk [vmem:[#allocation3 + $0xb8] sm:$0xff] %vm1250, %v1201
      %1275 = vst.msk [vmem:[#allocation3 + $0xc0] sm:$0xff] %vm1250, %v1203
      %1276 = vst.msk [vmem:[#allocation3 + $0xc8] sm:$0xff] %vm1250, %v1205
      %1277 = vst.msk [vmem:[#allocation3 + $0xd0] sm:$0xff] %vm1250, %v1207
      %1278 = vst.msk [vmem:[#allocation3 + $0xd8] sm:$0xff] %vm1250, %v1209
      %1279 = vst.msk [vmem:[#allocation3 + $0xe0] sm:$0xff] %vm1250, %v1211
      %1280 = vst.msk [vmem:[#allocation3 + $0xe8] sm:$0xff] %vm1250, %v1213
      %1281 = vst.msk [vmem:[#allocation3 + $0xf0] sm:$0xff] %vm1250, %v1215
      %1282 = vst.msk [vmem:[#allocation3 + $0xf8] sm:$0xff] %vm1250, %v1217
      %v1283 = vld [vmem:[%s372 + $0x2] sm:$0xff]
      %v1284 = vld [vmem:[%s372 + $0xa] sm:$0xff]
      %v1285 = vld [vmem:[%s372 + $0x1a] sm:$0xff]
      %v1286 = vld [vmem:[%s372 + $0x22] sm:$0xff]
      %v1287 = vld [vmem:[%s372 + $0x32] sm:$0xff]
      %v1288 = vld [vmem:[%s372 + $0x3a] sm:$0xff]
      %v1289 = vld [vmem:[%s372 + $0x4a] sm:$0xff]
      %v1290 = vld [vmem:[%s372 + $0x52] sm:$0xff]
      %v1291 = vld [vmem:[%s372 + $0x62] sm:$0xff]
      %v1292 = vld [vmem:[%s372 + $0x6a] sm:$0xff]
      %v1293 = vld [vmem:[%s372 + $0x7a] sm:$0xff]
      %v1294 = vld [vmem:[%s372 + $0x82] sm:$0xff]
      %v1295 = vld [vmem:[%s372 + $0x92] sm:$0xff]
      %v1296 = vld [vmem:[%s372 + $0x9a] sm:$0xff]
      %v1297 = vld [vmem:[%s372 + $0xaa] sm:$0xff]
      %v1298 = vld [vmem:[%s372 + $0xb2] sm:$0xff]
      %v1299 = vld [vmem:[%s372 + $0xc2] sm:$0xff]
      %v1300 = vld [vmem:[%s372 + $0xca] sm:$0xff]
      %v1301 = vld [vmem:[%s372 + $0xda] sm:$0xff]
      %v1302 = vld [vmem:[%s372 + $0xe2] sm:$0xff]
      %v1303 = vld [vmem:[%s372 + $0xf2] sm:$0xff]
      %v1304 = vld [vmem:[%s372 + $0xfa] sm:$0xff]
      %v1305 = vld [vmem:[%s372 + $0x10a] sm:$0xff]
      %v1306 = vld [vmem:[%s372 + $0x112] sm:$0xff]
      %v1307 = vld [vmem:[%s372 + $0x122] sm:$0xff]
      %v1308 = vld [vmem:[%s372 + $0x12a] sm:$0xff]
      %v1309 = vld [vmem:[%s372 + $0x13a] sm:$0xff]
      %v1310 = vld [vmem:[%s372 + $0x142] sm:$0xff]
      %v1311 = vld [vmem:[%s372 + $0x152] sm:$0xff]
      %v1312 = vld [vmem:[%s372 + $0x15a] sm:$0xff]
      %v1313 = vld [vmem:[%s372 + $0x16a] sm:$0xff]
      %v1314 = vld [vmem:[%s372 + $0x172] sm:$0xff]
      %1347 = vrot.lane.b32.xlu0 %v1283, 40
      %v1348 = vpop.permute.xlu0 %1347
      %1349 = vrot.lane.b32.xlu0 %v1284, 40
      %v1350 = vpop.permute.xlu0 %1349
      %1351 = vrot.lane.b32.xlu0 %v1285, 40
      %v1352 = vpop.permute.xlu0 %1351
      %1353 = vrot.lane.b32.xlu0 %v1286, 40
      %v1354 = vpop.permute.xlu0 %1353
      %1355 = vrot.lane.b32.xlu0 %v1287, 40
      %v1356 = vpop.permute.xlu0 %1355
      %1357 = vrot.lane.b32.xlu0 %v1288, 40
      %v1358 = vpop.permute.xlu0 %1357
      %1359 = vrot.lane.b32.xlu0 %v1289, 40
      %v1360 = vpop.permute.xlu0 %1359
      %1361 = vrot.lane.b32.xlu0 %v1290, 40
      %v1362 = vpop.permute.xlu0 %1361
      %1363 = vrot.lane.b32.xlu0 %v1291, 40
      %v1364 = vpop.permute.xlu0 %1363
      %1365 = vrot.lane.b32.xlu0 %v1292, 40
      %v1366 = vpop.permute.xlu0 %1365
      %1367 = vrot.lane.b32.xlu0 %v1293, 40
      %v1368 = vpop.permute.xlu0 %1367
      %1369 = vrot.lane.b32.xlu0 %v1294, 40
      %v1370 = vpop.permute.xlu0 %1369
      %1371 = vrot.lane.b32.xlu0 %v1295, 40
      %v1372 = vpop.permute.xlu0 %1371
      %1373 = vrot.lane.b32.xlu0 %v1296, 40
      %v1374 = vpop.permute.xlu0 %1373
      %1375 = vrot.lane.b32.xlu0 %v1297, 40
      %v1376 = vpop.permute.xlu0 %1375
      %1377 = vrot.lane.b32.xlu0 %v1298, 40
      %v1378 = vpop.permute.xlu0 %1377
      %1379 = vrot.lane.b32.xlu0 %v1299, 40
      %v1380 = vpop.permute.xlu0 %1379
      %1381 = vrot.lane.b32.xlu0 %v1300, 40
      %v1382 = vpop.permute.xlu0 %1381
      %1383 = vrot.lane.b32.xlu0 %v1301, 40
      %v1384 = vpop.permute.xlu0 %1383
      %1385 = vrot.lane.b32.xlu0 %v1302, 40
      %v1386 = vpop.permute.xlu0 %1385
      %1387 = vrot.lane.b32.xlu0 %v1303, 40
      %v1388 = vpop.permute.xlu0 %1387
      %1389 = vrot.lane.b32.xlu0 %v1304, 40
      %v1390 = vpop.permute.xlu0 %1389
      %1391 = vrot.lane.b32.xlu0 %v1305, 40
      %v1392 = vpop.permute.xlu0 %1391
      %1393 = vrot.lane.b32.xlu0 %v1306, 40
      %v1394 = vpop.permute.xlu0 %1393
      %1395 = vrot.lane.b32.xlu0 %v1307, 40
      %v1396 = vpop.permute.xlu0 %1395
      %1397 = vrot.lane.b32.xlu0 %v1308, 40
      %v1398 = vpop.permute.xlu0 %1397
      %1399 = vrot.lane.b32.xlu0 %v1309, 40
      %v1400 = vpop.permute.xlu0 %1399
      %1401 = vrot.lane.b32.xlu0 %v1310, 40
      %v1402 = vpop.permute.xlu0 %1401
      %1403 = vrot.lane.b32.xlu0 %v1311, 40
      %v1404 = vpop.permute.xlu0 %1403
      %1405 = vrot.lane.b32.xlu0 %v1312, 40
      %v1406 = vpop.permute.xlu0 %1405
      %1407 = vrot.lane.b32.xlu0 %v1313, 40
      %v1408 = vpop.permute.xlu0 %1407
      %1409 = vrot.lane.b32.xlu0 %v1314, 40
      %v1410 = vpop.permute.xlu0 %1409
      %vm1443 = vcmask 392512
      %1444 = vst.msk [vmem:[#allocation3] sm:$0xff] %vm1443, %v1348
      %1445 = vst.msk [vmem:[#allocation3 + $0x8] sm:$0xff] %vm1443, %v1350
      %1446 = vst.msk [vmem:[#allocation3 + $0x10] sm:$0xff] %vm1443, %v1352
      %1447 = vst.msk [vmem:[#allocation3 + $0x18] sm:$0xff] %vm1443, %v1354
      %1448 = vst.msk [vmem:[#allocation3 + $0x20] sm:$0xff] %vm1443, %v1356
      %1449 = vst.msk [vmem:[#allocation3 + $0x28] sm:$0xff] %vm1443, %v1358
      %1450 = vst.msk [vmem:[#allocation3 + $0x30] sm:$0xff] %vm1443, %v1360
      %1451 = vst.msk [vmem:[#allocation3 + $0x38] sm:$0xff] %vm1443, %v1362
      %1452 = vst.msk [vmem:[#allocation3 + $0x40] sm:$0xff] %vm1443, %v1364
      %1453 = vst.msk [vmem:[#allocation3 + $0x48] sm:$0xff] %vm1443, %v1366
      %1454 = vst.msk [vmem:[#allocation3 + $0x50] sm:$0xff] %vm1443, %v1368
      %1455 = vst.msk [vmem:[#allocation3 + $0x58] sm:$0xff] %vm1443, %v1370
      %1456 = vst.msk [vmem:[#allocation3 + $0x60] sm:$0xff] %vm1443, %v1372
      %1457 = vst.msk [vmem:[#allocation3 + $0x68] sm:$0xff] %vm1443, %v1374
      %1458 = vst.msk [vmem:[#allocation3 + $0x70] sm:$0xff] %vm1443, %v1376
      %1459 = vst.msk [vmem:[#allocation3 + $0x78] sm:$0xff] %vm1443, %v1378
      %1460 = vst.msk [vmem:[#allocation3 + $0x80] sm:$0xff] %vm1443, %v1380
      %1461 = vst.msk [vmem:[#allocation3 + $0x88] sm:$0xff] %vm1443, %v1382
      %1462 = vst.msk [vmem:[#allocation3 + $0x90] sm:$0xff] %vm1443, %v1384
      %1463 = vst.msk [vmem:[#allocation3 + $0x98] sm:$0xff] %vm1443, %v1386
      %1464 = vst.msk [vmem:[#allocation3 + $0xa0] sm:$0xff] %vm1443, %v1388
      %1465 = vst.msk [vmem:[#allocation3 + $0xa8] sm:$0xff] %vm1443, %v1390
      %1466 = vst.msk [vmem:[#allocation3 + $0xb0] sm:$0xff] %vm1443, %v1392
      %1467 = vst.msk [vmem:[#allocation3 + $0xb8] sm:$0xff] %vm1443, %v1394
      %1468 = vst.msk [vmem:[#allocation3 + $0xc0] sm:$0xff] %vm1443, %v1396
      %1469 = vst.msk [vmem:[#allocation3 + $0xc8] sm:$0xff] %vm1443, %v1398
      %1470 = vst.msk [vmem:[#allocation3 + $0xd0] sm:$0xff] %vm1443, %v1400
      %1471 = vst.msk [vmem:[#allocation3 + $0xd8] sm:$0xff] %vm1443, %v1402
      %1472 = vst.msk [vmem:[#allocation3 + $0xe0] sm:$0xff] %vm1443, %v1404
      %1473 = vst.msk [vmem:[#allocation3 + $0xe8] sm:$0xff] %vm1443, %v1406
      %1474 = vst.msk [vmem:[#allocation3 + $0xf0] sm:$0xff] %vm1443, %v1408
      %1475 = vst.msk [vmem:[#allocation3 + $0xf8] sm:$0xff] %vm1443, %v1410
      %s1476 = scalar_lea.vmem [#allocation2], 48
      %v1477 = vld [vmem:[%s1476] sm:$0xff]
      %v1478 = vld [vmem:[%s1476 + $0x8] sm:$0xff]
      %v1479 = vld [vmem:[%s1476 + $0x18] sm:$0xff]
      %v1480 = vld [vmem:[%s1476 + $0x20] sm:$0xff]
      %v1481 = vld [vmem:[%s1476 + $0x30] sm:$0xff]
      %v1482 = vld [vmem:[%s1476 + $0x38] sm:$0xff]
      %v1483 = vld [vmem:[%s1476 + $0x48] sm:$0xff]
      %v1484 = vld [vmem:[%s1476 + $0x50] sm:$0xff]
      %v1485 = vld [vmem:[%s1476 + $0x60] sm:$0xff]
      %v1486 = vld [vmem:[%s1476 + $0x68] sm:$0xff]
      %v1487 = vld [vmem:[%s1476 + $0x78] sm:$0xff]
      %v1488 = vld [vmem:[%s1476 + $0x80] sm:$0xff]
      %v1489 = vld [vmem:[%s1476 + $0x90] sm:$0xff]
      %v1490 = vld [vmem:[%s1476 + $0x98] sm:$0xff]
      %v1491 = vld [vmem:[%s1476 + $0xa8] sm:$0xff]
      %v1492 = vld [vmem:[%s1476 + $0xb0] sm:$0xff]
      %v1493 = vld [vmem:[%s1476 + $0xc0] sm:$0xff]
      %v1494 = vld [vmem:[%s1476 + $0xc8] sm:$0xff]
      %v1495 = vld [vmem:[%s1476 + $0xd8] sm:$0xff]
      %v1496 = vld [vmem:[%s1476 + $0xe0] sm:$0xff]
      %v1497 = vld [vmem:[%s1476 + $0xf0] sm:$0xff]
      %v1498 = vld [vmem:[%s1476 + $0xf8] sm:$0xff]
      %v1499 = vld [vmem:[%s1476 + $0x108] sm:$0xff]
      %v1500 = vld [vmem:[%s1476 + $0x110] sm:$0xff]
      %v1501 = vld [vmem:[%s1476 + $0x120] sm:$0xff]
      %v1502 = vld [vmem:[%s1476 + $0x128] sm:$0xff]
      %v1503 = vld [vmem:[%s1476 + $0x138] sm:$0xff]
      %v1504 = vld [vmem:[%s1476 + $0x140] sm:$0xff]
      %v1505 = vld [vmem:[%s1476 + $0x150] sm:$0xff]
      %v1506 = vld [vmem:[%s1476 + $0x158] sm:$0xff]
      %v1507 = vld [vmem:[%s1476 + $0x168] sm:$0xff]
      %v1508 = vld [vmem:[%s1476 + $0x170] sm:$0xff]
      %1541 = vrot.lane.b32.xlu0 %v1477, 48
      %v1542 = vpop.permute.xlu0 %1541
      %1543 = vrot.lane.b32.xlu0 %v1478, 48
      %v1544 = vpop.permute.xlu0 %1543
      %1545 = vrot.lane.b32.xlu0 %v1479, 48
      %v1546 = vpop.permute.xlu0 %1545
      %1547 = vrot.lane.b32.xlu0 %v1480, 48
      %v1548 = vpop.permute.xlu0 %1547
      %1549 = vrot.lane.b32.xlu0 %v1481, 48
      %v1550 = vpop.permute.xlu0 %1549
      %1551 = vrot.lane.b32.xlu0 %v1482, 48
      %v1552 = vpop.permute.xlu0 %1551
      %1553 = vrot.lane.b32.xlu0 %v1483, 48
      %v1554 = vpop.permute.xlu0 %1553
      %1555 = vrot.lane.b32.xlu0 %v1484, 48
      %v1556 = vpop.permute.xlu0 %1555
      %1557 = vrot.lane.b32.xlu0 %v1485, 48
      %v1558 = vpop.permute.xlu0 %1557
      %1559 = vrot.lane.b32.xlu0 %v1486, 48
      %v1560 = vpop.permute.xlu0 %1559
      %1561 = vrot.lane.b32.xlu0 %v1487, 48
      %v1562 = vpop.permute.xlu0 %1561
      %1563 = vrot.lane.b32.xlu0 %v1488, 48
      %v1564 = vpop.permute.xlu0 %1563
      %1565 = vrot.lane.b32.xlu0 %v1489, 48
      %v1566 = vpop.permute.xlu0 %1565
      %1567 = vrot.lane.b32.xlu0 %v1490, 48
      %v1568 = vpop.permute.xlu0 %1567
      %1569 = vrot.lane.b32.xlu0 %v1491, 48
      %v1570 = vpop.permute.xlu0 %1569
      %1571 = vrot.lane.b32.xlu0 %v1492, 48
      %v1572 = vpop.permute.xlu0 %1571
      %1573 = vrot.lane.b32.xlu0 %v1493, 48
      %v1574 = vpop.permute.xlu0 %1573
      %1575 = vrot.lane.b32.xlu0 %v1494, 48
      %v1576 = vpop.permute.xlu0 %1575
      %1577 = vrot.lane.b32.xlu0 %v1495, 48
      %v1578 = vpop.permute.xlu0 %1577
      %1579 = vrot.lane.b32.xlu0 %v1496, 48
      %v1580 = vpop.permute.xlu0 %1579
      %1581 = vrot.lane.b32.xlu0 %v1497, 48
      %v1582 = vpop.permute.xlu0 %1581
      %1583 = vrot.lane.b32.xlu0 %v1498, 48
      %v1584 = vpop.permute.xlu0 %1583
      %1585 = vrot.lane.b32.xlu0 %v1499, 48
      %v1586 = vpop.permute.xlu0 %1585
      %1587 = vrot.lane.b32.xlu0 %v1500, 48
      %v1588 = vpop.permute.xlu0 %1587
      %1589 = vrot.lane.b32.xlu0 %v1501, 48
      %v1590 = vpop.permute.xlu0 %1589
      %1591 = vrot.lane.b32.xlu0 %v1502, 48
      %v1592 = vpop.permute.xlu0 %1591
      %1593 = vrot.lane.b32.xlu0 %v1503, 48
      %v1594 = vpop.permute.xlu0 %1593
      %1595 = vrot.lane.b32.xlu0 %v1504, 48
      %v1596 = vpop.permute.xlu0 %1595
      %1597 = vrot.lane.b32.xlu0 %v1505, 48
      %v1598 = vpop.permute.xlu0 %1597
      %1599 = vrot.lane.b32.xlu0 %v1506, 48
      %v1600 = vpop.permute.xlu0 %1599
      %1601 = vrot.lane.b32.xlu0 %v1507, 48
      %v1602 = vpop.permute.xlu0 %1601
      %1603 = vrot.lane.b32.xlu0 %v1508, 48
      %v1604 = vpop.permute.xlu0 %1603
      %vm1637 = vcmask 458112
      %1638 = vst.msk [vmem:[#allocation3] sm:$0xff] %vm1637, %v1542
      %1639 = vst.msk [vmem:[#allocation3 + $0x8] sm:$0xff] %vm1637, %v1544
      %1640 = vst.msk [vmem:[#allocation3 + $0x10] sm:$0xff] %vm1637, %v1546
      %1641 = vst.msk [vmem:[#allocation3 + $0x18] sm:$0xff] %vm1637, %v1548
      %1642 = vst.msk [vmem:[#allocation3 + $0x20] sm:$0xff] %vm1637, %v1550
      %1643 = vst.msk [vmem:[#allocation3 + $0x28] sm:$0xff] %vm1637, %v1552
      %1644 = vst.msk [vmem:[#allocation3 + $0x30] sm:$0xff] %vm1637, %v1554
      %1645 = vst.msk [vmem:[#allocation3 + $0x38] sm:$0xff] %vm1637, %v1556
      %1646 = vst.msk [vmem:[#allocation3 + $0x40] sm:$0xff] %vm1637, %v1558
      %1647 = vst.msk [vmem:[#allocation3 + $0x48] sm:$0xff] %vm1637, %v1560
      %1648 = vst.msk [vmem:[#allocation3 + $0x50] sm:$0xff] %vm1637, %v1562
      %1649 = vst.msk [vmem:[#allocation3 + $0x58] sm:$0xff] %vm1637, %v1564
      %1650 = vst.msk [vmem:[#allocation3 + $0x60] sm:$0xff] %vm1637, %v1566
      %1651 = vst.msk [vmem:[#allocation3 + $0x68] sm:$0xff] %vm1637, %v1568
      %1652 = vst.msk [vmem:[#allocation3 + $0x70] sm:$0xff] %vm1637, %v1570
      %1653 = vst.msk [vmem:[#allocation3 + $0x78] sm:$0xff] %vm1637, %v1572
      %1654 = vst.msk [vmem:[#allocation3 + $0x80] sm:$0xff] %vm1637, %v1574
      %1655 = vst.msk [vmem:[#allocation3 + $0x88] sm:$0xff] %vm1637, %v1576
      %1656 = vst.msk [vmem:[#allocation3 + $0x90] sm:$0xff] %vm1637, %v1578
      %1657 = vst.msk [vmem:[#allocation3 + $0x98] sm:$0xff] %vm1637, %v1580
      %1658 = vst.msk [vmem:[#allocation3 + $0xa0] sm:$0xff] %vm1637, %v1582
      %1659 = vst.msk [vmem:[#allocation3 + $0xa8] sm:$0xff] %vm1637, %v1584
      %1660 = vst.msk [vmem:[#allocation3 + $0xb0] sm:$0xff] %vm1637, %v1586
      %1661 = vst.msk [vmem:[#allocation3 + $0xb8] sm:$0xff] %vm1637, %v1588
      %1662 = vst.msk [vmem:[#allocation3 + $0xc0] sm:$0xff] %vm1637, %v1590
      %1663 = vst.msk [vmem:[#allocation3 + $0xc8] sm:$0xff] %vm1637, %v1592
      %1664 = vst.msk [vmem:[#allocation3 + $0xd0] sm:$0xff] %vm1637, %v1594
      %1665 = vst.msk [vmem:[#allocation3 + $0xd8] sm:$0xff] %vm1637, %v1596
      %1666 = vst.msk [vmem:[#allocation3 + $0xe0] sm:$0xff] %vm1637, %v1598
      %1667 = vst.msk [vmem:[#allocation3 + $0xe8] sm:$0xff] %vm1637, %v1600
      %1668 = vst.msk [vmem:[#allocation3 + $0xf0] sm:$0xff] %vm1637, %v1602
      %1669 = vst.msk [vmem:[#allocation3 + $0xf8] sm:$0xff] %vm1637, %v1604
      %v1670 = vld [vmem:[%s1476 + $0x1] sm:$0xff]
      %v1671 = vld [vmem:[%s1476 + $0x9] sm:$0xff]
      %v1672 = vld [vmem:[%s1476 + $0x19] sm:$0xff]
      %v1673 = vld [vmem:[%s1476 + $0x21] sm:$0xff]
      %v1674 = vld [vmem:[%s1476 + $0x31] sm:$0xff]
      %v1675 = vld [vmem:[%s1476 + $0x39] sm:$0xff]
      %v1676 = vld [vmem:[%s1476 + $0x49] sm:$0xff]
      %v1677 = vld [vmem:[%s1476 + $0x51] sm:$0xff]
      %v1678 = vld [vmem:[%s1476 + $0x61] sm:$0xff]
      %v1679 = vld [vmem:[%s1476 + $0x69] sm:$0xff]
      %v1680 = vld [vmem:[%s1476 + $0x79] sm:$0xff]
      %v1681 = vld [vmem:[%s1476 + $0x81] sm:$0xff]
      %v1682 = vld [vmem:[%s1476 + $0x91] sm:$0xff]
      %v1683 = vld [vmem:[%s1476 + $0x99] sm:$0xff]
      %v1684 = vld [vmem:[%s1476 + $0xa9] sm:$0xff]
      %v1685 = vld [vmem:[%s1476 + $0xb1] sm:$0xff]
      %v1686 = vld [vmem:[%s1476 + $0xc1] sm:$0xff]
      %v1687 = vld [vmem:[%s1476 + $0xc9] sm:$0xff]
      %v1688 = vld [vmem:[%s1476 + $0xd9] sm:$0xff]
      %v1689 = vld [vmem:[%s1476 + $0xe1] sm:$0xff]
      %v1690 = vld [vmem:[%s1476 + $0xf1] sm:$0xff]
      %v1691 = vld [vmem:[%s1476 + $0xf9] sm:$0xff]
      %v1692 = vld [vmem:[%s1476 + $0x109] sm:$0xff]
      %v1693 = vld [vmem:[%s1476 + $0x111] sm:$0xff]
      %v1694 = vld [vmem:[%s1476 + $0x121] sm:$0xff]
      %v1695 = vld [vmem:[%s1476 + $0x129] sm:$0xff]
      %v1696 = vld [vmem:[%s1476 + $0x139] sm:$0xff]
      %v1697 = vld [vmem:[%s1476 + $0x141] sm:$0xff]
      %v1698 = vld [vmem:[%s1476 + $0x151] sm:$0xff]
      %v1699 = vld [vmem:[%s1476 + $0x159] sm:$0xff]
      %v1700 = vld [vmem:[%s1476 + $0x169] sm:$0xff]
      %v1701 = vld [vmem:[%s1476 + $0x171] sm:$0xff]
      %1734 = vrot.lane.b32.xlu0 %v1670, 56
      %v1735 = vpop.permute.xlu0 %1734
      %1736 = vrot.lane.b32.xlu0 %v1671, 56
      %v1737 = vpop.permute.xlu0 %1736
      %1738 = vrot.lane.b32.xlu0 %v1672, 56
      %v1739 = vpop.permute.xlu0 %1738
      %1740 = vrot.lane.b32.xlu0 %v1673, 56
      %v1741 = vpop.permute.xlu0 %1740
      %1742 = vrot.lane.b32.xlu0 %v1674, 56
      %v1743 = vpop.permute.xlu0 %1742
      %1744 = vrot.lane.b32.xlu0 %v1675, 56
      %v1745 = vpop.permute.xlu0 %1744
      %1746 = vrot.lane.b32.xlu0 %v1676, 56
      %v1747 = vpop.permute.xlu0 %1746
      %1748 = vrot.lane.b32.xlu0 %v1677, 56
      %v1749 = vpop.permute.xlu0 %1748
      %1750 = vrot.lane.b32.xlu0 %v1678, 56
      %v1751 = vpop.permute.xlu0 %1750
      %1752 = vrot.lane.b32.xlu0 %v1679, 56
      %v1753 = vpop.permute.xlu0 %1752
      %1754 = vrot.lane.b32.xlu0 %v1680, 56
      %v1755 = vpop.permute.xlu0 %1754
      %1756 = vrot.lane.b32.xlu0 %v1681, 56
      %v1757 = vpop.permute.xlu0 %1756
      %1758 = vrot.lane.b32.xlu0 %v1682, 56
      %v1759 = vpop.permute.xlu0 %1758
      %1760 = vrot.lane.b32.xlu0 %v1683, 56
      %v1761 = vpop.permute.xlu0 %1760
      %1762 = vrot.lane.b32.xlu0 %v1684, 56
      %v1763 = vpop.permute.xlu0 %1762
      %1764 = vrot.lane.b32.xlu0 %v1685, 56
      %v1765 = vpop.permute.xlu0 %1764
      %1766 = vrot.lane.b32.xlu0 %v1686, 56
      %v1767 = vpop.permute.xlu0 %1766
      %1768 = vrot.lane.b32.xlu0 %v1687, 56
      %v1769 = vpop.permute.xlu0 %1768
      %1770 = vrot.lane.b32.xlu0 %v1688, 56
      %v1771 = vpop.permute.xlu0 %1770
      %1772 = vrot.lane.b32.xlu0 %v1689, 56
      %v1773 = vpop.permute.xlu0 %1772
      %1774 = vrot.lane.b32.xlu0 %v1690, 56
      %v1775 = vpop.permute.xlu0 %1774
      %1776 = vrot.lane.b32.xlu0 %v1691, 56
      %v1777 = vpop.permute.xlu0 %1776
      %1778 = vrot.lane.b32.xlu0 %v1692, 56
      %v1779 = vpop.permute.xlu0 %1778
      %1780 = vrot.lane.b32.xlu0 %v1693, 56
      %v1781 = vpop.permute.xlu0 %1780
      %1782 = vrot.lane.b32.xlu0 %v1694, 56
      %v1783 = vpop.permute.xlu0 %1782
      %1784 = vrot.lane.b32.xlu0 %v1695, 56
      %v1785 = vpop.permute.xlu0 %1784
      %1786 = vrot.lane.b32.xlu0 %v1696, 56
      %v1787 = vpop.permute.xlu0 %1786
      %1788 = vrot.lane.b32.xlu0 %v1697, 56
      %v1789 = vpop.permute.xlu0 %1788
      %1790 = vrot.lane.b32.xlu0 %v1698, 56
      %v1791 = vpop.permute.xlu0 %1790
      %1792 = vrot.lane.b32.xlu0 %v1699, 56
      %v1793 = vpop.permute.xlu0 %1792
      %1794 = vrot.lane.b32.xlu0 %v1700, 56
      %v1795 = vpop.permute.xlu0 %1794
      %1796 = vrot.lane.b32.xlu0 %v1701, 56
      %v1797 = vpop.permute.xlu0 %1796
      %vm1830 = vcmask 523712
      %1831 = vst.msk [vmem:[#allocation3] sm:$0xff] %vm1830, %v1735
      %1832 = vst.msk [vmem:[#allocation3 + $0x8] sm:$0xff] %vm1830, %v1737
      %1833 = vst.msk [vmem:[#allocation3 + $0x10] sm:$0xff] %vm1830, %v1739
      %1834 = vst.msk [vmem:[#allocation3 + $0x18] sm:$0xff] %vm1830, %v1741
      %1835 = vst.msk [vmem:[#allocation3 + $0x20] sm:$0xff] %vm1830, %v1743
      %1836 = vst.msk [vmem:[#allocation3 + $0x28] sm:$0xff] %vm1830, %v1745
      %1837 = vst.msk [vmem:[#allocation3 + $0x30] sm:$0xff] %vm1830, %v1747
      %1838 = vst.msk [vmem:[#allocation3 + $0x38] sm:$0xff] %vm1830, %v1749
      %1839 = vst.msk [vmem:[#allocation3 + $0x40] sm:$0xff] %vm1830, %v1751
      %1840 = vst.msk [vmem:[#allocation3 + $0x48] sm:$0xff] %vm1830, %v1753
      %1841 = vst.msk [vmem:[#allocation3 + $0x50] sm:$0xff] %vm1830, %v1755
      %1842 = vst.msk [vmem:[#allocation3 + $0x58] sm:$0xff] %vm1830, %v1757
      %1843 = vst.msk [vmem:[#allocation3 + $0x60] sm:$0xff] %vm1830, %v1759
      %1844 = vst.msk [vmem:[#allocation3 + $0x68] sm:$0xff] %vm1830, %v1761
      %1845 = vst.msk [vmem:[#allocation3 + $0x70] sm:$0xff] %vm1830, %v1763
      %1846 = vst.msk [vmem:[#allocation3 + $0x78] sm:$0xff] %vm1830, %v1765
      %1847 = vst.msk [vmem:[#allocation3 + $0x80] sm:$0xff] %vm1830, %v1767
      %1848 = vst.msk [vmem:[#allocation3 + $0x88] sm:$0xff] %vm1830, %v1769
      %1849 = vst.msk [vmem:[#allocation3 + $0x90] sm:$0xff] %vm1830, %v1771
      %1850 = vst.msk [vmem:[#allocation3 + $0x98] sm:$0xff] %vm1830, %v1773
      %1851 = vst.msk [vmem:[#allocation3 + $0xa0] sm:$0xff] %vm1830, %v1775
      %1852 = vst.msk [vmem:[#allocation3 + $0xa8] sm:$0xff] %vm1830, %v1777
      %1853 = vst.msk [vmem:[#allocation3 + $0xb0] sm:$0xff] %vm1830, %v1779
      %1854 = vst.msk [vmem:[#allocation3 + $0xb8] sm:$0xff] %vm1830, %v1781
      %1855 = vst.msk [vmem:[#allocation3 + $0xc0] sm:$0xff] %vm1830, %v1783
      %1856 = vst.msk [vmem:[#allocation3 + $0xc8] sm:$0xff] %vm1830, %v1785
      %1857 = vst.msk [vmem:[#allocation3 + $0xd0] sm:$0xff] %vm1830, %v1787
      %1858 = vst.msk [vmem:[#allocation3 + $0xd8] sm:$0xff] %vm1830, %v1789
      %1859 = vst.msk [vmem:[#allocation3 + $0xe0] sm:$0xff] %vm1830, %v1791
      %1860 = vst.msk [vmem:[#allocation3 + $0xe8] sm:$0xff] %vm1830, %v1793
      %1861 = vst.msk [vmem:[#allocation3 + $0xf0] sm:$0xff] %vm1830, %v1795
      %1862 = vst.msk [vmem:[#allocation3 + $0xf8] sm:$0xff] %vm1830, %v1797
      %v1863 = vld [vmem:[%s1476 + $0x2] sm:$0xff]
      %v1864 = vld [vmem:[%s1476 + $0xa] sm:$0xff]
      %v1865 = vld [vmem:[%s1476 + $0x1a] sm:$0xff]
      %v1866 = vld [vmem:[%s1476 + $0x22] sm:$0xff]
      %v1867 = vld [vmem:[%s1476 + $0x32] sm:$0xff]
      %v1868 = vld [vmem:[%s1476 + $0x3a] sm:$0xff]
      %v1869 = vld [vmem:[%s1476 + $0x4a] sm:$0xff]
      %v1870 = vld [vmem:[%s1476 + $0x52] sm:$0xff]
      %v1871 = vld [vmem:[%s1476 + $0x62] sm:$0xff]
      %v1872 = vld [vmem:[%s1476 + $0x6a] sm:$0xff]
      %v1873 = vld [vmem:[%s1476 + $0x7a] sm:$0xff]
      %v1874 = vld [vmem:[%s1476 + $0x82] sm:$0xff]
      %v1875 = vld [vmem:[%s1476 + $0x92] sm:$0xff]
      %v1876 = vld [vmem:[%s1476 + $0x9a] sm:$0xff]
      %v1877 = vld [vmem:[%s1476 + $0xaa] sm:$0xff]
      %v1878 = vld [vmem:[%s1476 + $0xb2] sm:$0xff]
      %v1879 = vld [vmem:[%s1476 + $0xc2] sm:$0xff]
      %v1880 = vld [vmem:[%s1476 + $0xca] sm:$0xff]
      %v1881 = vld [vmem:[%s1476 + $0xda] sm:$0xff]
      %v1882 = vld [vmem:[%s1476 + $0xe2] sm:$0xff]
      %v1883 = vld [vmem:[%s1476 + $0xf2] sm:$0xff]
      %v1884 = vld [vmem:[%s1476 + $0xfa] sm:$0xff]
      %v1885 = vld [vmem:[%s1476 + $0x10a] sm:$0xff]
      %v1886 = vld [vmem:[%s1476 + $0x112] sm:$0xff]
      %v1887 = vld [vmem:[%s1476 + $0x122] sm:$0xff]
      %v1888 = vld [vmem:[%s1476 + $0x12a] sm:$0xff]
      %v1889 = vld [vmem:[%s1476 + $0x13a] sm:$0xff]
      %v1890 = vld [vmem:[%s1476 + $0x142] sm:$0xff]
      %v1891 = vld [vmem:[%s1476 + $0x152] sm:$0xff]
      %v1892 = vld [vmem:[%s1476 + $0x15a] sm:$0xff]
      %v1893 = vld [vmem:[%s1476 + $0x16a] sm:$0xff]
      %v1894 = vld [vmem:[%s1476 + $0x172] sm:$0xff]
      %1927 = vrot.lane.b32.xlu0 %v1863, 64
      %v1928 = vpop.permute.xlu0 %1927
      %1929 = vrot.lane.b32.xlu0 %v1864, 64
      %v1930 = vpop.permute.xlu0 %1929
      %1931 = vrot.lane.b32.xlu0 %v1865, 64
      %v1932 = vpop.permute.xlu0 %1931
      %1933 = vrot.lane.b32.xlu0 %v1866, 64
      %v1934 = vpop.permute.xlu0 %1933
      %1935 = vrot.lane.b32.xlu0 %v1867, 64
      %v1936 = vpop.permute.xlu0 %1935
      %1937 = vrot.lane.b32.xlu0 %v1868, 64
      %v1938 = vpop.permute.xlu0 %1937
      %1939 = vrot.lane.b32.xlu0 %v1869, 64
      %v1940 = vpop.permute.xlu0 %1939
      %1941 = vrot.lane.b32.xlu0 %v1870, 64
      %v1942 = vpop.permute.xlu0 %1941
      %1943 = vrot.lane.b32.xlu0 %v1871, 64
      %v1944 = vpop.permute.xlu0 %1943
      %1945 = vrot.lane.b32.xlu0 %v1872, 64
      %v1946 = vpop.permute.xlu0 %1945
      %1947 = vrot.lane.b32.xlu0 %v1873, 64
      %v1948 = vpop.permute.xlu0 %1947
      %1949 = vrot.lane.b32.xlu0 %v1874, 64
      %v1950 = vpop.permute.xlu0 %1949
      %1951 = vrot.lane.b32.xlu0 %v1875, 64
      %v1952 = vpop.permute.xlu0 %1951
      %1953 = vrot.lane.b32.xlu0 %v1876, 64
      %v1954 = vpop.permute.xlu0 %1953
      %1955 = vrot.lane.b32.xlu0 %v1877, 64
      %v1956 = vpop.permute.xlu0 %1955
      %1957 = vrot.lane.b32.xlu0 %v1878, 64
      %v1958 = vpop.permute.xlu0 %1957
      %1959 = vrot.lane.b32.xlu0 %v1879, 64
      %v1960 = vpop.permute.xlu0 %1959
      %1961 = vrot.lane.b32.xlu0 %v1880, 64
      %v1962 = vpop.permute.xlu0 %1961
      %1963 = vrot.lane.b32.xlu0 %v1881, 64
      %v1964 = vpop.permute.xlu0 %1963
      %1965 = vrot.lane.b32.xlu0 %v1882, 64
      %v1966 = vpop.permute.xlu0 %1965
      %1967 = vrot.lane.b32.xlu0 %v1883, 64
      %v1968 = vpop.permute.xlu0 %1967
      %1969 = vrot.lane.b32.xlu0 %v1884, 64
      %v1970 = vpop.permute.xlu0 %1969
      %1971 = vrot.lane.b32.xlu0 %v1885, 64
      %v1972 = vpop.permute.xlu0 %1971
      %1973 = vrot.lane.b32.xlu0 %v1886, 64
      %v1974 = vpop.permute.xlu0 %1973
      %1975 = vrot.lane.b32.xlu0 %v1887, 64
      %v1976 = vpop.permute.xlu0 %1975
      %1977 = vrot.lane.b32.xlu0 %v1888, 64
      %v1978 = vpop.permute.xlu0 %1977
      %1979 = vrot.lane.b32.xlu0 %v1889, 64
      %v1980 = vpop.permute.xlu0 %1979
      %1981 = vrot.lane.b32.xlu0 %v1890, 64
      %v1982 = vpop.permute.xlu0 %1981
      %1983 = vrot.lane.b32.xlu0 %v1891, 64
      %v1984 = vpop.permute.xlu0 %1983
      %1985 = vrot.lane.b32.xlu0 %v1892, 64
      %v1986 = vpop.permute.xlu0 %1985
      %1987 = vrot.lane.b32.xlu0 %v1893, 64
      %v1988 = vpop.permute.xlu0 %1987
      %1989 = vrot.lane.b32.xlu0 %v1894, 64
      %v1990 = vpop.permute.xlu0 %1989
      %vm2023 = vcmask 589312
      %2024 = vst.msk [vmem:[#allocation3] sm:$0xff] %vm2023, %v1928
      %2025 = vst.msk [vmem:[#allocation3 + $0x8] sm:$0xff] %vm2023, %v1930
      %2026 = vst.msk [vmem:[#allocation3 + $0x10] sm:$0xff] %vm2023, %v1932
      %2027 = vst.msk [vmem:[#allocation3 + $0x18] sm:$0xff] %vm2023, %v1934
      %2028 = vst.msk [vmem:[#allocation3 + $0x20] sm:$0xff] %vm2023, %v1936
      %2029 = vst.msk [vmem:[#allocation3 + $0x28] sm:$0xff] %vm2023, %v1938
      %2030 = vst.msk [vmem:[#allocation3 + $0x30] sm:$0xff] %vm2023, %v1940
      %2031 = vst.msk [vmem:[#allocation3 + $0x38] sm:$0xff] %vm2023, %v1942
      %2032 = vst.msk [vmem:[#allocation3 + $0x40] sm:$0xff] %vm2023, %v1944
      %2033 = vst.msk [vmem:[#allocation3 + $0x48] sm:$0xff] %vm2023, %v1946
      %2034 = vst.msk [vmem:[#allocation3 + $0x50] sm:$0xff] %vm2023, %v1948
      %2035 = vst.msk [vmem:[#allocation3 + $0x58] sm:$0xff] %vm2023, %v1950
      %2036 = vst.msk [vmem:[#allocation3 + $0x60] sm:$0xff] %vm2023, %v1952
      %2037 = vst.msk [vmem:[#allocation3 + $0x68] sm:$0xff] %vm2023, %v1954
      %2038 = vst.msk [vmem:[#allocation3 + $0x70] sm:$0xff] %vm2023, %v1956
      %2039 = vst.msk [vmem:[#allocation3 + $0x78] sm:$0xff] %vm2023, %v1958
      %2040 = vst.msk [vmem:[#allocation3 + $0x80] sm:$0xff] %vm2023, %v1960
      %2041 = vst.msk [vmem:[#allocation3 + $0x88] sm:$0xff] %vm2023, %v1962
      %2042 = vst.msk [vmem:[#allocation3 + $0x90] sm:$0xff] %vm2023, %v1964
      %2043 = vst.msk [vmem:[#allocation3 + $0x98] sm:$0xff] %vm2023, %v1966
      %2044 = vst.msk [vmem:[#allocation3 + $0xa0] sm:$0xff] %vm2023, %v1968
      %2045 = vst.msk [vmem:[#allocation3 + $0xa8] sm:$0xff] %vm2023, %v1970
      %2046 = vst.msk [vmem:[#allocation3 + $0xb0] sm:$0xff] %vm2023, %v1972
      %2047 = vst.msk [vmem:[#allocation3 + $0xb8] sm:$0xff] %vm2023, %v1974
      %2048 = vst.msk [vmem:[#allocation3 + $0xc0] sm:$0xff] %vm2023, %v1976
      %2049 = vst.msk [vmem:[#allocation3 + $0xc8] sm:$0xff] %vm2023, %v1978
      %2050 = vst.msk [vmem:[#allocation3 + $0xd0] sm:$0xff] %vm2023, %v1980
      %2051 = vst.msk [vmem:[#allocation3 + $0xd8] sm:$0xff] %vm2023, %v1982
      %2052 = vst.msk [vmem:[#allocation3 + $0xe0] sm:$0xff] %vm2023, %v1984
      %2053 = vst.msk [vmem:[#allocation3 + $0xe8] sm:$0xff] %vm2023, %v1986
      %2054 = vst.msk [vmem:[#allocation3 + $0xf0] sm:$0xff] %vm2023, %v1988
      %2055 = vst.msk [vmem:[#allocation3 + $0xf8] sm:$0xff] %vm2023, %v1990
      %v2056 = vld [vmem:[#allocation3] sm:$0xff]
      %v2057 = vld [vmem:[#allocation3 + $0x8] sm:$0xff]
      %v2058 = vld [vmem:[#allocation3 + $0x10] sm:$0xff]
      %v2059 = vld [vmem:[#allocation3 + $0x18] sm:$0xff]
      %v2060 = vld [vmem:[#allocation3 + $0x20] sm:$0xff]
      %v2061 = vld [vmem:[#allocation3 + $0x28] sm:$0xff]
      %v2062 = vld [vmem:[#allocation3 + $0x30] sm:$0xff]
      %v2063 = vld [vmem:[#allocation3 + $0x38] sm:$0xff]
      %v2064 = vld [vmem:[#allocation3 + $0x40] sm:$0xff]
      %v2065 = vld [vmem:[#allocation3 + $0x48] sm:$0xff]
      %v2066 = vld [vmem:[#allocation3 + $0x50] sm:$0xff]
      %v2067 = vld [vmem:[#allocation3 + $0x58] sm:$0xff]
      %v2068 = vld [vmem:[#allocation3 + $0x60] sm:$0xff]
      %v2069 = vld [vmem:[#allocation3 + $0x68] sm:$0xff]
      %v2070 = vld [vmem:[#allocation3 + $0x70] sm:$0xff]
      %v2071 = vld [vmem:[#allocation3 + $0x78] sm:$0xff]
      %v2072 = vld [vmem:[#allocation3 + $0x80] sm:$0xff]
      %v2073 = vld [vmem:[#allocation3 + $0x88] sm:$0xff]
      %v2074 = vld [vmem:[#allocation3 + $0x90] sm:$0xff]
      %v2075 = vld [vmem:[#allocation3 + $0x98] sm:$0xff]
      %v2076 = vld [vmem:[#allocation3 + $0xa0] sm:$0xff]
      %v2077 = vld [vmem:[#allocation3 + $0xa8] sm:$0xff]
      %v2078 = vld [vmem:[#allocation3 + $0xb0] sm:$0xff]
      %v2079 = vld [vmem:[#allocation3 + $0xb8] sm:$0xff]
      %v2080 = vld [vmem:[#allocation3 + $0xc0] sm:$0xff]
      %v2081 = vld [vmem:[#allocation3 + $0xc8] sm:$0xff]
      %v2082 = vld [vmem:[#allocation3 + $0xd0] sm:$0xff]
      %v2083 = vld [vmem:[#allocation3 + $0xd8] sm:$0xff]
      %v2084 = vld [vmem:[#allocation3 + $0xe0] sm:$0xff]
      %v2085 = vld [vmem:[#allocation3 + $0xe8] sm:$0xff]
      %v2086 = vld [vmem:[#allocation3 + $0xf0] sm:$0xff]
      %v2087 = vld [vmem:[#allocation3 + $0xf8] sm:$0xff]
      %v2088 = vld [vmem:[%s1] sm:$0xff]
      %v2089 = vld [vmem:[%s1 + $0x8] sm:$0xff]
      %v2090 = vld [vmem:[%s1 + $0x10] sm:$0xff]
      %v2091 = vld [vmem:[%s1 + $0x18] sm:$0xff]
      %v2092 = vld [vmem:[%s1 + $0x20] sm:$0xff]
      %v2093 = vld [vmem:[%s1 + $0x28] sm:$0xff]
      %v2094 = vld [vmem:[%s1 + $0x30] sm:$0xff]
      %v2095 = vld [vmem:[%s1 + $0x38] sm:$0xff]
      %v2096 = vld [vmem:[%s1 + $0x40] sm:$0xff]
      %vm2097 = vcmask 588800
      %v2099 = vsel %vm2097, %v2056, 0
      %v2102 = vsel %vm2097, %v2057, 0
      %v2105 = vsel %vm2097, %v2058, 0
      %v2108 = vsel %vm2097, %v2059, 0
      %v2111 = vsel %vm2097, %v2060, 0
      %v2114 = vsel %vm2097, %v2061, 0
      %v2117 = vsel %vm2097, %v2062, 0
      %v2120 = vsel %vm2097, %v2063, 0
      %v2123 = vsel %vm2097, %v2064, 0
      %v2126 = vsel %vm2097, %v2065, 0
      %v2129 = vsel %vm2097, %v2066, 0
      %v2132 = vsel %vm2097, %v2067, 0
      %v2135 = vsel %vm2097, %v2068, 0
      %v2138 = vsel %vm2097, %v2069, 0
      %v2141 = vsel %vm2097, %v2070, 0
      %v2144 = vsel %vm2097, %v2071, 0
      %v2147 = vsel %vm2097, %v2072, 0
      %v2150 = vsel %vm2097, %v2073, 0
      %v2153 = vsel %vm2097, %v2074, 0
      %v2156 = vsel %vm2097, %v2075, 0
      %v2159 = vsel %vm2097, %v2076, 0
      %v2162 = vsel %vm2097, %v2077, 0
      %v2165 = vsel %vm2097, %v2078, 0
      %v2168 = vsel %vm2097, %v2079, 0
      %v2171 = vsel %vm2097, %v2080, 0
      %v2174 = vsel %vm2097, %v2081, 0
      %v2177 = vsel %vm2097, %v2082, 0
      %v2180 = vsel %vm2097, %v2083, 0
      %v2183 = vsel %vm2097, %v2084, 0
      %v2186 = vsel %vm2097, %v2085, 0
      %v2189 = vsel %vm2097, %v2086, 0
      %v2192 = vsel %vm2097, %v2087, 0
      %2194 = vmatpush.msra.mxu0 0.0
      %2195 = vmatpush.msra.mxu0 0.0
      %2196 = vmatpush.msra.mxu0 0.0
      %2197 = vmatpush.msra.mxu0 0.0
      %2198 = vmatpush.msra.mxu0 0.0
      %2199 = vmatpush.msra.mxu0 0.0
      %2200 = vmatpush.msra.mxu0 0.0
      %2201 = vmatpush.msra.mxu0 %v2096
      %2202 = vmatpush.msra.mxu0 %v2095
      %2203 = vmatpush.msra.mxu0 %v2094
      %2204 = vmatpush.msra.mxu0 %v2093
      %2205 = vmatpush.msra.mxu0 %v2092
      %2206 = vmatpush.msra.mxu0 %v2091
      %2207 = vmatpush.msra.mxu0 %v2090
      %2208 = vmatpush.msra.mxu0 %v2089
      %2209 = vmatpush.msra.mxu0 %v2088
      %2210 = vmatmul.f32.gmra.mxu0 %v2099
      %v2211 = vpop.f32.mrf.mxu0
      %v2212 = vadd.f32 0.0, %v2211
      %2213 = vmatmul.f32.gmra.mxu0 %v2102
      %v2214 = vpop.f32.mrf.mxu0
      %v2215 = vadd.f32 0.0, %v2214
      %2216 = vmatmul.f32.gmra.mxu0 %v2105
      %v2217 = vpop.f32.mrf.mxu0
      %v2218 = vadd.f32 0.0, %v2217
      %2219 = vmatmul.f32.gmra.mxu0 %v2108
      %v2220 = vpop.f32.mrf.mxu0
      %v2221 = vadd.f32 0.0, %v2220
      %2222 = vmatmul.f32.gmra.mxu0 %v2111
      %v2223 = vpop.f32.mrf.mxu0
      %v2224 = vadd.f32 0.0, %v2223
      %2225 = vmatmul.f32.gmra.mxu0 %v2114
      %v2226 = vpop.f32.mrf.mxu0
      %v2227 = vadd.f32 0.0, %v2226
      %2228 = vmatmul.f32.gmra.mxu0 %v2117
      %v2229 = vpop.f32.mrf.mxu0
      %v2230 = vadd.f32 0.0, %v2229
      %2231 = vmatmul.f32.gmra.mxu0 %v2120
      %v2232 = vpop.f32.mrf.mxu0
      %v2233 = vadd.f32 0.0, %v2232
      %2234 = vmatmul.f32.gmra.mxu0 %v2123
      %v2235 = vpop.f32.mrf.mxu0
      %v2236 = vadd.f32 0.0, %v2235
      %2237 = vmatmul.f32.gmra.mxu0 %v2126
      %v2238 = vpop.f32.mrf.mxu0
      %v2239 = vadd.f32 0.0, %v2238
      %2240 = vmatmul.f32.gmra.mxu0 %v2129
      %v2241 = vpop.f32.mrf.mxu0
      %v2242 = vadd.f32 0.0, %v2241
      %2243 = vmatmul.f32.gmra.mxu0 %v2132
      %v2244 = vpop.f32.mrf.mxu0
      %v2245 = vadd.f32 0.0, %v2244
      %2246 = vmatmul.f32.gmra.mxu0 %v2135
      %v2247 = vpop.f32.mrf.mxu0
      %v2248 = vadd.f32 0.0, %v2247
      %2249 = vmatmul.f32.gmra.mxu0 %v2138
      %v2250 = vpop.f32.mrf.mxu0
      %v2251 = vadd.f32 0.0, %v2250
      %2252 = vmatmul.f32.gmra.mxu0 %v2141
      %v2253 = vpop.f32.mrf.mxu0
      %v2254 = vadd.f32 0.0, %v2253
      %2255 = vmatmul.f32.gmra.mxu0 %v2144
      %v2256 = vpop.f32.mrf.mxu0
      %v2257 = vadd.f32 0.0, %v2256
      %2258 = vmatmul.f32.gmra.mxu0 %v2147
      %v2259 = vpop.f32.mrf.mxu0
      %v2260 = vadd.f32 0.0, %v2259
      %2261 = vmatmul.f32.gmra.mxu0 %v2150
      %v2262 = vpop.f32.mrf.mxu0
      %v2263 = vadd.f32 0.0, %v2262
      %2264 = vmatmul.f32.gmra.mxu0 %v2153
      %v2265 = vpop.f32.mrf.mxu0
      %v2266 = vadd.f32 0.0, %v2265
      %2267 = vmatmul.f32.gmra.mxu0 %v2156
      %v2268 = vpop.f32.mrf.mxu0
      %v2269 = vadd.f32 0.0, %v2268
      %2270 = vmatmul.f32.gmra.mxu0 %v2159
      %v2271 = vpop.f32.mrf.mxu0
      %v2272 = vadd.f32 0.0, %v2271
      %2273 = vmatmul.f32.gmra.mxu0 %v2162
      %v2274 = vpop.f32.mrf.mxu0
      %v2275 = vadd.f32 0.0, %v2274
      %2276 = vmatmul.f32.gmra.mxu0 %v2165
      %v2277 = vpop.f32.mrf.mxu0
      %v2278 = vadd.f32 0.0, %v2277
      %2279 = vmatmul.f32.gmra.mxu0 %v2168
      %v2280 = vpop.f32.mrf.mxu0
      %v2281 = vadd.f32 0.0, %v2280
      %2282 = vmatmul.f32.gmra.mxu0 %v2171
      %v2283 = vpop.f32.mrf.mxu0
      %v2284 = vadd.f32 0.0, %v2283
      %2285 = vmatmul.f32.gmra.mxu0 %v2174
      %v2286 = vpop.f32.mrf.mxu0
      %v2287 = vadd.f32 0.0, %v2286
      %2288 = vmatmul.f32.gmra.mxu0 %v2177
      %v2289 = vpop.f32.mrf.mxu0
      %v2290 = vadd.f32 0.0, %v2289
      %2291 = vmatmul.f32.gmra.mxu0 %v2180
      %v2292 = vpop.f32.mrf.mxu0
      %v2293 = vadd.f32 0.0, %v2292
      %2294 = vmatmul.f32.gmra.mxu0 %v2183
      %v2295 = vpop.f32.mrf.mxu0
      %v2296 = vadd.f32 0.0, %v2295
      %2297 = vmatmul.f32.gmra.mxu0 %v2186
      %v2298 = vpop.f32.mrf.mxu0
      %v2299 = vadd.f32 0.0, %v2298
      %2300 = vmatmul.f32.gmra.mxu0 %v2189
      %v2301 = vpop.f32.mrf.mxu0
      %v2302 = vadd.f32 0.0, %v2301
      %2303 = vmatmul.f32.gmra.mxu0 %v2192
      %v2304 = vpop.f32.mrf.mxu0
      %v2305 = vadd.f32 0.0, %v2304
      %2306 = vdwg.mxu0
      %2307 = vst.msk [vmem:[%s231] sm:$0xff] %vm373, %v2212
      %2308 = vst.msk [vmem:[%s231 + $0x8] sm:$0xff] %vm373, %v2215
      %2309 = vst.msk [vmem:[%s231 + $0x10] sm:$0xff] %vm373, %v2218
      %2310 = vst.msk [vmem:[%s231 + $0x18] sm:$0xff] %vm373, %v2221
      %2311 = vst.msk [vmem:[%s231 + $0x20] sm:$0xff] %vm373, %v2224
      %2312 = vst.msk [vmem:[%s231 + $0x28] sm:$0xff] %vm373, %v2227
      %2313 = vst.msk [vmem:[%s231 + $0x30] sm:$0xff] %vm373, %v2230
      %2314 = vst.msk [vmem:[%s231 + $0x38] sm:$0xff] %vm373, %v2233
      %2315 = vst.msk [vmem:[%s231 + $0x40] sm:$0xff] %vm373, %v2236
      %2316 = vst.msk [vmem:[%s231 + $0x48] sm:$0xff] %vm373, %v2239
      %2317 = vst.msk [vmem:[%s231 + $0x50] sm:$0xff] %vm373, %v2242
      %2318 = vst.msk [vmem:[%s231 + $0x58] sm:$0xff] %vm373, %v2245
      %2319 = vst.msk [vmem:[%s231 + $0x60] sm:$0xff] %vm373, %v2248
      %2320 = vst.msk [vmem:[%s231 + $0x68] sm:$0xff] %vm373, %v2251
      %2321 = vst.msk [vmem:[%s231 + $0x70] sm:$0xff] %vm373, %v2254
      %2322 = vst.msk [vmem:[%s231 + $0x78] sm:$0xff] %vm373, %v2257
      %2323 = vst.msk [vmem:[%s231 + $0x80] sm:$0xff] %vm373, %v2260
      %2324 = vst.msk [vmem:[%s231 + $0x88] sm:$0xff] %vm373, %v2263
      %2325 = vst.msk [vmem:[%s231 + $0x90] sm:$0xff] %vm373, %v2266
      %2326 = vst.msk [vmem:[%s231 + $0x98] sm:$0xff] %vm373, %v2269
      %2327 = vst.msk [vmem:[%s231 + $0xa0] sm:$0xff] %vm373, %v2272
      %2328 = vst.msk [vmem:[%s231 + $0xa8] sm:$0xff] %vm373, %v2275
      %2329 = vst.msk [vmem:[%s231 + $0xb0] sm:$0xff] %vm373, %v2278
      %2330 = vst.msk [vmem:[%s231 + $0xb8] sm:$0xff] %vm373, %v2281
      %2331 = vst.msk [vmem:[%s231 + $0xc0] sm:$0xff] %vm373, %v2284
      %2332 = vst.msk [vmem:[%s231 + $0xc8] sm:$0xff] %vm373, %v2287
      %2333 = vst.msk [vmem:[%s231 + $0xd0] sm:$0xff] %vm373, %v2290
      %2334 = vst.msk [vmem:[%s231 + $0xd8] sm:$0xff] %vm373, %v2293
      %2335 = vst.msk [vmem:[%s231 + $0xe0] sm:$0xff] %vm373, %v2296
      %2336 = vst.msk [vmem:[%s231 + $0xe8] sm:$0xff] %vm373, %v2299
      %2337 = vst.msk [vmem:[%s231 + $0xf0] sm:$0xff] %vm373, %v2302
      %2338 = vst.msk [vmem:[%s231 + $0xf8] sm:$0xff] %vm373, %v2305
      %v2339 = vsel %vm373, %v2212, 0.0
      %v2340 = vsel %vm373, %v2215, 0.0
      %v2341 = vadd.f32 %v2339, %v2340
      %v2342 = vsel %vm373, %v2218, 0.0
      %v2343 = vadd.f32 %v2341, %v2342
      %v2344 = vsel %vm373, %v2221, 0.0
      %v2345 = vadd.f32 %v2343, %v2344
      %v2346 = vsel %vm373, %v2224, 0.0
      %v2347 = vadd.f32 %v2345, %v2346
      %v2348 = vsel %vm373, %v2227, 0.0
      %v2349 = vadd.f32 %v2347, %v2348
      %v2350 = vsel %vm373, %v2230, 0.0
      %v2351 = vadd.f32 %v2349, %v2350
      %v2352 = vsel %vm373, %v2233, 0.0
      %v2353 = vadd.f32 %v2351, %v2352
      %v2354 = vsel %vm373, %v2236, 0.0
      %v2355 = vadd.f32 %v2353, %v2354
      %v2356 = vsel %vm373, %v2239, 0.0
      %v2357 = vadd.f32 %v2355, %v2356
      %v2358 = vsel %vm373, %v2242, 0.0
      %v2359 = vadd.f32 %v2357, %v2358
      %v2360 = vsel %vm373, %v2245, 0.0
      %v2361 = vadd.f32 %v2359, %v2360
      %v2362 = vsel %vm373, %v2248, 0.0
      %v2363 = vadd.f32 %v2361, %v2362
      %v2364 = vsel %vm373, %v2251, 0.0
      %v2365 = vadd.f32 %v2363, %v2364
      %v2366 = vsel %vm373, %v2254, 0.0
      %v2367 = vadd.f32 %v2365, %v2366
      %v2368 = vsel %vm373, %v2257, 0.0
      %v2369 = vadd.f32 %v2367, %v2368
      %v2370 = vsel %vm373, %v2260, 0.0
      %v2371 = vadd.f32 %v2369, %v2370
      %v2372 = vsel %vm373, %v2263, 0.0
      %v2373 = vadd.f32 %v2371, %v2372
      %v2374 = vsel %vm373, %v2266, 0.0
      %v2375 = vadd.f32 %v2373, %v2374
      %v2376 = vsel %vm373, %v2269, 0.0
      %v2377 = vadd.f32 %v2375, %v2376
      %v2378 = vsel %vm373, %v2272, 0.0
      %v2379 = vadd.f32 %v2377, %v2378
      %v2380 = vsel %vm373, %v2275, 0.0
      %v2381 = vadd.f32 %v2379, %v2380
      %v2382 = vsel %vm373, %v2278, 0.0
      %v2383 = vadd.f32 %v2381, %v2382
      %v2384 = vsel %vm373, %v2281, 0.0
      %v2385 = vadd.f32 %v2383, %v2384
      %v2386 = vsel %vm373, %v2284, 0.0
      %v2387 = vadd.f32 %v2385, %v2386
      %v2388 = vsel %vm373, %v2287, 0.0
      %v2389 = vadd.f32 %v2387, %v2388
      %v2390 = vsel %vm373, %v2290, 0.0
      %v2391 = vadd.f32 %v2389, %v2390
      %v2392 = vsel %vm373, %v2293, 0.0
      %v2393 = vadd.f32 %v2391, %v2392
      %v2394 = vsel %vm373, %v2296, 0.0
      %v2395 = vadd.f32 %v2393, %v2394
      %v2396 = vsel %vm373, %v2299, 0.0
      %v2397 = vadd.f32 %v2395, %v2396
      %v2398 = vsel %vm373, %v2302, 0.0
      %v2399 = vadd.f32 %v2397, %v2398
      %v2400 = vsel %vm373, %v2305, 0.0
      %v2401 = vadd.f32 %v2399, %v2400
      %v2402 = vrot.slane %v2401, 4
      %v2403 = vadd.f32 %v2401, %v2402
      %v2404 = vrot.slane %v2403, 2
      %v2405 = vadd.f32 %v2403, %v2404
      %v2406 = vrot.slane %v2405, 1
      %v2407 = vadd.f32 %v2405, %v2406
      %v2408 = vmul.f32 %v2212, %v2212
      %v2409 = vmul.f32 %v2215, %v2215
      %v2410 = vmul.f32 %v2218, %v2218
      %v2411 = vmul.f32 %v2221, %v2221
      %v2412 = vmul.f32 %v2224, %v2224
      %v2413 = vmul.f32 %v2227, %v2227
      %v2414 = vmul.f32 %v2230, %v2230
      %v2415 = vmul.f32 %v2233, %v2233
      %v2416 = vmul.f32 %v2236, %v2236
      %v2417 = vmul.f32 %v2239, %v2239
      %v2418 = vmul.f32 %v2242, %v2242
      %v2419 = vmul.f32 %v2245, %v2245
      %v2420 = vmul.f32 %v2248, %v2248
      %v2421 = vmul.f32 %v2251, %v2251
      %v2422 = vmul.f32 %v2254, %v2254
      %v2423 = vmul.f32 %v2257, %v2257
      %v2424 = vmul.f32 %v2260, %v2260
      %v2425 = vmul.f32 %v2263, %v2263
      %v2426 = vmul.f32 %v2266, %v2266
      %v2427 = vmul.f32 %v2269, %v2269
      %v2428 = vmul.f32 %v2272, %v2272
      %v2429 = vmul.f32 %v2275, %v2275
      %v2430 = vmul.f32 %v2278, %v2278
      %v2431 = vmul.f32 %v2281, %v2281
      %v2432 = vmul.f32 %v2284, %v2284
      %v2433 = vmul.f32 %v2287, %v2287
      %v2434 = vmul.f32 %v2290, %v2290
      %v2435 = vmul.f32 %v2293, %v2293
      %v2436 = vmul.f32 %v2296, %v2296
      %v2437 = vmul.f32 %v2299, %v2299
      %v2438 = vmul.f32 %v2302, %v2302
      %v2439 = vmul.f32 %v2305, %v2305
      %v2440 = vsel %vm373, %v2408, 0.0
      %v2441 = vsel %vm373, %v2409, 0.0
      %v2442 = vadd.f32 %v2440, %v2441
      %v2443 = vsel %vm373, %v2410, 0.0
      %v2444 = vadd.f32 %v2442, %v2443
      %v2445 = vsel %vm373, %v2411, 0.0
      %v2446 = vadd.f32 %v2444, %v2445
      %v2447 = vsel %vm373, %v2412, 0.0
      %v2448 = vadd.f32 %v2446, %v2447
      %v2449 = vsel %vm373, %v2413, 0.0
      %v2450 = vadd.f32 %v2448, %v2449
      %v2451 = vsel %vm373, %v2414, 0.0
      %v2452 = vadd.f32 %v2450, %v2451
      %v2453 = vsel %vm373, %v2415, 0.0
      %v2454 = vadd.f32 %v2452, %v2453
      %v2455 = vsel %vm373, %v2416, 0.0
      %v2456 = vadd.f32 %v2454, %v2455
      %v2457 = vsel %vm373, %v2417, 0.0
      %v2458 = vadd.f32 %v2456, %v2457
      %v2459 = vsel %vm373, %v2418, 0.0
      %v2460 = vadd.f32 %v2458, %v2459
      %v2461 = vsel %vm373, %v2419, 0.0
      %v2462 = vadd.f32 %v2460, %v2461
      %v2463 = vsel %vm373, %v2420, 0.0
      %v2464 = vadd.f32 %v2462, %v2463
      %v2465 = vsel %vm373, %v2421, 0.0
      %v2466 = vadd.f32 %v2464, %v2465
      %v2467 = vsel %vm373, %v2422, 0.0
      %v2468 = vadd.f32 %v2466, %v2467
      %v2469 = vsel %vm373, %v2423, 0.0
      %v2470 = vadd.f32 %v2468, %v2469
      %v2471 = vsel %vm373, %v2424, 0.0
      %v2472 = vadd.f32 %v2470, %v2471
      %v2473 = vsel %vm373, %v2425, 0.0
      %v2474 = vadd.f32 %v2472, %v2473
      %v2475 = vsel %vm373, %v2426, 0.0
      %v2476 = vadd.f32 %v2474, %v2475
      %v2477 = vsel %vm373, %v2427, 0.0
      %v2478 = vadd.f32 %v2476, %v2477
      %v2479 = vsel %vm373, %v2428, 0.0
      %v2480 = vadd.f32 %v2478, %v2479
      %v2481 = vsel %vm373, %v2429, 0.0
      %v2482 = vadd.f32 %v2480, %v2481
      %v2483 = vsel %vm373, %v2430, 0.0
      %v2484 = vadd.f32 %v2482, %v2483
      %v2485 = vsel %vm373, %v2431, 0.0
      %v2486 = vadd.f32 %v2484, %v2485
      %v2487 = vsel %vm373, %v2432, 0.0
      %v2488 = vadd.f32 %v2486, %v2487
      %v2489 = vsel %vm373, %v2433, 0.0
      %v2490 = vadd.f32 %v2488, %v2489
      %v2491 = vsel %vm373, %v2434, 0.0
      %v2492 = vadd.f32 %v2490, %v2491
      %v2493 = vsel %vm373, %v2435, 0.0
      %v2494 = vadd.f32 %v2492, %v2493
      %v2495 = vsel %vm373, %v2436, 0.0
      %v2496 = vadd.f32 %v2494, %v2495
      %v2497 = vsel %vm373, %v2437, 0.0
      %v2498 = vadd.f32 %v2496, %v2497
      %v2499 = vsel %vm373, %v2438, 0.0
      %v2500 = vadd.f32 %v2498, %v2499
      %v2501 = vsel %vm373, %v2439, 0.0
      %v2502 = vadd.f32 %v2500, %v2501
      %v2503 = vrot.slane %v2502, 4
      %v2504 = vadd.f32 %v2502, %v2503
      %v2505 = vrot.slane %v2504, 2
      %v2506 = vadd.f32 %v2504, %v2505
      %v2507 = vrot.slane %v2506, 1
      %v2508 = vadd.f32 %v2506, %v2507
      %2509 = vst.msk [vmem:[%s235] sm:$0x1] %vm414, %v2407
      %2510 = vst.msk [vmem:[%s235 + $0x1] sm:$0x1] %vm414, %v2508
      %p2511 = scmp.lt.s32.totalorder %s17, 1
      %s2512 = scalar_select %p2511, %s17, 1
      %s2513 = smul.addr %s2512, 32
      %s2514 = smul.addr %s2513, 8
      %s2515 = scalar_lea.vmem %s4, %s2514
      %p2516 = scmp.lt.s32.totalorder %s17, 1
      %s2517 = scalar_select %p2516, %s17, 1
      %s2518 = smul.addr %s2517, 2
      %s2519 = scalar_lea.vmem %s5, %s2518
      // Predicated region
      $region37: #{conv_block_nhwc.4} parent=35 // pred_check
        %p2520 = pneg %p124
      $region38: #{conv_block_nhwc.4} parent=35 // pred_check_branch
        %2522 = sbr.rel (%p2520) target = $region40
      $region39: #{conv_block_nhwc.4} parent=35 // pred_region
        _
      $region40: #{conv_block_nhwc.4} parent=35 // pred_fallthru
        _
      // Predicated region
      $region41: #{conv_block_nhwc.4} parent=35 // pred_check
        %p2523 = pneg %p150
      $region42: #{conv_block_nhwc.4} parent=35 // pred_check_branch
        %2525 = sbr.rel (%p2523) target = $region44
      $region43: #{conv_block_nhwc.4} parent=35 // pred_region
        _
      $region44: #{conv_block_nhwc.4} parent=35 // pred_fallthru
        _
    $region36: #{conv_block_nhwc.4} parent=5 // pred_fallthru
      _
    %p2526 = scmp.le.s32.totalorder 2, %s12
    // Predicated region
    $region45: #{conv_block_nhwc.4} parent=5 // pred_check
      %p2527 = pneg %p2526
    $region46: #{conv_block_nhwc.4} parent=5 // pred_check_branch
      %2529 = sbr.rel (%p2527) target = $region48
    $region47: #{conv_block_nhwc.4} parent=5 // pred_region
      %s2530 = ssub.s32 %s12, 2
      // Predicated region
      $region49: #{conv_block_nhwc.4} parent=47 // pred_check
        %p2531 = pneg %p130
      $region50: #{conv_block_nhwc.4} parent=47 // pred_check_branch
        %2533 = sbr.rel (%p2531) target = $region52
      $region51: #{conv_block_nhwc.4} parent=47 // pred_region
        %p2534 = scmp.lt.s32.totalorder %s18, 1
        %s2535 = scalar_select %p2534, %s18, 1
        %s2536 = smul.addr %s2535, 32
        %s2537 = smul.addr %s2536, 8
        %s2538 = scalar_lea.vmem %s4, %s2537
      $region52: #{conv_block_nhwc.4} parent=47 // pred_fallthru
        _
      // Predicated region
      $region53: #{conv_block_nhwc.4} parent=47 // pred_check
        %p2539 = pneg %p156
      $region54: #{conv_block_nhwc.4} parent=47 // pred_check_branch
        %2541 = sbr.rel (%p2539) target = $region56
      $region55: #{conv_block_nhwc.4} parent=47 // pred_region
        %p2542 = scmp.lt.s32.totalorder %s18, 1
        %s2543 = scalar_select %p2542, %s18, 1
        %s2544 = smul.addr %s2543, 2
        %s2545 = scalar_lea.vmem %s5, %s2544
      $region56: #{conv_block_nhwc.4} parent=47 // pred_fallthru
        _
    $region48: #{conv_block_nhwc.4} parent=5 // pred_fallthru
      _
  $region6: #{conv_block_nhwc.4} parent=0 // loop_footer
    %s16 = sadd.s32 1, %s12
  $region7: #{conv_block_nhwc.4} parent=0 // loop_footer_branch
    %11 = sbr.rel target = $region3
  $region8: #{conv_block_nhwc.4} parent=0 // loop_exit
    _

</llo_original>
